<compile_context>
chip_gen: v7x
topology: tpu7x:2x2x1
jax: 0.10.0
libtpu: 0.0.40
codegen_flags: <defaults>
</compile_context>

<pallas_src>
import jax
import jax.numpy as jnp
import numpy as np
from jax.experimental import pallas as pl
from jax.experimental.pallas import tpu as pltpu

EPS = 1e-5                  # PyTorch BatchNorm2d default eps
LANE = 128
VMEM_LIMIT = 48 * 1024 * 1024   # safe on v5e/v6e (128 MiB) and v7x (64 MiB)


def _round_up(x, m):
    return (x + m - 1) // m * m


# ---------------------------------------------------------------------------
# Kernel 1: convdown 2x2 / stride 2  (fused space-to-depth) + per-image stats
# grid = (N,)  all parallel.
# x5_ref : (Ho, 2, Wo, 2*Cin) f32   (free reshape of NHWC input, no transpose)
# w_ref  : (2, 2*Cin, Cp)    bf16   rows ordered (kw, ci)
# ---------------------------------------------------------------------------
def _convdown_stats_kernel(x_ref, w_ref, y_ref, sum_ref, ssq_ref):
    Ho, _, Wo, K2 = x_ref.shape
    Cp = y_ref.shape[-1]
    M = Ho * Wo

    acc = jnp.zeros((M, Cp), jnp.float32)
    for kh in range(2):
        xs = x_ref[:, kh, :, :].reshape(M, K2).astype(jnp.bfloat16)
        acc = acc + jnp.dot(xs, w_ref[kh], preferred_element_type=jnp.float32)

    y_ref[...] = acc.reshape(Ho, Wo, Cp)
    sum_ref[...] = jnp.sum(acc, axis=0, keepdims=True)
    ssq_ref[...] = jnp.sum(acc * acc, axis=0, keepdims=True)


def convdown_stats(x5, wd):
    N, Ho, _, Wo, K2 = x5.shape
    Cp = wd.shape[-1]
    M = Ho * Wo
    flops = 2 * N * M * 2 * K2 * Cp
    bytes_accessed = 4 * (N * M * 2 * K2 + N * M * Cp + 2 * N * Cp) + 2 * 2 * K2 * Cp

    return pl.pallas_call(
        _convdown_stats_kernel,
        out_shape=(jax.ShapeDtypeStruct((N, Ho, Wo, Cp), jnp.float32),
                   jax.ShapeDtypeStruct((N, 1, Cp), jnp.float32),
                   jax.ShapeDtypeStruct((N, 1, Cp), jnp.float32)),
        grid=(N,),
        in_specs=[pl.BlockSpec((None, Ho, 2, Wo, K2), lambda n: (n, 0, 0, 0, 0)),
                  pl.BlockSpec((2, K2, Cp), lambda n: (0, 0, 0))],
        out_specs=(pl.BlockSpec((None, Ho, Wo, Cp), lambda n: (n, 0, 0, 0)),
                   pl.BlockSpec((None, 1, Cp), lambda n: (n, 0, 0)),
                   pl.BlockSpec((None, 1, Cp), lambda n: (n, 0, 0))),
        compiler_params=pltpu.CompilerParams(
            dimension_semantics=("parallel",), vmem_limit_bytes=VMEM_LIMIT),
        cost_estimate=pl.CostEstimate(flops=flops, transcendentals=0,
                                      bytes_accessed=bytes_accessed),
    )(x5, wd)


# ---------------------------------------------------------------------------
# Kernel 2: fused  BN(prev)+ReLU  ->  3x3 "same" conv  ->  per-image stats
# grid = (N,)  all parallel.
# x_ref     : (Ho, Wo, Cin)  f32   raw conv output of the previous stage
# scale/shift: (1, Cin)      f32   folded BN of the previous stage
# w_ref     : (9, Cin, Cout) bf16
# slab_ref  : VMEM (3, (Ho+2)*Wo, Cin) f32  — column-shifted, spatially padded
#             copies of the activation; the 9 taps are aligned row views.
# acc_ref   : VMEM (Ho*Wo, Cout) f32 accumulator
# ---------------------------------------------------------------------------
def _conv3x3_bnrelu_stats_kernel(x_ref, scale_ref, shift_ref, w_ref,
                                 y_ref, sum_ref, ssq_ref, slab_ref, acc_ref):
    Ho, Wo, Cin = x_ref.shape
    Cout = y_ref.shape[-1]
    M = Ho * Wo

    # Fused BN + ReLU of the previous stage (the conv's real input).
    a = jnp.maximum(x_ref[...].reshape(M, Cin) * scale_ref[...] + shift_ref[...],
                    0.0)

    wpos = jax.lax.broadcasted_iota(jnp.int32, (M, 1), 0) % Wo

    # slab[kw][i*Wo + w] == a_pad[i, w + kw]  where a_pad is the zero
    # "same"-padded activation (a_pad[i, j] = a[i-1, j-1]).
    # kw = 1 (centre): plain copy at row offset Wo.
    slab_ref[1, pl.ds(0, Wo), :] = jnp.zeros((Wo, Cin), jnp.float32)
    slab_ref[1, pl.ds(Wo, M), :] = a
    slab_ref[1, pl.ds(Wo + M, Wo), :] = jnp.zeros((Wo, Cin), jnp.float32)
    # kw = 0 (left tap): one-column right shift == row offset Wo+1, zero the
    # rows that wrap across an image row.
    slab_ref[0, pl.ds(0, Wo + 1), :] = jnp.zeros((Wo + 1, Cin), jnp.float32)
    slab_ref[0, pl.ds(Wo + 1, M), :] = jnp.where(wpos == Wo - 1, 0.0, a)
    slab_ref[0, pl.ds(Wo + 1 + M, Wo - 1), :] = jnp.zeros((Wo - 1, Cin),
                                                          jnp.float32)
    # kw = 2 (right tap): one-column left shift == row offset Wo-1.
    slab_ref[2, pl.ds(0, Wo - 1), :] = jnp.zeros((Wo - 1, Cin), jnp.float32)
    slab_ref[2, pl.ds(Wo - 1, M), :] = jnp.where(wpos == 0, 0.0, a)
    slab_ref[2, pl.ds(Wo - 1 + M, Wo + 1), :] = jnp.zeros((Wo + 1, Cin),
                                                          jnp.float32)

    # Nine MXU matmuls over aligned slab views; f32 accumulation in scratch.
    acc_ref[...] = jnp.zeros_like(acc_ref)
    for kh in range(3):
        for kw in range(3):
            xs = slab_ref[kw, pl.ds(kh * Wo, M), :].astype(jnp.bfloat16)
            acc_ref[...] += jnp.dot(xs, w_ref[3 * kh + kw],
                                    preferred_element_type=jnp.float32)

    acc = acc_ref[...]
    y_ref[...] = acc.reshape(Ho, Wo, Cout)
    sum_ref[...] = jnp.sum(acc, axis=0, keepdims=True)
    ssq_ref[...] = jnp.sum(acc * acc, axis=0, keepdims=True)


def conv3x3_bnrelu_stats(y_in, scale, shift, w9):
    N, Ho, Wo, Cin = y_in.shape
    Cout = w9.shape[-1]
    M = Ho * Wo
    flops = 2 * N * M * 9 * Cin * Cout
    bytes_accessed = (4 * (N * M * Cin + N * M * Cout + 2 * N * Cout + 2 * Cin)
                      + 2 * 9 * Cin * Cout)

    return pl.pallas_call(
        _conv3x3_bnrelu_stats_kernel,
        out_shape=(jax.ShapeDtypeStruct((N, Ho, Wo, Cout), jnp.float32),
                   jax.ShapeDtypeStruct((N, 1, Cout), jnp.float32),
                   jax.ShapeDtypeStruct((N, 1, Cout), jnp.float32)),
        grid=(N,),
        in_specs=[pl.BlockSpec((None, Ho, Wo, Cin), lambda n: (n, 0, 0, 0)),
                  pl.BlockSpec((1, Cin), lambda n: (0, 0)),
                  pl.BlockSpec((1, Cin), lambda n: (0, 0)),
                  pl.BlockSpec((9, Cin, Cout), lambda n: (0, 0, 0))],
        out_specs=(pl.BlockSpec((None, Ho, Wo, Cout), lambda n: (n, 0, 0, 0)),
                   pl.BlockSpec((None, 1, Cout), lambda n: (n, 0, 0)),
                   pl.BlockSpec((None, 1, Cout), lambda n: (n, 0, 0))),
        scratch_shapes=[pltpu.VMEM((3, (Ho + 2) * Wo, Cin), jnp.float32),
                        pltpu.VMEM((M, Cout), jnp.float32)],
        compiler_params=pltpu.CompilerParams(
            dimension_semantics=("parallel",), vmem_limit_bytes=VMEM_LIMIT),
        cost_estimate=pl.CostEstimate(flops=flops, transcendentals=0,
                                      bytes_accessed=bytes_accessed),
    )(y_in, scale, shift, w9)


# ---------------------------------------------------------------------------
# Kernel 3: final BN apply (folded scale/shift) + ReLU, in place, parallel grid
# ---------------------------------------------------------------------------
def _bn_relu_kernel(y_ref, scale_ref, shift_ref, o_ref):
    o_ref[...] = jnp.maximum(y_ref[...] * scale_ref[...] + shift_ref[...], 0.0)


def bn_relu_apply(y, scale, shift):
    N, Ho, Wo, Cp = y.shape
    return pl.pallas_call(
        _bn_relu_kernel,
        out_shape=jax.ShapeDtypeStruct((N, Ho, Wo, Cp), jnp.float32),
        grid=(N,),
        in_specs=[pl.BlockSpec((None, Ho, Wo, Cp), lambda n: (n, 0, 0, 0)),
                  pl.BlockSpec((1, Cp), lambda n: (0, 0)),
                  pl.BlockSpec((1, Cp), lambda n: (0, 0))],
        out_specs=pl.BlockSpec((None, Ho, Wo, Cp), lambda n: (n, 0, 0, 0)),
        input_output_aliases={0: 0},
        compiler_params=pltpu.CompilerParams(
            dimension_semantics=("parallel",), vmem_limit_bytes=VMEM_LIMIT),
        cost_estimate=pl.CostEstimate(flops=2 * N * Ho * Wo * Cp,
                                      transcendentals=0,
                                      bytes_accessed=4 * (2 * N * Ho * Wo * Cp + 2 * Cp)),
    )(y, scale, shift)


# ---------------------------------------------------------------------------
# Plain-JAX glue: parameter packing and BN stat finalization (tiny)
# ---------------------------------------------------------------------------
def _finalize(s, q, count, gamma, beta):
    mean = s / count
    var = jnp.maximum(q / count - mean * mean, 0.0)     # biased (training) var
    scale = gamma * jax.lax.rsqrt(var + EPS)
    shift = beta - mean * scale
    return scale, shift


def _prep_params(params):
    cin = params["convdown_w"].shape[0]
    cout = params["conv1_w"].shape[0]
    cinp = _round_up(cin, LANE)
    coutp = _round_up(cout, LANE)

    # convdown 2x2/s2: (cin, cin, 2, 2) OIHW -> (kh=2, kw*ci=2*cin, cinp) bf16
    wd = jnp.transpose(params["convdown_w"].astype(jnp.float32), (2, 3, 1, 0))
    wd = wd.reshape(2, 2 * cin, cin)
    wd = jnp.pad(wd, ((0, 0), (0, 0), (0, cinp - cin))).astype(jnp.bfloat16)

    def w3x3(w, ci, cip, co, cop):
        w = jnp.transpose(w.astype(jnp.float32), (2, 3, 1, 0))    # (3,3,ci,co)
        w = jnp.pad(w, ((0, 0), (0, 0), (0, cip - ci), (0, cop - co)))
        return w.reshape(9, cip, cop).astype(jnp.bfloat16)

    w1 = w3x3(params["conv1_w"], cin, cinp, cout, coutp)
    w2 = w3x3(params["conv2_w"], cout, coutp, cout, coutp)

    def gb(g, b, cp):
        c = g.shape[0]
        g = jnp.pad(g.astype(jnp.float32), (0, cp - c), constant_values=1.0)
        b = jnp.pad(b.astype(jnp.float32), (0, cp - c))
        return g.reshape(1, cp), b.reshape(1, cp)

    g0, b0 = gb(params["bn_g"], params["bn_b"], cinp)
    g1, b1 = gb(params["bn1_g"], params["bn1_b"], coutp)
    g2, b2 = gb(params["bn2_g"], params["bn2_b"], coutp)
    return dict(wd=wd, w1=w1, w2=w2, g0=g0, b0=b0, g1=g1, b1=b1, g2=g2, b2=b2,
                cin=cin, cinp=cinp, cout=cout, coutp=coutp)


# ---------------------------------------------------------------------------
# DownBlock forward (bn=True branch: convs have no bias)
# ---------------------------------------------------------------------------
def down_block_forward(x_nchw, params):
    pp = _prep_params(params)
    x = jnp.transpose(x_nchw, (0, 2, 3, 1)).astype(jnp.float32)   # NCHW -> NHWC
    N, H, W, cin = x.shape
    assert H % 2 == 0 and W % 2 == 0 and cin == pp["cin"]
    Ho, Wo = H // 2, W // 2
    m = N * Ho * Wo

    # ---- stage 1: convdown 2x2/s2 (free reshape, fused matmuls) + stats ----
    x5 = x.reshape(N, Ho, 2, Wo, 2 * cin)
    y1, s1, q1 = convdown_stats(x5, pp["wd"])
    scale0, shift0 = _finalize(jnp.sum(s1, axis=0), jnp.sum(q1, axis=0),
                               m, pp["g0"], pp["b0"])

    # ---- stage 2: BN0+ReLU fused into conv1 3x3 (+ stats) ----
    y2, s2, q2 = conv3x3_bnrelu_stats(y1, scale0, shift0, pp["w1"])
    scale1, shift1 = _finalize(jnp.sum(s2, axis=0), jnp.sum(q2, axis=0),
                               m, pp["g1"], pp["b1"])

    # ---- stage 3: BN1+ReLU fused into conv2 3x3 (+ stats) ----
    y3, s3, q3 = conv3x3_bnrelu_stats(y2, scale1, shift1, pp["w2"])
    scale2, shift2 = _finalize(jnp.sum(s3, axis=0), jnp.sum(q3, axis=0),
                               m, pp["g2"], pp["b2"])

    # ---- final BN2 + ReLU (standalone, truly in place: block == image) ----
    a = bn_relu_apply(y3, scale2, shift2)
    a = a[..., :pp["cout"]]
    return jnp.transpose(a, (0, 3, 1, 2))                         # back to NCHW


# ---------------------------------------------------------------------------
# Pure-JAX reference (for correctness check)
# ---------------------------------------------------------------------------
def _ref_conv(x_nhwc, w_oihw, stride, padding):
    w_hwio = jnp.transpose(w_oihw, (2, 3, 1, 0))
    return jax.lax.conv_general_dilated(
        x_nhwc, w_hwio, (stride, stride), padding,
        dimension_numbers=("NHWC", "HWIO", "NHWC"))


def _ref_bn_relu(y, g, b):
    mean = y.mean(axis=(0, 1, 2), keepdims=True)
    var = ((y - mean) ** 2).mean(axis=(0, 1, 2), keepdims=True)
    return jnp.maximum((y - mean) / jnp.sqrt(var + EPS) * g + b, 0.0)


def down_block_ref(x_nchw, params):
    x = jnp.transpose(x_nchw, (0, 2, 3, 1))
    y = _ref_bn_relu(_ref_conv(x, params["convdown_w"], 2, "VALID"),
                     params["bn_g"], params["bn_b"])
    y = _ref_bn_relu(_ref_conv(y, params["conv1_w"], 1, [(1, 1), (1, 1)]),
                     params["bn1_g"], params["bn1_b"])
    y = _ref_bn_relu(_ref_conv(y, params["conv2_w"], 1, [(1, 1), (1, 1)]),
                     params["bn2_g"], params["bn2_b"])
    return jnp.transpose(y, (0, 3, 1, 2))


# ---------------------------------------------------------------------------
if __name__ == "__main__":
    key = jax.random.PRNGKey(0)
    ks = jax.random.split(key, 10)

    N, C_IN, C_OUT, H, W = 2, 4, 8, 16, 16

    params = {
        # convdown: Conv2d(c_in, c_in, 2, stride=2, bias=False)
        "convdown_w": 0.2 * jax.random.normal(ks[0], (C_IN, C_IN, 2, 2), jnp.float32),
        "bn_g": 1.0 + 0.1 * jax.random.normal(ks[1], (C_IN,), jnp.float32),
        "bn_b": 0.05 * jax.random.normal(ks[2], (C_IN,), jnp.float32),
        # Convx2.conv1: Conv2d(c_in, c_out, 3, padding=1, bias=False)
        "conv1_w": 0.2 * jax.random.normal(ks[3], (C_OUT, C_IN, 3, 3), jnp.float32),
        "bn1_g": 1.0 + 0.1 * jax.random.normal(ks[4], (C_OUT,), jnp.float32),
        "bn1_b": 0.05 * jax.random.normal(ks[5], (C_OUT,), jnp.float32),
        # Convx2.conv2: Conv2d(c_out, c_out, 3, padding=1, bias=False)
        "conv2_w": 0.2 * jax.random.normal(ks[6], (C_OUT, C_OUT, 3, 3), jnp.float32),
        "bn2_g": 1.0 + 0.1 * jax.random.normal(ks[7], (C_OUT,), jnp.float32),
        "bn2_b": 0.05 * jax.random.normal(ks[8], (C_OUT,), jnp.float32),
    }

    x = jax.random.normal(ks[9], (N, C_IN, H, W), jnp.float32)

    fwd = jax.jit(down_block_forward)
    out = jax.block_until_ready(fwd(x, params))
    ref = jax.block_until_ready(jax.jit(down_block_ref)(x, params))

    assert out.shape == (N, C_OUT, H // 2, W // 2), out.shape
    # bf16 MXU operands (f32 accumulate) vs. f32 reference -> loosened tolerance.
    np.testing.assert_allclose(np.asarray(out), np.asarray(ref),
                               rtol=4e-2, atol=4e-2)

    print("KERNEL_OK")
</pallas_src>

<mosaic_0001>
module attributes {stable_mosaic.version = 11 : i64} {
  func.func @_convdown_stats_kernel(%arg0: i32, %arg1: memref<1x8x2x8x8xf32, #tpu.memory_space<vmem>>, %arg2: memref<2x8x128xbf16, #tpu.memory_space<vmem>>, %arg3: memref<1x8x8x128xf32, #tpu.memory_space<vmem>>, %arg4: memref<1x1x128xf32, #tpu.memory_space<vmem>>, %arg5: memref<1x1x128xf32, #tpu.memory_space<vmem>>) attributes {dimension_semantics = [#tpu.dimension_semantics<parallel>], iteration_bounds = array<i64: 2>, scalar_prefetch = 0 : i64, scratch_operands = 0 : i64, tpu.core_type = #tpu.core_type<tc>, window_params = [{transform_indices = @transform_0, window_bounds = array<i64: 1, 8, 2, 8, 8>}, {pipeline_mode = #tpu.pipeline_mode<synchronous>, transform_indices = @transform_1, window_bounds = array<i64: 2, 8, 128>}, {transform_indices = @transform_2, window_bounds = array<i64: 1, 8, 8, 128>}, {transform_indices = @transform_3, window_bounds = array<i64: 1, 1, 128>}, {transform_indices = @transform_4, window_bounds = array<i64: 1, 1, 128>}]} {
    %cst = arith.constant 0.000000e+00 : f32
    %0 = vector.broadcast %cst : f32 to vector<64x128xf32>
    %c0 = arith.constant 0 : index
    %c0_0 = arith.constant 0 : index
    %c0_1 = arith.constant 0 : index
    %c0_2 = arith.constant 0 : index
    %c0_3 = arith.constant 0 : index
    %1 = vector.load %arg1[%c0, %c0_0, %c0_1, %c0_2, %c0_3] : memref<1x8x2x8x8xf32, #tpu.memory_space<vmem>>, vector<1x8x1x8x8xf32>
    %2 = vector.shape_cast %1 : vector<1x8x1x8x8xf32> to vector<8x8x8xf32>
    %3 = vector.shape_cast %2 : vector<8x8x8xf32> to vector<64x8xf32>
    %4 = arith.truncf %3 : vector<64x8xf32> to vector<64x8xbf16>
    %c0_4 = arith.constant 0 : index
    %c0_5 = arith.constant 0 : index
    %c0_6 = arith.constant 0 : index
    %5 = vector.load %arg2[%c0_4, %c0_5, %c0_6] : memref<2x8x128xbf16, #tpu.memory_space<vmem>>, vector<1x8x128xbf16>
    %6 = vector.shape_cast %5 : vector<1x8x128xbf16> to vector<8x128xbf16>
    %cst_7 = arith.constant dense<0.000000e+00> : vector<64x128xf32>
    %7 = tpu.matmul %4, %6, %cst_7 {dimension_numbers = #tpu.dot_dimension_numbers<[1], [0], [0], [1], [0, 0, 1, 1], [], []>} : vector<64x8xbf16>, vector<8x128xbf16>, vector<64x128xf32> -> vector<64x128xf32>
    %8 = arith.addf %0, %7 : vector<64x128xf32>
    %c0_8 = arith.constant 0 : index
    %c0_9 = arith.constant 0 : index
    %c1 = arith.constant 1 : index
    %c0_10 = arith.constant 0 : index
    %c0_11 = arith.constant 0 : index
    %9 = vector.load %arg1[%c0_8, %c0_9, %c1, %c0_10, %c0_11] : memref<1x8x2x8x8xf32, #tpu.memory_space<vmem>>, vector<1x8x1x8x8xf32>
    %10 = vector.shape_cast %9 : vector<1x8x1x8x8xf32> to vector<8x8x8xf32>
    %11 = vector.shape_cast %10 : vector<8x8x8xf32> to vector<64x8xf32>
    %12 = arith.truncf %11 : vector<64x8xf32> to vector<64x8xbf16>
    %c1_12 = arith.constant 1 : index
    %c0_13 = arith.constant 0 : index
    %c0_14 = arith.constant 0 : index
    %13 = vector.load %arg2[%c1_12, %c0_13, %c0_14] : memref<2x8x128xbf16, #tpu.memory_space<vmem>>, vector<1x8x128xbf16>
    %14 = vector.shape_cast %13 : vector<1x8x128xbf16> to vector<8x128xbf16>
    %cst_15 = arith.constant dense<0.000000e+00> : vector<64x128xf32>
    %15 = tpu.matmul %12, %14, %cst_15 {dimension_numbers = #tpu.dot_dimension_numbers<[1], [0], [0], [1], [0, 0, 1, 1], [], []>} : vector<64x8xbf16>, vector<8x128xbf16>, vector<64x128xf32> -> vector<64x128xf32>
    %16 = arith.addf %8, %15 : vector<64x128xf32>
    %17 = vector.shape_cast %16 : vector<64x128xf32> to vector<8x8x128xf32>
    %c0_16 = arith.constant 0 : index
    %c0_17 = arith.constant 0 : index
    %c0_18 = arith.constant 0 : index
    %c0_19 = arith.constant 0 : index
    %18 = vector.load %arg3[%c0_16, %c0_17, %c0_18, %c0_19] : memref<1x8x8x128xf32, #tpu.memory_space<vmem>>, vector<1x8x8x128xf32>
    %19 = vector.shape_cast %18 : vector<1x8x8x128xf32> to vector<8x8x128xf32>
    %20 = vector.shape_cast %17 : vector<8x8x128xf32> to vector<1x8x8x128xf32>
    tpu.vector_store %arg3[%c0_16, %c0_17, %c0_18, %c0_19], %20 {strides = array<i32>} : memref<1x8x8x128xf32, #tpu.memory_space<vmem>>, vector<1x8x8x128xf32>,
    %cst_20 = arith.constant dense<0.000000e+00> : vector<128xf32>
    %21 = vector.multi_reduction <add>, %16, %cst_20 [0] : vector<64x128xf32> to vector<128xf32>
    %22 = vector.shape_cast %21 : vector<128xf32> to vector<1x128xf32>
    %c0_21 = arith.constant 0 : index
    %c0_22 = arith.constant 0 : index
    %c0_23 = arith.constant 0 : index
    %23 = vector.load %arg4[%c0_21, %c0_22, %c0_23] : memref<1x1x128xf32, #tpu.memory_space<vmem>>, vector<1x1x128xf32>
    %24 = vector.shape_cast %23 : vector<1x1x128xf32> to vector<1x128xf32>
    %25 = vector.shape_cast %22 : vector<1x128xf32> to vector<1x1x128xf32>
    tpu.vector_store %arg4[%c0_21, %c0_22, %c0_23], %25 {strides = array<i32>} : memref<1x1x128xf32, #tpu.memory_space<vmem>>, vector<1x1x128xf32>,
    %26 = arith.mulf %16, %16 : vector<64x128xf32>
    %cst_24 = arith.constant dense<0.000000e+00> : vector<128xf32>
    %27 = vector.multi_reduction <add>, %26, %cst_24 [0] : vector<64x128xf32> to vector<128xf32>
    %28 = vector.shape_cast %27 : vector<128xf32> to vector<1x128xf32>
    %c0_25 = arith.constant 0 : index
    %c0_26 = arith.constant 0 : index
    %c0_27 = arith.constant 0 : index
    %29 = vector.load %arg5[%c0_25, %c0_26, %c0_27] : memref<1x1x128xf32, #tpu.memory_space<vmem>>, vector<1x1x128xf32>
    %30 = vector.shape_cast %29 : vector<1x1x128xf32> to vector<1x128xf32>
    %31 = vector.shape_cast %28 : vector<1x128xf32> to vector<1x1x128xf32>
    tpu.vector_store %arg5[%c0_25, %c0_26, %c0_27], %31 {strides = array<i32>} : memref<1x1x128xf32, #tpu.memory_space<vmem>>, vector<1x1x128xf32>,
    return
  }
  func.func @transform_0(%arg0: i32) -> (i32, i32, i32, i32, i32) {
    %c0_i32 = arith.constant 0 : i32
    %c0_i32_0 = arith.constant 0 : i32
    %c0_i32_1 = arith.constant 0 : i32
    %c0_i32_2 = arith.constant 0 : i32
    %c0_i32_3 = arith.constant 0 : i32
    return %arg0, %c0_i32, %c0_i32_0, %c0_i32_1, %c0_i32_2 : i32, i32, i32, i32, i32
  }
  func.func @transform_1(%arg0: i32) -> (i32, i32, i32) {
    %c0_i32 = arith.constant 0 : i32
    %c0_i32_0 = arith.constant 0 : i32
    %c0_i32_1 = arith.constant 0 : i32
    %c0_i32_2 = arith.constant 0 : i32
    return %c0_i32, %c0_i32_0, %c0_i32_1 : i32, i32, i32
  }
  func.func @transform_2(%arg0: i32) -> (i32, i32, i32, i32) {
    %c0_i32 = arith.constant 0 : i32
    %c0_i32_0 = arith.constant 0 : i32
    %c0_i32_1 = arith.constant 0 : i32
    %c0_i32_2 = arith.constant 0 : i32
    return %arg0, %c0_i32, %c0_i32_0, %c0_i32_1 : i32, i32, i32, i32
  }
  func.func @transform_3(%arg0: i32) -> (i32, i32, i32) {
    %c0_i32 = arith.constant 0 : i32
    %c0_i32_0 = arith.constant 0 : i32
    %c0_i32_1 = arith.constant 0 : i32
    return %arg0, %c0_i32, %c0_i32_0 : i32, i32, i32
  }
  func.func @transform_4(%arg0: i32) -> (i32, i32, i32) {
    %c0_i32 = arith.constant 0 : i32
    %c0_i32_0 = arith.constant 0 : i32
    %c0_i32_1 = arith.constant 0 : i32
    return %arg0, %c0_i32, %c0_i32_0 : i32, i32, i32
  }
}

module attributes {stable_mosaic.version = 11 : i64} {
  func.func @_conv3x3_bnrelu_stats_kernel(%arg0: i32, %arg1: memref<1x8x8x128xf32, #tpu.memory_space<vmem>>, %arg2: memref<1x128xf32, #tpu.memory_space<vmem>>, %arg3: memref<1x128xf32, #tpu.memory_space<vmem>>, %arg4: memref<9x128x128xbf16, #tpu.memory_space<vmem>>, %arg5: memref<1x8x8x128xf32, #tpu.memory_space<vmem>>, %arg6: memref<1x1x128xf32, #tpu.memory_space<vmem>>, %arg7: memref<1x1x128xf32, #tpu.memory_space<vmem>>, %arg8: memref<3x80x128xf32, #tpu.memory_space<vmem>>, %arg9: memref<64x128xf32, #tpu.memory_space<vmem>>) attributes {dimension_semantics = [#tpu.dimension_semantics<parallel>], iteration_bounds = array<i64: 2>, scalar_prefetch = 0 : i64, scratch_operands = 2 : i64, tpu.core_type = #tpu.core_type<tc>, window_params = [{transform_indices = @transform_0, window_bounds = array<i64: 1, 8, 8, 128>}, {pipeline_mode = #tpu.pipeline_mode<synchronous>, transform_indices = @transform_1, window_bounds = array<i64: 1, 128>}, {pipeline_mode = #tpu.pipeline_mode<synchronous>, transform_indices = @transform_2, window_bounds = array<i64: 1, 128>}, {pipeline_mode = #tpu.pipeline_mode<synchronous>, transform_indices = @transform_3, window_bounds = array<i64: 9, 128, 128>}, {transform_indices = @transform_4, window_bounds = array<i64: 1, 8, 8, 128>}, {transform_indices = @transform_5, window_bounds = array<i64: 1, 1, 128>}, {transform_indices = @transform_6, window_bounds = array<i64: 1, 1, 128>}]} {
    %c0 = arith.constant 0 : index
    %c0_0 = arith.constant 0 : index
    %c0_1 = arith.constant 0 : index
    %c0_2 = arith.constant 0 : index
    %0 = vector.load %arg1[%c0, %c0_0, %c0_1, %c0_2] : memref<1x8x8x128xf32, #tpu.memory_space<vmem>>, vector<1x8x8x128xf32>
    %1 = vector.shape_cast %0 : vector<1x8x8x128xf32> to vector<8x8x128xf32>
    %2 = vector.shape_cast %1 : vector<8x8x128xf32> to vector<64x128xf32>
    %c0_3 = arith.constant 0 : index
    %c0_4 = arith.constant 0 : index
    %3 = vector.load %arg2[%c0_3, %c0_4] : memref<1x128xf32, #tpu.memory_space<vmem>>, vector<1x128xf32>
    %4 = vector.broadcast %3 : vector<1x128xf32> to vector<64x128xf32>
    %5 = arith.mulf %2, %4 : vector<64x128xf32>
    %c0_5 = arith.constant 0 : index
    %c0_6 = arith.constant 0 : index
    %6 = vector.load %arg3[%c0_5, %c0_6] : memref<1x128xf32, #tpu.memory_space<vmem>>, vector<1x128xf32>
    %7 = vector.broadcast %6 : vector<1x128xf32> to vector<64x128xf32>
    %8 = arith.addf %5, %7 : vector<64x128xf32>
    %cst = arith.constant 0.000000e+00 : f32
    %9 = vector.broadcast %cst : f32 to vector<64x128xf32>
    %10 = arith.maximumf %8, %9 : vector<64x128xf32>
    %11 = tpu.iota {dimensions = array<i32: 0>} : vector<64x1xi32>
    %c8_i32 = arith.constant 8 : i32
    %c0_i32 = arith.constant 0 : i32
    %12 = arith.cmpi eq, %c8_i32, %c0_i32 : i32
    %c1_i32 = arith.constant 1 : i32
    %13 = arith.select %12, %c1_i32, %c8_i32 : i32
    %14 = vector.broadcast %13 : i32 to vector<64x1xi32>
    %15 = arith.remsi %11, %14 : vector<64x1xi32>
    %c0_i32_7 = arith.constant 0 : i32
    %16 = vector.broadcast %c0_i32_7 : i32 to vector<64x1xi32>
    %17 = arith.cmpi ne, %15, %16 : vector<64x1xi32>
    %c0_i32_8 = arith.constant 0 : i32
    %18 = vector.broadcast %c0_i32_8 : i32 to vector<64x1xi32>
    %19 = arith.cmpi slt, %15, %18 : vector<64x1xi32>
    %c0_i32_9 = arith.constant 0 : i32
    %20 = arith.cmpi slt, %13, %c0_i32_9 : i32
    %21 = vector.broadcast %20 : i1 to vector<64x1xi1>
    %22 = vector.broadcast %21 : vector<64x1xi1> to vector<64x1xi1>
    %23 = arith.xori %19, %22 : vector<64x1xi1>
    %24 = arith.andi %23, %17 : vector<64x1xi1>
    %25 = vector.broadcast %13 : i32 to vector<64x1xi32>
    %26 = arith.addi %15, %25 : vector<64x1xi32>
    %27 = arith.select %24, %26, %15 : vector<64x1xi1>, vector<64x1xi32>
    %cst_10 = arith.constant 0.000000e+00 : f32
    %28 = vector.broadcast %cst_10 : f32 to vector<8x128xf32>
    %c1 = arith.constant 1 : index
    %c0_11 = arith.constant 0 : index
    %c0_12 = arith.constant 0 : index
    %29 = vector.load %arg8[%c1, %c0_11, %c0_12] : memref<3x80x128xf32, #tpu.memory_space<vmem>>, vector<1x8x128xf32>
    %30 = vector.shape_cast %29 : vector<1x8x128xf32> to vector<8x128xf32>
    %31 = vector.shape_cast %28 : vector<8x128xf32> to vector<1x8x128xf32>
    tpu.vector_store %arg8[%c1, %c0_11, %c0_12], %31 {strides = array<i32>} : memref<3x80x128xf32, #tpu.memory_space<vmem>>, vector<1x8x128xf32>,
    %c1_13 = arith.constant 1 : index
    %c8 = arith.constant 8 : index
    %c0_14 = arith.constant 0 : index
    %32 = vector.load %arg8[%c1_13, %c8, %c0_14] : memref<3x80x128xf32, #tpu.memory_space<vmem>>, vector<1x64x128xf32>
    %33 = vector.shape_cast %32 : vector<1x64x128xf32> to vector<64x128xf32>
    %34 = vector.shape_cast %10 : vector<64x128xf32> to vector<1x64x128xf32>
    tpu.vector_store %arg8[%c1_13, %c8, %c0_14], %34 {strides = array<i32>} : memref<3x80x128xf32, #tpu.memory_space<vmem>>, vector<1x64x128xf32>,
    %cst_15 = arith.constant 0.000000e+00 : f32
    %35 = vector.broadcast %cst_15 : f32 to vector<8x128xf32>
    %c1_16 = arith.constant 1 : index
    %c72 = arith.constant 72 : index
    %c0_17 = arith.constant 0 : index
    %36 = vector.load %arg8[%c1_16, %c72, %c0_17] : memref<3x80x128xf32, #tpu.memory_space<vmem>>, vector<1x8x128xf32>
    %37 = vector.shape_cast %36 : vector<1x8x128xf32> to vector<8x128xf32>
    %38 = vector.shape_cast %35 : vector<8x128xf32> to vector<1x8x128xf32>
    tpu.vector_store %arg8[%c1_16, %c72, %c0_17], %38 {strides = array<i32>} : memref<3x80x128xf32, #tpu.memory_space<vmem>>, vector<1x8x128xf32>,
    %cst_18 = arith.constant 0.000000e+00 : f32
    %39 = vector.broadcast %cst_18 : f32 to vector<9x128xf32>
    %c0_19 = arith.constant 0 : index
    %c0_20 = arith.constant 0 : index
    %c0_21 = arith.constant 0 : index
    %40 = vector.load %arg8[%c0_19, %c0_20, %c0_21] : memref<3x80x128xf32, #tpu.memory_space<vmem>>, vector<1x9x128xf32>
    %41 = vector.shape_cast %40 : vector<1x9x128xf32> to vector<9x128xf32>
    %42 = vector.shape_cast %39 : vector<9x128xf32> to vector<1x9x128xf32>
    tpu.vector_store %arg8[%c0_19, %c0_20, %c0_21], %42 {strides = array<i32>} : memref<3x80x128xf32, #tpu.memory_space<vmem>>, vector<1x9x128xf32>,
    %c7_i32 = arith.constant 7 : i32
    %43 = vector.broadcast %c7_i32 : i32 to vector<64x1xi32>
    %44 = arith.cmpi eq, %27, %43 : vector<64x1xi32>
    %cst_22 = arith.constant 0.000000e+00 : f32
    %45 = vector.shape_cast %44 : vector<64x1xi1> to vector<64x1xi1>
    %46 = vector.broadcast %45 : vector<64x1xi1> to vector<64x128xi1>
    %47 = vector.broadcast %cst_22 : f32 to vector<64x128xf32>
    %48 = arith.select %46, %47, %10 : vector<64x128xi1>, vector<64x128xf32>
    %c0_23 = arith.constant 0 : index
    %c9 = arith.constant 9 : index
    %c0_24 = arith.constant 0 : index
    %49 = vector.load %arg8[%c0_23, %c9, %c0_24] : memref<3x80x128xf32, #tpu.memory_space<vmem>>, vector<1x64x128xf32>
    %50 = vector.shape_cast %49 : vector<1x64x128xf32> to vector<64x128xf32>
    %51 = vector.shape_cast %48 : vector<64x128xf32> to vector<1x64x128xf32>
    tpu.vector_store %arg8[%c0_23, %c9, %c0_24], %51 {strides = array<i32>} : memref<3x80x128xf32, #tpu.memory_space<vmem>>, vector<1x64x128xf32>,
    %cst_25 = arith.constant 0.000000e+00 : f32
    %52 = vector.broadcast %cst_25 : f32 to vector<7x128xf32>
    %c0_26 = arith.constant 0 : index
    %c73 = arith.constant 73 : index
    %c0_27 = arith.constant 0 : index
    %53 = vector.load %arg8[%c0_26, %c73, %c0_27] : memref<3x80x128xf32, #tpu.memory_space<vmem>>, vector<1x7x128xf32>
    %54 = vector.shape_cast %53 : vector<1x7x128xf32> to vector<7x128xf32>
    %55 = vector.shape_cast %52 : vector<7x128xf32> to vector<1x7x128xf32>
    tpu.vector_store %arg8[%c0_26, %c73, %c0_27], %55 {strides = array<i32>} : memref<3x80x128xf32, #tpu.memory_space<vmem>>, vector<1x7x128xf32>,
    %cst_28 = arith.constant 0.000000e+00 : f32
    %56 = vector.broadcast %cst_28 : f32 to vector<7x128xf32>
    %c2 = arith.constant 2 : index
    %c0_29 = arith.constant 0 : index
    %c0_30 = arith.constant 0 : index
    %57 = vector.load %arg8[%c2, %c0_29, %c0_30] : memref<3x80x128xf32, #tpu.memory_space<vmem>>, vector<1x7x128xf32>
    %58 = vector.shape_cast %57 : vector<1x7x128xf32> to vector<7x128xf32>
    %59 = vector.shape_cast %56 : vector<7x128xf32> to vector<1x7x128xf32>
    tpu.vector_store %arg8[%c2, %c0_29, %c0_30], %59 {strides = array<i32>} : memref<3x80x128xf32, #tpu.memory_space<vmem>>, vector<1x7x128xf32>,
    %c0_i32_31 = arith.constant 0 : i32
    %60 = vector.broadcast %c0_i32_31 : i32 to vector<64x1xi32>
    %61 = arith.cmpi eq, %27, %60 : vector<64x1xi32>
    %cst_32 = arith.constant 0.000000e+00 : f32
    %62 = vector.shape_cast %61 : vector<64x1xi1> to vector<64x1xi1>
    %63 = vector.broadcast %62 : vector<64x1xi1> to vector<64x128xi1>
    %64 = vector.broadcast %cst_32 : f32 to vector<64x128xf32>
    %65 = arith.select %63, %64, %10 : vector<64x128xi1>, vector<64x128xf32>
    %c2_33 = arith.constant 2 : index
    %c7 = arith.constant 7 : index
    %c0_34 = arith.constant 0 : index
    %66 = vector.load %arg8[%c2_33, %c7, %c0_34] : memref<3x80x128xf32, #tpu.memory_space<vmem>>, vector<1x64x128xf32>
    %67 = vector.shape_cast %66 : vector<1x64x128xf32> to vector<64x128xf32>
    %68 = vector.shape_cast %65 : vector<64x128xf32> to vector<1x64x128xf32>
    tpu.vector_store %arg8[%c2_33, %c7, %c0_34], %68 {strides = array<i32>} : memref<3x80x128xf32, #tpu.memory_space<vmem>>, vector<1x64x128xf32>,
    %cst_35 = arith.constant 0.000000e+00 : f32
    %69 = vector.broadcast %cst_35 : f32 to vector<9x128xf32>
    %c2_36 = arith.constant 2 : index
    %c71 = arith.constant 71 : index
    %c0_37 = arith.constant 0 : index
    %70 = vector.load %arg8[%c2_36, %c71, %c0_37] : memref<3x80x128xf32, #tpu.memory_space<vmem>>, vector<1x9x128xf32>
    %71 = vector.shape_cast %70 : vector<1x9x128xf32> to vector<9x128xf32>
    %72 = vector.shape_cast %69 : vector<9x128xf32> to vector<1x9x128xf32>
    tpu.vector_store %arg8[%c2_36, %c71, %c0_37], %72 {strides = array<i32>} : memref<3x80x128xf32, #tpu.memory_space<vmem>>, vector<1x9x128xf32>,
    %cst_38 = arith.constant 0.000000e+00 : f32
    %73 = vector.broadcast %cst_38 : f32 to vector<64x128xf32>
    %c0_39 = arith.constant 0 : index
    %c0_40 = arith.constant 0 : index
    %74 = vector.load %arg9[%c0_39, %c0_40] : memref<64x128xf32, #tpu.memory_space<vmem>>, vector<64x128xf32>
    tpu.vector_store %arg9[%c0_39, %c0_40], %73 {strides = array<i32>} : memref<64x128xf32, #tpu.memory_space<vmem>>, vector<64x128xf32>,
    %c0_41 = arith.constant 0 : index
    %c0_42 = arith.constant 0 : index
    %c0_43 = arith.constant 0 : index
    %75 = vector.load %arg8[%c0_41, %c0_42, %c0_43] : memref<3x80x128xf32, #tpu.memory_space<vmem>>, vector<1x64x128xf32>
    %76 = vector.shape_cast %75 : vector<1x64x128xf32> to vector<64x128xf32>
    %77 = arith.truncf %76 : vector<64x128xf32> to vector<64x128xbf16>
    %c0_44 = arith.constant 0 : index
    %c0_45 = arith.constant 0 : index
    %78 = vector.load %arg9[%c0_44, %c0_45] : memref<64x128xf32, #tpu.memory_space<vmem>>, vector<64x128xf32>
    %c0_46 = arith.constant 0 : index
    %c0_47 = arith.constant 0 : index
    %c0_48 = arith.constant 0 : index
    %79 = vector.load %arg4[%c0_46, %c0_47, %c0_48] : memref<9x128x128xbf16, #tpu.memory_space<vmem>>, vector<1x128x128xbf16>
    %80 = vector.shape_cast %79 : vector<1x128x128xbf16> to vector<128x128xbf16>
    %cst_49 = arith.constant dense<0.000000e+00> : vector<64x128xf32>
    %81 = tpu.matmul %77, %80, %cst_49 {dimension_numbers = #tpu.dot_dimension_numbers<[1], [0], [0], [1], [0, 0, 1, 1], [], []>} : vector<64x128xbf16>, vector<128x128xbf16>, vector<64x128xf32> -> vector<64x128xf32>
    %82 = arith.addf %78, %81 : vector<64x128xf32>
    %c0_50 = arith.constant 0 : index
    %c0_51 = arith.constant 0 : index
    %83 = vector.load %arg9[%c0_50, %c0_51] : memref<64x128xf32, #tpu.memory_space<vmem>>, vector<64x128xf32>
    tpu.vector_store %arg9[%c0_50, %c0_51], %82 {strides = array<i32>} : memref<64x128xf32, #tpu.memory_space<vmem>>, vector<64x128xf32>,
    %c1_52 = arith.constant 1 : index
    %c0_53 = arith.constant 0 : index
    %c0_54 = arith.constant 0 : index
    %84 = vector.load %arg8[%c1_52, %c0_53, %c0_54] : memref<3x80x128xf32, #tpu.memory_space<vmem>>, vector<1x64x128xf32>
    %85 = vector.shape_cast %84 : vector<1x64x128xf32> to vector<64x128xf32>
    %86 = arith.truncf %85 : vector<64x128xf32> to vector<64x128xbf16>
    %c0_55 = arith.constant 0 : index
    %c0_56 = arith.constant 0 : index
    %87 = vector.load %arg9[%c0_55, %c0_56] : memref<64x128xf32, #tpu.memory_space<vmem>>, vector<64x128xf32>
    %c1_57 = arith.constant 1 : index
    %c0_58 = arith.constant 0 : index
    %c0_59 = arith.constant 0 : index
    %88 = vector.load %arg4[%c1_57, %c0_58, %c0_59] : memref<9x128x128xbf16, #tpu.memory_space<vmem>>, vector<1x128x128xbf16>
    %89 = vector.shape_cast %88 : vector<1x128x128xbf16> to vector<128x128xbf16>
    %cst_60 = arith.constant dense<0.000000e+00> : vector<64x128xf32>
    %90 = tpu.matmul %86, %89, %cst_60 {dimension_numbers = #tpu.dot_dimension_numbers<[1], [0], [0], [1], [0, 0, 1, 1], [], []>} : vector<64x128xbf16>, vector<128x128xbf16>, vector<64x128xf32> -> vector<64x128xf32>
    %91 = arith.addf %87, %90 : vector<64x128xf32>
    %c0_61 = arith.constant 0 : index
    %c0_62 = arith.constant 0 : index
    %92 = vector.load %arg9[%c0_61, %c0_62] : memref<64x128xf32, #tpu.memory_space<vmem>>, vector<64x128xf32>
    tpu.vector_store %arg9[%c0_61, %c0_62], %91 {strides = array<i32>} : memref<64x128xf32, #tpu.memory_space<vmem>>, vector<64x128xf32>,
    %c2_63 = arith.constant 2 : index
    %c0_64 = arith.constant 0 : index
    %c0_65 = arith.constant 0 : index
    %93 = vector.load %arg8[%c2_63, %c0_64, %c0_65] : memref<3x80x128xf32, #tpu.memory_space<vmem>>, vector<1x64x128xf32>
    %94 = vector.shape_cast %93 : vector<1x64x128xf32> to vector<64x128xf32>
    %95 = arith.truncf %94 : vector<64x128xf32> to vector<64x128xbf16>
    %c0_66 = arith.constant 0 : index
    %c0_67 = arith.constant 0 : index
    %96 = vector.load %arg9[%c0_66, %c0_67] : memref<64x128xf32, #tpu.memory_space<vmem>>, vector<64x128xf32>
    %c2_68 = arith.constant 2 : index
    %c0_69 = arith.constant 0 : index
    %c0_70 = arith.constant 0 : index
    %97 = vector.load %arg4[%c2_68, %c0_69, %c0_70] : memref<9x128x128xbf16, #tpu.memory_space<vmem>>, vector<1x128x128xbf16>
    %98 = vector.shape_cast %97 : vector<1x128x128xbf16> to vector<128x128xbf16>
    %cst_71 = arith.constant dense<0.000000e+00> : vector<64x128xf32>
    %99 = tpu.matmul %95, %98, %cst_71 {dimension_numbers = #tpu.dot_dimension_numbers<[1], [0], [0], [1], [0, 0, 1, 1], [], []>} : vector<64x128xbf16>, vector<128x128xbf16>, vector<64x128xf32> -> vector<64x128xf32>
    %100 = arith.addf %96, %99 : vector<64x128xf32>
    %c0_72 = arith.constant 0 : index
    %c0_73 = arith.constant 0 : index
    %101 = vector.load %arg9[%c0_72, %c0_73] : memref<64x128xf32, #tpu.memory_space<vmem>>, vector<64x128xf32>
    tpu.vector_store %arg9[%c0_72, %c0_73], %100 {strides = array<i32>} : memref<64x128xf32, #tpu.memory_space<vmem>>, vector<64x128xf32>,
    %c0_74 = arith.constant 0 : index
    %c8_75 = arith.constant 8 : index
    %c0_76 = arith.constant 0 : index
    %102 = vector.load %arg8[%c0_74, %c8_75, %c0_76] : memref<3x80x128xf32, #tpu.memory_space<vmem>>, vector<1x64x128xf32>
    %103 = vector.shape_cast %102 : vector<1x64x128xf32> to vector<64x128xf32>
    %104 = arith.truncf %103 : vector<64x128xf32> to vector<64x128xbf16>
    %c0_77 = arith.constant 0 : index
    %c0_78 = arith.constant 0 : index
    %105 = vector.load %arg9[%c0_77, %c0_78] : memref<64x128xf32, #tpu.memory_space<vmem>>, vector<64x128xf32>
    %c3 = arith.constant 3 : index
    %c0_79 = arith.constant 0 : index
    %c0_80 = arith.constant 0 : index
    %106 = vector.load %arg4[%c3, %c0_79, %c0_80] : memref<9x128x128xbf16, #tpu.memory_space<vmem>>, vector<1x128x128xbf16>
    %107 = vector.shape_cast %106 : vector<1x128x128xbf16> to vector<128x128xbf16>
    %cst_81 = arith.constant dense<0.000000e+00> : vector<64x128xf32>
    %108 = tpu.matmul %104, %107, %cst_81 {dimension_numbers = #tpu.dot_dimension_numbers<[1], [0], [0], [1], [0, 0, 1, 1], [], []>} : vector<64x128xbf16>, vector<128x128xbf16>, vector<64x128xf32> -> vector<64x128xf32>
    %109 = arith.addf %105, %108 : vector<64x128xf32>
    %c0_82 = arith.constant 0 : index
    %c0_83 = arith.constant 0 : index
    %110 = vector.load %arg9[%c0_82, %c0_83] : memref<64x128xf32, #tpu.memory_space<vmem>>, vector<64x128xf32>
    tpu.vector_store %arg9[%c0_82, %c0_83], %109 {strides = array<i32>} : memref<64x128xf32, #tpu.memory_space<vmem>>, vector<64x128xf32>,
    %c1_84 = arith.constant 1 : index
    %c8_85 = arith.constant 8 : index
    %c0_86 = arith.constant 0 : index
    %111 = vector.load %arg8[%c1_84, %c8_85, %c0_86] : memref<3x80x128xf32, #tpu.memory_space<vmem>>, vector<1x64x128xf32>
    %112 = vector.shape_cast %111 : vector<1x64x128xf32> to vector<64x128xf32>
    %113 = arith.truncf %112 : vector<64x128xf32> to vector<64x128xbf16>
    %c0_87 = arith.constant 0 : index
    %c0_88 = arith.constant 0 : index
    %114 = vector.load %arg9[%c0_87, %c0_88] : memref<64x128xf32, #tpu.memory_space<vmem>>, vector<64x128xf32>
    %c4 = arith.constant 4 : index
    %c0_89 = arith.constant 0 : index
    %c0_90 = arith.constant 0 : index
    %115 = vector.load %arg4[%c4, %c0_89, %c0_90] : memref<9x128x128xbf16, #tpu.memory_space<vmem>>, vector<1x128x128xbf16>
    %116 = vector.shape_cast %115 : vector<1x128x128xbf16> to vector<128x128xbf16>
    %cst_91 = arith.constant dense<0.000000e+00> : vector<64x128xf32>
    %117 = tpu.matmul %113, %116, %cst_91 {dimension_numbers = #tpu.dot_dimension_numbers<[1], [0], [0], [1], [0, 0, 1, 1], [], []>} : vector<64x128xbf16>, vector<128x128xbf16>, vector<64x128xf32> -> vector<64x128xf32>
    %118 = arith.addf %114, %117 : vector<64x128xf32>
    %c0_92 = arith.constant 0 : index
    %c0_93 = arith.constant 0 : index
    %119 = vector.load %arg9[%c0_92, %c0_93] : memref<64x128xf32, #tpu.memory_space<vmem>>, vector<64x128xf32>
    tpu.vector_store %arg9[%c0_92, %c0_93], %118 {strides = array<i32>} : memref<64x128xf32, #tpu.memory_space<vmem>>, vector<64x128xf32>,
    %c2_94 = arith.constant 2 : index
    %c8_95 = arith.constant 8 : index
    %c0_96 = arith.constant 0 : index
    %120 = vector.load %arg8[%c2_94, %c8_95, %c0_96] : memref<3x80x128xf32, #tpu.memory_space<vmem>>, vector<1x64x128xf32>
    %121 = vector.shape_cast %120 : vector<1x64x128xf32> to vector<64x128xf32>
    %122 = arith.truncf %121 : vector<64x128xf32> to vector<64x128xbf16>
    %c0_97 = arith.constant 0 : index
    %c0_98 = arith.constant 0 : index
    %123 = vector.load %arg9[%c0_97, %c0_98] : memref<64x128xf32, #tpu.memory_space<vmem>>, vector<64x128xf32>
    %c5 = arith.constant 5 : index
    %c0_99 = arith.constant 0 : index
    %c0_100 = arith.constant 0 : index
    %124 = vector.load %arg4[%c5, %c0_99, %c0_100] : memref<9x128x128xbf16, #tpu.memory_space<vmem>>, vector<1x128x128xbf16>
    %125 = vector.shape_cast %124 : vector<1x128x128xbf16> to vector<128x128xbf16>
    %cst_101 = arith.constant dense<0.000000e+00> : vector<64x128xf32>
    %126 = tpu.matmul %122, %125, %cst_101 {dimension_numbers = #tpu.dot_dimension_numbers<[1], [0], [0], [1], [0, 0, 1, 1], [], []>} : vector<64x128xbf16>, vector<128x128xbf16>, vector<64x128xf32> -> vector<64x128xf32>
    %127 = arith.addf %123, %126 : vector<64x128xf32>
    %c0_102 = arith.constant 0 : index
    %c0_103 = arith.constant 0 : index
    %128 = vector.load %arg9[%c0_102, %c0_103] : memref<64x128xf32, #tpu.memory_space<vmem>>, vector<64x128xf32>
    tpu.vector_store %arg9[%c0_102, %c0_103], %127 {strides = array<i32>} : memref<64x128xf32, #tpu.memory_space<vmem>>, vector<64x128xf32>,
    %c0_104 = arith.constant 0 : index
    %c16 = arith.constant 16 : index
    %c0_105 = arith.constant 0 : index
    %129 = vector.load %arg8[%c0_104, %c16, %c0_105] : memref<3x80x128xf32, #tpu.memory_space<vmem>>, vector<1x64x128xf32>
    %130 = vector.shape_cast %129 : vector<1x64x128xf32> to vector<64x128xf32>
    %131 = arith.truncf %130 : vector<64x128xf32> to vector<64x128xbf16>
    %c0_106 = arith.constant 0 : index
    %c0_107 = arith.constant 0 : index
    %132 = vector.load %arg9[%c0_106, %c0_107] : memref<64x128xf32, #tpu.memory_space<vmem>>, vector<64x128xf32>
    %c6 = arith.constant 6 : index
    %c0_108 = arith.constant 0 : index
    %c0_109 = arith.constant 0 : index
    %133 = vector.load %arg4[%c6, %c0_108, %c0_109] : memref<9x128x128xbf16, #tpu.memory_space<vmem>>, vector<1x128x128xbf16>
    %134 = vector.shape_cast %133 : vector<1x128x128xbf16> to vector<128x128xbf16>
    %cst_110 = arith.constant dense<0.000000e+00> : vector<64x128xf32>
    %135 = tpu.matmul %131, %134, %cst_110 {dimension_numbers = #tpu.dot_dimension_numbers<[1], [0], [0], [1], [0, 0, 1, 1], [], []>} : vector<64x128xbf16>, vector<128x128xbf16>, vector<64x128xf32> -> vector<64x128xf32>
    %136 = arith.addf %132, %135 : vector<64x128xf32>
    %c0_111 = arith.constant 0 : index
    %c0_112 = arith.constant 0 : index
    %137 = vector.load %arg9[%c0_111, %c0_112] : memref<64x128xf32, #tpu.memory_space<vmem>>, vector<64x128xf32>
    tpu.vector_store %arg9[%c0_111, %c0_112], %136 {strides = array<i32>} : memref<64x128xf32, #tpu.memory_space<vmem>>, vector<64x128xf32>,
    %c1_113 = arith.constant 1 : index
    %c16_114 = arith.constant 16 : index
    %c0_115 = arith.constant 0 : index
    %138 = vector.load %arg8[%c1_113, %c16_114, %c0_115] : memref<3x80x128xf32, #tpu.memory_space<vmem>>, vector<1x64x128xf32>
    %139 = vector.shape_cast %138 : vector<1x64x128xf32> to vector<64x128xf32>
    %140 = arith.truncf %139 : vector<64x128xf32> to vector<64x128xbf16>
    %c0_116 = arith.constant 0 : index
    %c0_117 = arith.constant 0 : index
    %141 = vector.load %arg9[%c0_116, %c0_117] : memref<64x128xf32, #tpu.memory_space<vmem>>, vector<64x128xf32>
    %c7_118 = arith.constant 7 : index
    %c0_119 = arith.constant 0 : index
    %c0_120 = arith.constant 0 : index
    %142 = vector.load %arg4[%c7_118, %c0_119, %c0_120] : memref<9x128x128xbf16, #tpu.memory_space<vmem>>, vector<1x128x128xbf16>
    %143 = vector.shape_cast %142 : vector<1x128x128xbf16> to vector<128x128xbf16>
    %cst_121 = arith.constant dense<0.000000e+00> : vector<64x128xf32>
    %144 = tpu.matmul %140, %143, %cst_121 {dimension_numbers = #tpu.dot_dimension_numbers<[1], [0], [0], [1], [0, 0, 1, 1], [], []>} : vector<64x128xbf16>, vector<128x128xbf16>, vector<64x128xf32> -> vector<64x128xf32>
    %145 = arith.addf %141, %144 : vector<64x128xf32>
    %c0_122 = arith.constant 0 : index
    %c0_123 = arith.constant 0 : index
    %146 = vector.load %arg9[%c0_122, %c0_123] : memref<64x128xf32, #tpu.memory_space<vmem>>, vector<64x128xf32>
    tpu.vector_store %arg9[%c0_122, %c0_123], %145 {strides = array<i32>} : memref<64x128xf32, #tpu.memory_space<vmem>>, vector<64x128xf32>,
    %c2_124 = arith.constant 2 : index
    %c16_125 = arith.constant 16 : index
    %c0_126 = arith.constant 0 : index
    %147 = vector.load %arg8[%c2_124, %c16_125, %c0_126] : memref<3x80x128xf32, #tpu.memory_space<vmem>>, vector<1x64x128xf32>
    %148 = vector.shape_cast %147 : vector<1x64x128xf32> to vector<64x128xf32>
    %149 = arith.truncf %148 : vector<64x128xf32> to vector<64x128xbf16>
    %c0_127 = arith.constant 0 : index
    %c0_128 = arith.constant 0 : index
    %150 = vector.load %arg9[%c0_127, %c0_128] : memref<64x128xf32, #tpu.memory_space<vmem>>, vector<64x128xf32>
    %c8_129 = arith.constant 8 : index
    %c0_130 = arith.constant 0 : index
    %c0_131 = arith.constant 0 : index
    %151 = vector.load %arg4[%c8_129, %c0_130, %c0_131] : memref<9x128x128xbf16, #tpu.memory_space<vmem>>, vector<1x128x128xbf16>
    %152 = vector.shape_cast %151 : vector<1x128x128xbf16> to vector<128x128xbf16>
    %cst_132 = arith.constant dense<0.000000e+00> : vector<64x128xf32>
    %153 = tpu.matmul %149, %152, %cst_132 {dimension_numbers = #tpu.dot_dimension_numbers<[1], [0], [0], [1], [0, 0, 1, 1], [], []>} : vector<64x128xbf16>, vector<128x128xbf16>, vector<64x128xf32> -> vector<64x128xf32>
    %154 = arith.addf %150, %153 : vector<64x128xf32>
    %c0_133 = arith.constant 0 : index
    %c0_134 = arith.constant 0 : index
    %155 = vector.load %arg9[%c0_133, %c0_134] : memref<64x128xf32, #tpu.memory_space<vmem>>, vector<64x128xf32>
    tpu.vector_store %arg9[%c0_133, %c0_134], %154 {strides = array<i32>} : memref<64x128xf32, #tpu.memory_space<vmem>>, vector<64x128xf32>,
    %c0_135 = arith.constant 0 : index
    %c0_136 = arith.constant 0 : index
    %156 = vector.load %arg9[%c0_135, %c0_136] : memref<64x128xf32, #tpu.memory_space<vmem>>, vector<64x128xf32>
    %157 = vector.shape_cast %156 : vector<64x128xf32> to vector<8x8x128xf32>
    %c0_137 = arith.constant 0 : index
    %c0_138 = arith.constant 0 : index
    %c0_139 = arith.constant 0 : index
    %c0_140 = arith.constant 0 : index
    %158 = vector.load %arg5[%c0_137, %c0_138, %c0_139, %c0_140] : memref<1x8x8x128xf32, #tpu.memory_space<vmem>>, vector<1x8x8x128xf32>
    %159 = vector.shape_cast %158 : vector<1x8x8x128xf32> to vector<8x8x128xf32>
    %160 = vector.shape_cast %157 : vector<8x8x128xf32> to vector<1x8x8x128xf32>
    tpu.vector_store %arg5[%c0_137, %c0_138, %c0_139, %c0_140], %160 {strides = array<i32>} : memref<1x8x8x128xf32, #tpu.memory_space<vmem>>, vector<1x8x8x128xf32>,
    %cst_141 = arith.constant dense<0.000000e+00> : vector<128xf32>
    %161 = vector.multi_reduction <add>, %156, %cst_141 [0] : vector<64x128xf32> to vector<128xf32>
    %162 = vector.shape_cast %161 : vector<128xf32> to vector<1x128xf32>
    %c0_142 = arith.constant 0 : index
    %c0_143 = arith.constant 0 : index
    %c0_144 = arith.constant 0 : index
    %163 = vector.load %arg6[%c0_142, %c0_143, %c0_144] : memref<1x1x128xf32, #tpu.memory_space<vmem>>, vector<1x1x128xf32>
    %164 = vector.shape_cast %163 : vector<1x1x128xf32> to vector<1x128xf32>
    %165 = vector.shape_cast %162 : vector<1x128xf32> to vector<1x1x128xf32>
    tpu.vector_store %arg6[%c0_142, %c0_143, %c0_144], %165 {strides = array<i32>} : memref<1x1x128xf32, #tpu.memory_space<vmem>>, vector<1x1x128xf32>,
    %166 = arith.mulf %156, %156 : vector<64x128xf32>
    %cst_145 = arith.constant dense<0.000000e+00> : vector<128xf32>
    %167 = vector.multi_reduction <add>, %166, %cst_145 [0] : vector<64x128xf32> to vector<128xf32>
    %168 = vector.shape_cast %167 : vector<128xf32> to vector<1x128xf32>
    %c0_146 = arith.constant 0 : index
    %c0_147 = arith.constant 0 : index
    %c0_148 = arith.constant 0 : index
    %169 = vector.load %arg7[%c0_146, %c0_147, %c0_148] : memref<1x1x128xf32, #tpu.memory_space<vmem>>, vector<1x1x128xf32>
    %170 = vector.shape_cast %169 : vector<1x1x128xf32> to vector<1x128xf32>
    %171 = vector.shape_cast %168 : vector<1x128xf32> to vector<1x1x128xf32>
    tpu.vector_store %arg7[%c0_146, %c0_147, %c0_148], %171 {strides = array<i32>} : memref<1x1x128xf32, #tpu.memory_space<vmem>>, vector<1x1x128xf32>,
    return
  }
  func.func @transform_0(%arg0: i32) -> (i32, i32, i32, i32) {
    %c0_i32 = arith.constant 0 : i32
    %c0_i32_0 = arith.constant 0 : i32
    %c0_i32_1 = arith.constant 0 : i32
    %c0_i32_2 = arith.constant 0 : i32
    return %arg0, %c0_i32, %c0_i32_0, %c0_i32_1 : i32, i32, i32, i32
  }
  func.func @transform_1(%arg0: i32) -> (i32, i32) {
    %c0_i32 = arith.constant 0 : i32
    %c0_i32_0 = arith.constant 0 : i32
    %c0_i32_1 = arith.constant 0 : i32
    return %c0_i32, %c0_i32_0 : i32, i32
  }
  func.func @transform_2(%arg0: i32) -> (i32, i32) {
    %c0_i32 = arith.constant 0 : i32
    %c0_i32_0 = arith.constant 0 : i32
    %c0_i32_1 = arith.constant 0 : i32
    return %c0_i32, %c0_i32_0 : i32, i32
  }
  func.func @transform_3(%arg0: i32) -> (i32, i32, i32) {
    %c0_i32 = arith.constant 0 : i32
    %c0_i32_0 = arith.constant 0 : i32
    %c0_i32_1 = arith.constant 0 : i32
    %c0_i32_2 = arith.constant 0 : i32
    return %c0_i32, %c0_i32_0, %c0_i32_1 : i32, i32, i32
  }
  func.func @transform_4(%arg0: i32) -> (i32, i32, i32, i32) {
    %c0_i32 = arith.constant 0 : i32
    %c0_i32_0 = arith.constant 0 : i32
    %c0_i32_1 = arith.constant 0 : i32
    %c0_i32_2 = arith.constant 0 : i32
    return %arg0, %c0_i32, %c0_i32_0, %c0_i32_1 : i32, i32, i32, i32
  }
  func.func @transform_5(%arg0: i32) -> (i32, i32, i32) {
    %c0_i32 = arith.constant 0 : i32
    %c0_i32_0 = arith.constant 0 : i32
    %c0_i32_1 = arith.constant 0 : i32
    return %arg0, %c0_i32, %c0_i32_0 : i32, i32, i32
  }
  func.func @transform_6(%arg0: i32) -> (i32, i32, i32) {
    %c0_i32 = arith.constant 0 : i32
    %c0_i32_0 = arith.constant 0 : i32
    %c0_i32_1 = arith.constant 0 : i32
    return %arg0, %c0_i32, %c0_i32_0 : i32, i32, i32
  }
}

module attributes {stable_mosaic.version = 11 : i64} {
  func.func @_bn_relu_kernel(%arg0: i32, %arg1: memref<1x8x8x128xf32, #tpu.memory_space<vmem>>, %arg2: memref<1x128xf32, #tpu.memory_space<vmem>>, %arg3: memref<1x128xf32, #tpu.memory_space<vmem>>, %arg4: memref<1x8x8x128xf32, #tpu.memory_space<vmem>>) attributes {dimension_semantics = [#tpu.dimension_semantics<parallel>], iteration_bounds = array<i64: 2>, scalar_prefetch = 0 : i64, scratch_operands = 0 : i64, tpu.core_type = #tpu.core_type<tc>, window_params = [{transform_indices = @transform_0, window_bounds = array<i64: 1, 8, 8, 128>}, {pipeline_mode = #tpu.pipeline_mode<synchronous>, transform_indices = @transform_1, window_bounds = array<i64: 1, 128>}, {pipeline_mode = #tpu.pipeline_mode<synchronous>, transform_indices = @transform_2, window_bounds = array<i64: 1, 128>}, {transform_indices = @transform_3, window_bounds = array<i64: 1, 8, 8, 128>}]} {
    %c0 = arith.constant 0 : index
    %c0_0 = arith.constant 0 : index
    %c0_1 = arith.constant 0 : index
    %c0_2 = arith.constant 0 : index
    %0 = vector.load %arg1[%c0, %c0_0, %c0_1, %c0_2] : memref<1x8x8x128xf32, #tpu.memory_space<vmem>>, vector<1x8x8x128xf32>
    %1 = vector.shape_cast %0 : vector<1x8x8x128xf32> to vector<8x8x128xf32>
    %c0_3 = arith.constant 0 : index
    %c0_4 = arith.constant 0 : index
    %2 = vector.load %arg2[%c0_3, %c0_4] : memref<1x128xf32, #tpu.memory_space<vmem>>, vector<1x128xf32>
    %3 = vector.shape_cast %2 : vector<1x128xf32> to vector<1x1x128xf32>
    %4 = vector.broadcast %3 : vector<1x1x128xf32> to vector<8x8x128xf32>
    %5 = arith.mulf %1, %4 : vector<8x8x128xf32>
    %c0_5 = arith.constant 0 : index
    %c0_6 = arith.constant 0 : index
    %6 = vector.load %arg3[%c0_5, %c0_6] : memref<1x128xf32, #tpu.memory_space<vmem>>, vector<1x128xf32>
    %7 = vector.shape_cast %6 : vector<1x128xf32> to vector<1x1x128xf32>
    %8 = vector.broadcast %7 : vector<1x1x128xf32> to vector<8x8x128xf32>
    %9 = arith.addf %5, %8 : vector<8x8x128xf32>
    %cst = arith.constant 0.000000e+00 : f32
    %10 = vector.broadcast %cst : f32 to vector<8x8x128xf32>
    %11 = arith.maximumf %9, %10 : vector<8x8x128xf32>
    %c0_7 = arith.constant 0 : index
    %c0_8 = arith.constant 0 : index
    %c0_9 = arith.constant 0 : index
    %c0_10 = arith.constant 0 : index
    %12 = vector.load %arg4[%c0_7, %c0_8, %c0_9, %c0_10] : memref<1x8x8x128xf32, #tpu.memory_space<vmem>>, vector<1x8x8x128xf32>
    %13 = vector.shape_cast %12 : vector<1x8x8x128xf32> to vector<8x8x128xf32>
    %14 = vector.shape_cast %11 : vector<8x8x128xf32> to vector<1x8x8x128xf32>
    tpu.vector_store %arg4[%c0_7, %c0_8, %c0_9, %c0_10], %14 {strides = array<i32>} : memref<1x8x8x128xf32, #tpu.memory_space<vmem>>, vector<1x8x8x128xf32>,
    return
  }
  func.func @transform_0(%arg0: i32) -> (i32, i32, i32, i32) {
    %c0_i32 = arith.constant 0 : i32
    %c0_i32_0 = arith.constant 0 : i32
    %c0_i32_1 = arith.constant 0 : i32
    %c0_i32_2 = arith.constant 0 : i32
    return %arg0, %c0_i32, %c0_i32_0, %c0_i32_1 : i32, i32, i32, i32
  }
  func.func @transform_1(%arg0: i32) -> (i32, i32) {
    %c0_i32 = arith.constant 0 : i32
    %c0_i32_0 = arith.constant 0 : i32
    %c0_i32_1 = arith.constant 0 : i32
    return %c0_i32, %c0_i32_0 : i32, i32
  }
  func.func @transform_2(%arg0: i32) -> (i32, i32) {
    %c0_i32 = arith.constant 0 : i32
    %c0_i32_0 = arith.constant 0 : i32
    %c0_i32_1 = arith.constant 0 : i32
    return %c0_i32, %c0_i32_0 : i32, i32
  }
  func.func @transform_3(%arg0: i32) -> (i32, i32, i32, i32) {
    %c0_i32 = arith.constant 0 : i32
    %c0_i32_0 = arith.constant 0 : i32
    %c0_i32_1 = arith.constant 0 : i32
    %c0_i32_2 = arith.constant 0 : i32
    return %arg0, %c0_i32, %c0_i32_0, %c0_i32_1 : i32, i32, i32, i32
  }
}

</mosaic_0001>

<llo_original>
// kernel: down_block_forward.4
$region0: #{down_block_forward.4}
  #allocation0 [shape = 'u32[]', space=smem, size = 0x4, offset = 0x4, fixed_abs, tag = 'smem constant byte address 0x4 - core index']
  #allocation1 [shape = 'u32[144,128]{1,0:T(1,128)}', space=vmem, size = 0x12000, scoped, tag = 'internal scratch']
  %s0 = inlined_call_operand.vmem [shape: f32[2,8,2,8,8], index: 0, kind: input, shape index: {}]
  %s1 = inlined_call_operand.vmem [shape: bf16[2,8,128], index: 1, kind: input, shape index: {}]
  %s2 = inlined_call_operand.vmem [shape: f32[2,8,8,128], index: 2, kind: output, shape index: {0}]
  %s3 = inlined_call_operand.vmem [shape: f32[2,1,128], index: 3, kind: output, shape index: {1}]
  %s4 = inlined_call_operand.vmem [shape: f32[2,1,128], index: 4, kind: output, shape index: {2}]
  %5 = xla_tuple %s2, %s3, %s4
  %s6 = sld [smem:[#allocation0]]
  $region57: #{down_block_forward.4} parent=0
    _
  %s8 = ssub.s32 1, %s6
  %s9 = scalar_select 0, %s8, %s6
  loop: start=0, step=1, limit=4
  $region2: #{down_block_forward.4} parent=0 // loop_pre_header
    _
  $region3: #{down_block_forward.4} parent=0 // loop_header
    %s11 = sphi 0, %s15
    %p12 = scmp.ge.s32.totalorder %s11, 4
    %s21 = sphi 0, %s23
    %s24 = sphi 0, %s21
    %s25 = sphi 0, %s24
    %s41 = sphi 0, %s25
    %s45 = sphi 0, %s45
    %s47 = sphi 0, %s45
    %s48 = sphi 0, %s47
    %s62 = sphi 0, %s48
    %s68 = sphi 0, %s70
    %s71 = sphi 0, %s68
    %s72 = sphi 0, %s71
    %s88 = sphi 0, %s72
    %s94 = sphi 0, %s96
    %s97 = sphi 0, %s94
    %s98 = sphi 0, %s97
    %s114 = sphi 0, %s98
    %s120 = sphi 0, %s122
    %s123 = sphi 0, %s120
    %s124 = sphi 0, %s123
    %s140 = sphi 0, %s124
  $region4: #{down_block_forward.4} parent=0 // loop_header_branch
    %14 = sbr.rel (%p12) target = $region8
  $region5: #{down_block_forward.4} parent=0 // loop_body
    %s16 = ssub.s32 %s11, 1
    %s17 = ssub.s32 %s11, 2
    %s18 = sadd.s32 %s11, 1
    %s19 = ssub.s32 %s11, %s18
    %p20 = scmp.eq.s32.totalorder %s19, 0
    %s22 = sadd.s32 %s21, 1
    %s23 = scalar_select %p20, %s21, %s22
    %p26 = pneg %p20
    %p27 = scmp.eq.s32.totalorder %s11, 1
    %p28 = por %p26, %p27
    %p29 = scmp.ne.s32.totalorder %s21, %s24
    %p30 = scmp.eq.s32.totalorder %s11, 0
    %p31 = por %p29, %p30
    %p32 = scmp.ne.s32.totalorder %s21, %s24
    %p33 = scmp.eq.s32.totalorder %s16, 1
    %p34 = por %p32, %p33
    %p35 = scmp.ne.s32.totalorder %s24, %s25
    %p36 = scmp.eq.s32.totalorder %s16, 0
    %p37 = por %p35, %p36
    %p38 = scmp.ne.s32.totalorder %s24, %s25
    %p39 = scmp.eq.s32.totalorder %s17, 1
    %p40 = por %p38, %p39
    %p42 = scmp.ne.s32.totalorder %s25, %s41
    %p43 = scmp.eq.s32.totalorder %s17, 0
    %p44 = por %p42, %p43
    %s46 = sadd.s32 %s45, 1
    %p49 = scmp.eq.s32.totalorder %s11, 1
    %p50 = scmp.ne.s32.totalorder %s45, %s47
    %p51 = scmp.eq.s32.totalorder %s11, 0
    %p52 = por %p50, %p51
    %p53 = scmp.ne.s32.totalorder %s45, %s47
    %p54 = scmp.eq.s32.totalorder %s16, 1
    %p55 = por %p53, %p54
    %p56 = scmp.ne.s32.totalorder %s47, %s48
    %p57 = scmp.eq.s32.totalorder %s16, 0
    %p58 = por %p56, %p57
    %p59 = scmp.ne.s32.totalorder %s47, %s48
    %p60 = scmp.eq.s32.totalorder %s17, 1
    %p61 = por %p59, %p60
    %p63 = scmp.ne.s32.totalorder %s48, %s62
    %p64 = scmp.eq.s32.totalorder %s17, 0
    %p65 = por %p63, %p64
    %s66 = ssub.s32 %s11, %s18
    %p67 = scmp.eq.s32.totalorder %s66, 0
    %s69 = sadd.s32 %s68, 1
    %s70 = scalar_select %p67, %s68, %s69
    %p73 = pneg %p67
    %p74 = scmp.eq.s32.totalorder %s11, 1
    %p75 = por %p73, %p74
    %p76 = scmp.ne.s32.totalorder %s68, %s71
    %p77 = scmp.eq.s32.totalorder %s11, 0
    %p78 = por %p76, %p77
    %p79 = scmp.ne.s32.totalorder %s68, %s71
    %p80 = scmp.eq.s32.totalorder %s16, 1
    %p81 = por %p79, %p80
    %p82 = scmp.ne.s32.totalorder %s71, %s72
    %p83 = scmp.eq.s32.totalorder %s16, 0
    %p84 = por %p82, %p83
    %p85 = scmp.ne.s32.totalorder %s71, %s72
    %p86 = scmp.eq.s32.totalorder %s17, 1
    %p87 = por %p85, %p86
    %p89 = scmp.ne.s32.totalorder %s72, %s88
    %p90 = scmp.eq.s32.totalorder %s17, 0
    %p91 = por %p89, %p90
    %s92 = ssub.s32 %s11, %s18
    %p93 = scmp.eq.s32.totalorder %s92, 0
    %s95 = sadd.s32 %s94, 1
    %s96 = scalar_select %p93, %s94, %s95
    %p99 = pneg %p93
    %p100 = scmp.eq.s32.totalorder %s11, 1
    %p101 = por %p99, %p100
    %p102 = scmp.ne.s32.totalorder %s94, %s97
    %p103 = scmp.eq.s32.totalorder %s11, 0
    %p104 = por %p102, %p103
    %p105 = scmp.ne.s32.totalorder %s94, %s97
    %p106 = scmp.eq.s32.totalorder %s16, 1
    %p107 = por %p105, %p106
    %p108 = scmp.ne.s32.totalorder %s97, %s98
    %p109 = scmp.eq.s32.totalorder %s16, 0
    %p110 = por %p108, %p109
    %p111 = scmp.ne.s32.totalorder %s97, %s98
    %p112 = scmp.eq.s32.totalorder %s17, 1
    %p113 = por %p111, %p112
    %p115 = scmp.ne.s32.totalorder %s98, %s114
    %p116 = scmp.eq.s32.totalorder %s17, 0
    %p117 = por %p115, %p116
    %s118 = ssub.s32 %s11, %s18
    %p119 = scmp.eq.s32.totalorder %s118, 0
    %s121 = sadd.s32 %s120, 1
    %s122 = scalar_select %p119, %s120, %s121
    %p125 = pneg %p119
    %p126 = scmp.eq.s32.totalorder %s11, 1
    %p127 = por %p125, %p126
    %p128 = scmp.ne.s32.totalorder %s120, %s123
    %p129 = scmp.eq.s32.totalorder %s11, 0
    %p130 = por %p128, %p129
    %p131 = scmp.ne.s32.totalorder %s120, %s123
    %p132 = scmp.eq.s32.totalorder %s16, 1
    %p133 = por %p131, %p132
    %p134 = scmp.ne.s32.totalorder %s123, %s124
    %p135 = scmp.eq.s32.totalorder %s16, 0
    %p136 = por %p134, %p135
    %p137 = scmp.ne.s32.totalorder %s123, %s124
    %p138 = scmp.eq.s32.totalorder %s17, 1
    %p139 = por %p137, %p138
    %p141 = scmp.ne.s32.totalorder %s124, %s140
    %p142 = scmp.eq.s32.totalorder %s17, 0
    %p143 = por %p141, %p142
    %p144 = scmp.le.s32.totalorder 1, %s11
    %p145 = scmp.lt.s32.totalorder %s11, 3
    %p146 = pnand %p144, %p145
    %p147 = pneg %p146
    // Predicated region
    $region9: #{down_block_forward.4} parent=5 // pred_check
      _
    $region10: #{down_block_forward.4} parent=5 // pred_check_branch
      %149 = sbr.rel (%p146) target = $region12
    $region11: #{down_block_forward.4} parent=5 // pred_region
      %s150 = ssub.s32 %s11, 1
      // Predicated region
      $region13: #{down_block_forward.4} parent=11 // pred_check
        %p151 = pneg %p58
      $region14: #{down_block_forward.4} parent=11 // pred_check_branch
        %153 = sbr.rel (%p151) target = $region16
      $region15: #{down_block_forward.4} parent=11 // pred_region
        _
      $region16: #{down_block_forward.4} parent=11 // pred_fallthru
        _
    $region12: #{down_block_forward.4} parent=5 // pred_fallthru
      _
    %p154 = scmp.lt.s32.totalorder %s11, 2
    // Predicated region
    $region17: #{down_block_forward.4} parent=5 // pred_check
      %p155 = pneg %p154
    $region18: #{down_block_forward.4} parent=5 // pred_check_branch
      %157 = sbr.rel (%p155) target = $region20
    $region19: #{down_block_forward.4} parent=5 // pred_region
      // Predicated region
      $region21: #{down_block_forward.4} parent=19 // pred_check
        %p158 = pneg %p31
      $region22: #{down_block_forward.4} parent=19 // pred_check_branch
        %160 = sbr.rel (%p158) target = $region24
      $region23: #{down_block_forward.4} parent=19 // pred_region
        %p161 = scmp.lt.s32.totalorder %s11, 1
        %s162 = scalar_select %p161, %s11, 1
        %s163 = smul.addr %s162, 16
        %s164 = smul.addr %s163, 8
        %s165 = scalar_lea.vmem %s0, %s164
      $region24: #{down_block_forward.4} parent=19 // pred_fallthru
        _
    $region20: #{down_block_forward.4} parent=5 // pred_fallthru
      _
    %p166 = scmp.le.s32.totalorder 1, %s11
    %p167 = scmp.lt.s32.totalorder %s11, 3
    %p168 = pnand %p166, %p167
    %p169 = pneg %p168
    // Predicated region
    $region25: #{down_block_forward.4} parent=5 // pred_check
      _
    $region26: #{down_block_forward.4} parent=5 // pred_check_branch
      %171 = sbr.rel (%p168) target = $region28
    $region27: #{down_block_forward.4} parent=5 // pred_region
      %s172 = ssub.s32 %s11, 1
      %p173 = scmp.lt.s32.totalorder %s16, 1
      %s174 = scalar_select %p173, %s16, 1
      %s175 = smul.addr %s174, 16
      %s176 = smul.addr %s175, 8
      %s177 = scalar_lea.vmem %s0, %s176
      %p178 = pneg %p37
      %p179 = pneg %p34
      %p180 = pneg %p58
      %p181 = pneg %p55
      %p182 = pneg %p84
      %p183 = pneg %p81
      %p184 = scmp.lt.s32.totalorder %s16, 1
      %s185 = scalar_select %p184, %s16, 1
      %s186 = smul.addr %s185, 8
      %s187 = smul.addr %s186, 8
      %s188 = scalar_lea.vmem %s2, %s187
      %p189 = pneg %p110
      %p190 = pneg %p107
      %p191 = scmp.lt.s32.totalorder %s16, 1
      %s192 = scalar_select %p191, %s16, 1
      %s193 = scalar_lea.vmem %s3, %s192
      %p194 = pneg %p136
      %p195 = pneg %p133
      %p196 = scmp.lt.s32.totalorder %s16, 1
      %s197 = scalar_select %p196, %s16, 1
      %s198 = scalar_lea.vmem %s4, %s197
      %p199 = scmp.lt.s32.totalorder %s16, 1
      %s200 = scalar_select %p199, %s16, 1
      %s201 = smul.addr %s200, 16
      %s202 = smul.addr %s201, 8
      %s203 = scalar_lea.vmem %s0, %s202
      %p204 = scmp.lt.s32.totalorder %s16, 1
      %s205 = scalar_select %p204, %s16, 1
      %s206 = smul.addr %s205, 8
      %s207 = smul.addr %s206, 8
      %s208 = scalar_lea.vmem %s2, %s207
      %p209 = scmp.lt.s32.totalorder %s16, 1
      %s210 = scalar_select %p209, %s16, 1
      %s211 = scalar_lea.vmem %s3, %s210
      %p212 = scmp.lt.s32.totalorder %s16, 1
      %s213 = scalar_select %p212, %s16, 1
      %s214 = scalar_lea.vmem %s4, %s213
      %v216 = vld [vmem:[%s203] sm:$0xff]
      %v217 = vld [vmem:[%s203 + $0x10] sm:$0xff]
      %v218 = vld [vmem:[%s203 + $0x20] sm:$0xff]
      %v219 = vld [vmem:[%s203 + $0x30] sm:$0xff]
      %v220 = vld [vmem:[%s203 + $0x40] sm:$0xff]
      %v221 = vld [vmem:[%s203 + $0x50] sm:$0xff]
      %v222 = vld [vmem:[%s203 + $0x60] sm:$0xff]
      %v223 = vld [vmem:[%s203 + $0x70] sm:$0xff]
      %v224 = vpack.c.bf16 %v217, %v216
      %v225 = vpack.c.bf16 %v219, %v218
      %v226 = vpack.c.bf16 %v221, %v220
      %v227 = vpack.c.bf16 %v223, %v222
      %v228 = vld [vmem:[%s1] sm:$0xf]
      %s229 = scalar_lea.vmem %s203, 8
      %v230 = vld [vmem:[%s229] sm:$0xff]
      %v231 = vld [vmem:[%s229 + $0x10] sm:$0xff]
      %v232 = vld [vmem:[%s229 + $0x20] sm:$0xff]
      %v233 = vld [vmem:[%s229 + $0x30] sm:$0xff]
      %v234 = vld [vmem:[%s229 + $0x40] sm:$0xff]
      %v235 = vld [vmem:[%s229 + $0x50] sm:$0xff]
      %v236 = vld [vmem:[%s229 + $0x60] sm:$0xff]
      %v237 = vld [vmem:[%s229 + $0x70] sm:$0xff]
      %v238 = vpack.c.bf16 %v231, %v230
      %v239 = vpack.c.bf16 %v233, %v232
      %v240 = vpack.c.bf16 %v235, %v234
      %v241 = vpack.c.bf16 %v237, %v236
      %s242 = scalar_lea.vmem %s1, 4
      %v243 = vld [vmem:[%s242] sm:$0xf]
      %vm244 = vcmask 64512
      %v246 = vsel %vm244, %v238, 0
      %v249 = vsel %vm244, %v239, 0
      %v252 = vsel %vm244, %v240, 0
      %v255 = vsel %vm244, %v241, 0
      %vm257 = vcmask 1043456
      %v259 = vsel %vm257, %v243, 0
      %261 = vmatprep.subr.bf16.mxu0 0
      %262 = vmatpush1.bf16.msra.mxu0 %v259
      %263 = vmatprep.subr.bf16.mxu0 0
      %264 = vmatpush1.bf16.msra.mxu0 0
      %265 = vmatprep.subr.bf16.mxu0 0
      %266 = vmatpush1.bf16.msra.mxu0 0
      %267 = vmatprep.subr.bf16.mxu0 0
      %268 = vmatpush1.bf16.msra.mxu0 0
      %269 = vmatprep.subr.bf16.mxu0 0
      %270 = vmatpush1.bf16.msra.mxu0 0
      %271 = vmatprep.subr.bf16.mxu0 0
      %272 = vmatpush1.bf16.msra.mxu0 0
      %273 = vmatprep.subr.bf16.mxu0 0
      %274 = vmatpush1.bf16.msra.mxu0 0
      %275 = vmatprep.subr.bf16.mxu0 0
      %276 = vmatpush1.bf16.msra.mxu0 0
      %277 = vmatprep.subr.bf16.mxu0 0
      %278 = vmatpush1.bf16.msra.mxu0 0
      %279 = vmatprep.subr.bf16.mxu0 0
      %280 = vmatpush1.bf16.msra.mxu0 0
      %281 = vmatprep.subr.bf16.mxu0 0
      %282 = vmatpush1.bf16.msra.mxu0 0
      %283 = vmatprep.subr.bf16.mxu0 0
      %284 = vmatpush1.bf16.msra.mxu0 0
      %285 = vmatprep.subr.bf16.mxu0 0
      %286 = vmatpush1.bf16.msra.mxu0 0
      %287 = vmatprep.subr.bf16.mxu0 0
      %288 = vmatpush1.bf16.msra.mxu0 0
      %289 = vmatprep.subr.bf16.mxu0 0
      %290 = vmatpush1.bf16.msra.mxu0 0
      %291 = vmatprep.subr.bf16.mxu0 0
      %292 = vmatpush1.bf16.msra.mxu0 0
      %293 = vmatprep.mubr.bf16.mxu0 0
      %294 = vmatmul.mubr.bf16.gmra.mrb[0].mxu0 %v246
      %v295 = vpop.f32.mrb[0].mxu0
      %v296 = vadd.f32 0.0, %v295
      %v297 = vpop.f32.mrb[0].mxu0
      %v298 = vpop.f32.mrb[0].mxu0
      %v299 = vadd.f32 0.0, %v298
      %v300 = vpop.f32.mrb[0].mxu0
      %301 = vmatprep.mubr.bf16.mxu0 0
      %302 = vmatmul.mubr.bf16.gmra.mrb[0].mxu0 %v249
      %v303 = vpop.f32.mrb[0].mxu0
      %v304 = vadd.f32 0.0, %v303
      %v305 = vpop.f32.mrb[0].mxu0
      %v306 = vpop.f32.mrb[0].mxu0
      %v307 = vadd.f32 0.0, %v306
      %v308 = vpop.f32.mrb[0].mxu0
      %309 = vmatprep.mubr.bf16.mxu0 0
      %310 = vmatmul.mubr.bf16.gmra.mrb[0].mxu0 %v252
      %v311 = vpop.f32.mrb[0].mxu0
      %v312 = vadd.f32 0.0, %v311
      %v313 = vpop.f32.mrb[0].mxu0
      %v314 = vpop.f32.mrb[0].mxu0
      %v315 = vadd.f32 0.0, %v314
      %v316 = vpop.f32.mrb[0].mxu0
      %317 = vmatprep.mubr.bf16.mxu0 0
      %318 = vmatmul.mubr.bf16.gmra.mrb[0].mxu0 %v255
      %v319 = vpop.f32.mrb[0].mxu0
      %v320 = vadd.f32 0.0, %v319
      %v321 = vpop.f32.mrb[0].mxu0
      %v322 = vpop.f32.mrb[0].mxu0
      %v323 = vadd.f32 0.0, %v322
      %v324 = vpop.f32.mrb[0].mxu0
      %325 = vdwg.mxu0
      %v327 = vsel %vm244, %v224, 0
      %v330 = vsel %vm244, %v225, 0
      %v333 = vsel %vm244, %v226, 0
      %v336 = vsel %vm244, %v227, 0
      %v339 = vsel %vm257, %v228, 0
      %341 = vmatprep.subr.bf16.mxu0 0
      %342 = vmatpush1.bf16.msra.mxu0 %v339
      %343 = vmatprep.subr.bf16.mxu0 0
      %344 = vmatpush1.bf16.msra.mxu0 0
      %345 = vmatprep.subr.bf16.mxu0 0
      %346 = vmatpush1.bf16.msra.mxu0 0
      %347 = vmatprep.subr.bf16.mxu0 0
      %348 = vmatpush1.bf16.msra.mxu0 0
      %349 = vmatprep.subr.bf16.mxu0 0
      %350 = vmatpush1.bf16.msra.mxu0 0
      %351 = vmatprep.subr.bf16.mxu0 0
      %352 = vmatpush1.bf16.msra.mxu0 0
      %353 = vmatprep.subr.bf16.mxu0 0
      %354 = vmatpush1.bf16.msra.mxu0 0
      %355 = vmatprep.subr.bf16.mxu0 0
      %356 = vmatpush1.bf16.msra.mxu0 0
      %357 = vmatprep.subr.bf16.mxu0 0
      %358 = vmatpush1.bf16.msra.mxu0 0
      %359 = vmatprep.subr.bf16.mxu0 0
      %360 = vmatpush1.bf16.msra.mxu0 0
      %361 = vmatprep.subr.bf16.mxu0 0
      %362 = vmatpush1.bf16.msra.mxu0 0
      %363 = vmatprep.subr.bf16.mxu0 0
      %364 = vmatpush1.bf16.msra.mxu0 0
      %365 = vmatprep.subr.bf16.mxu0 0
      %366 = vmatpush1.bf16.msra.mxu0 0
      %367 = vmatprep.subr.bf16.mxu0 0
      %368 = vmatpush1.bf16.msra.mxu0 0
      %369 = vmatprep.subr.bf16.mxu0 0
      %370 = vmatpush1.bf16.msra.mxu0 0
      %371 = vmatprep.subr.bf16.mxu0 0
      %372 = vmatpush1.bf16.msra.mxu0 0
      %373 = vmatprep.mubr.bf16.mxu0 0
      %374 = vmatmul.mubr.bf16.gmra.mrb[0].mxu0 %v327
      %v375 = vpop.f32.mrb[0].mxu0
      %v376 = vadd.f32 %v296, %v375
      %v377 = vpop.f32.mrb[0].mxu0
      %v378 = vpop.f32.mrb[0].mxu0
      %v379 = vadd.f32 %v299, %v378
      %v380 = vpop.f32.mrb[0].mxu0
      %381 = vmatprep.mubr.bf16.mxu0 0
      %382 = vmatmul.mubr.bf16.gmra.mrb[0].mxu0 %v330
      %v383 = vpop.f32.mrb[0].mxu0
      %v384 = vadd.f32 %v304, %v383
      %v385 = vpop.f32.mrb[0].mxu0
      %v386 = vpop.f32.mrb[0].mxu0
      %v387 = vadd.f32 %v307, %v386
      %v388 = vpop.f32.mrb[0].mxu0
      %389 = vmatprep.mubr.bf16.mxu0 0
      %390 = vmatmul.mubr.bf16.gmra.mrb[0].mxu0 %v333
      %v391 = vpop.f32.mrb[0].mxu0
      %v392 = vadd.f32 %v312, %v391
      %v393 = vpop.f32.mrb[0].mxu0
      %v394 = vpop.f32.mrb[0].mxu0
      %v395 = vadd.f32 %v315, %v394
      %v396 = vpop.f32.mrb[0].mxu0
      %397 = vmatprep.mubr.bf16.mxu0 0
      %398 = vmatmul.mubr.bf16.gmra.mrb[0].mxu0 %v336
      %v399 = vpop.f32.mrb[0].mxu0
      %v400 = vadd.f32 %v320, %v399
      %v401 = vpop.f32.mrb[0].mxu0
      %v402 = vpop.f32.mrb[0].mxu0
      %v403 = vadd.f32 %v323, %v402
      %v404 = vpop.f32.mrb[0].mxu0
      %405 = vdwg.mxu0
      %406 = vst [vmem:[%s208] sm:$0xff] %v376
      %407 = vst [vmem:[%s208 + $0x8] sm:$0xff] %v379
      %408 = vst [vmem:[%s208 + $0x10] sm:$0xff] %v384
      %409 = vst [vmem:[%s208 + $0x18] sm:$0xff] %v387
      %410 = vst [vmem:[%s208 + $0x20] sm:$0xff] %v392
      %411 = vst [vmem:[%s208 + $0x28] sm:$0xff] %v395
      %412 = vst [vmem:[%s208 + $0x30] sm:$0xff] %v400
      %413 = vst [vmem:[%s208 + $0x38] sm:$0xff] %v403
      %v414 = vadd.f32 %v376, %v379
      %v415 = vadd.f32 %v414, %v384
      %v416 = vadd.f32 %v415, %v387
      %v417 = vadd.f32 %v416, %v392
      %v418 = vadd.f32 %v417, %v395
      %v419 = vadd.f32 %v418, %v400
      %v420 = vadd.f32 %v419, %v403
      %v421 = vrot.slane %v420, 4
      %v422 = vadd.f32 %v420, %v421
      %v423 = vrot.slane %v422, 2
      %v424 = vadd.f32 %v422, %v423
      %v425 = vrot.slane %v424, 1
      %v426 = vadd.f32 %v424, %v425
      %427 = vst [vmem:[%s211] sm:$0x1] %v426
      %v428 = vmul.f32 %v376, %v376
      %v429 = vmul.f32 %v379, %v379
      %v430 = vmul.f32 %v384, %v384
      %v431 = vmul.f32 %v387, %v387
      %v432 = vmul.f32 %v392, %v392
      %v433 = vmul.f32 %v395, %v395
      %v434 = vmul.f32 %v400, %v400
      %v435 = vmul.f32 %v403, %v403
      %v436 = vadd.f32 %v428, %v429
      %v437 = vadd.f32 %v436, %v430
      %v438 = vadd.f32 %v437, %v431
      %v439 = vadd.f32 %v438, %v432
      %v440 = vadd.f32 %v439, %v433
      %v441 = vadd.f32 %v440, %v434
      %v442 = vadd.f32 %v441, %v435
      %v443 = vrot.slane %v442, 4
      %v444 = vadd.f32 %v442, %v443
      %v445 = vrot.slane %v444, 2
      %v446 = vadd.f32 %v444, %v445
      %v447 = vrot.slane %v446, 1
      %v448 = vadd.f32 %v446, %v447
      %449 = vst [vmem:[%s214] sm:$0x1] %v448
      %p450 = scmp.lt.s32.totalorder %s16, 1
      %s451 = scalar_select %p450, %s16, 1
      %s452 = smul.addr %s451, 8
      %s453 = smul.addr %s452, 8
      %s454 = scalar_lea.vmem %s2, %s453
      %p455 = scmp.lt.s32.totalorder %s16, 1
      %s456 = scalar_select %p455, %s16, 1
      %s457 = scalar_lea.vmem %s3, %s456
      %p458 = scmp.lt.s32.totalorder %s16, 1
      %s459 = scalar_select %p458, %s16, 1
      %s460 = scalar_lea.vmem %s4, %s459
      // Predicated region
      $region29: #{down_block_forward.4} parent=27 // pred_check
        %p461 = pneg %p81
      $region30: #{down_block_forward.4} parent=27 // pred_check_branch
        %463 = sbr.rel (%p461) target = $region32
      $region31: #{down_block_forward.4} parent=27 // pred_region
        _
      $region32: #{down_block_forward.4} parent=27 // pred_fallthru
        _
      // Predicated region
      $region33: #{down_block_forward.4} parent=27 // pred_check
        %p464 = pneg %p107
      $region34: #{down_block_forward.4} parent=27 // pred_check_branch
        %466 = sbr.rel (%p464) target = $region36
      $region35: #{down_block_forward.4} parent=27 // pred_region
        _
      $region36: #{down_block_forward.4} parent=27 // pred_fallthru
        _
      // Predicated region
      $region37: #{down_block_forward.4} parent=27 // pred_check
        %p467 = pneg %p133
      $region38: #{down_block_forward.4} parent=27 // pred_check_branch
        %469 = sbr.rel (%p467) target = $region40
      $region39: #{down_block_forward.4} parent=27 // pred_region
        _
      $region40: #{down_block_forward.4} parent=27 // pred_fallthru
        _
    $region28: #{down_block_forward.4} parent=5 // pred_fallthru
      _
    %p470 = scmp.le.s32.totalorder 2, %s11
    // Predicated region
    $region41: #{down_block_forward.4} parent=5 // pred_check
      %p471 = pneg %p470
    $region42: #{down_block_forward.4} parent=5 // pred_check_branch
      %473 = sbr.rel (%p471) target = $region44
    $region43: #{down_block_forward.4} parent=5 // pred_region
      %s474 = ssub.s32 %s11, 2
      // Predicated region
      $region45: #{down_block_forward.4} parent=43 // pred_check
        %p475 = pneg %p87
      $region46: #{down_block_forward.4} parent=43 // pred_check_branch
        %477 = sbr.rel (%p475) target = $region48
      $region47: #{down_block_forward.4} parent=43 // pred_region
        %p478 = scmp.lt.s32.totalorder %s17, 1
        %s479 = scalar_select %p478, %s17, 1
        %s480 = smul.addr %s479, 8
        %s481 = smul.addr %s480, 8
        %s482 = scalar_lea.vmem %s2, %s481
      $region48: #{down_block_forward.4} parent=43 // pred_fallthru
        _
      // Predicated region
      $region49: #{down_block_forward.4} parent=43 // pred_check
        %p483 = pneg %p113
      $region50: #{down_block_forward.4} parent=43 // pred_check_branch
        %485 = sbr.rel (%p483) target = $region52
      $region51: #{down_block_forward.4} parent=43 // pred_region
        %p486 = scmp.lt.s32.totalorder %s17, 1
        %s487 = scalar_select %p486, %s17, 1
        %s488 = scalar_lea.vmem %s3, %s487
      $region52: #{down_block_forward.4} parent=43 // pred_fallthru
        _
      // Predicated region
      $region53: #{down_block_forward.4} parent=43 // pred_check
        %p489 = pneg %p139
      $region54: #{down_block_forward.4} parent=43 // pred_check_branch
        %491 = sbr.rel (%p489) target = $region56
      $region55: #{down_block_forward.4} parent=43 // pred_region
        %p492 = scmp.lt.s32.totalorder %s17, 1
        %s493 = scalar_select %p492, %s17, 1
        %s494 = scalar_lea.vmem %s4, %s493
      $region56: #{down_block_forward.4} parent=43 // pred_fallthru
        _
    $region44: #{down_block_forward.4} parent=5 // pred_fallthru
      _
  $region6: #{down_block_forward.4} parent=0 // loop_footer
    %s15 = sadd.s32 1, %s11
  $region7: #{down_block_forward.4} parent=0 // loop_footer_branch
    %10 = sbr.rel target = $region3
  $region8: #{down_block_forward.4} parent=0 // loop_exit
    _

// kernel: down_block_forward.7
$region0: #{down_block_forward.7}
  #allocation0 [shape = 'u32[]', space=smem, size = 0x4, offset = 0x4, fixed_abs, tag = 'smem constant byte address 0x4 - core index']
  #allocation1 [shape = 'u32[144,128]{1,0:T(1,128)}', space=vmem, size = 0x12000, scoped, tag = 'internal scratch']
  %s0 = inlined_call_operand.vmem [shape: f32[2,8,8,128], index: 0, kind: input, shape index: {}, may-alias: {0,3}]
  %s1 = inlined_call_operand.vmem [shape: f32[1,128], index: 1, kind: input, shape index: {}]
  %s2 = inlined_call_operand.vmem [shape: f32[1,128], index: 2, kind: input, shape index: {}]
  %s3 = inlined_call_operand.vmem [shape: f32[2,8,8,128], index: 3, kind: output, shape index: {}, may-alias: {0,3}]
  %s4 = sld [smem:[#allocation0]]
  $region45: #{down_block_forward.7} parent=0
    _
  %s6 = ssub.s32 1, %s4
  %s7 = scalar_select 0, %s6, %s4
  loop: start=0, step=1, limit=4
  $region2: #{down_block_forward.7} parent=0 // loop_pre_header
    _
  $region3: #{down_block_forward.7} parent=0 // loop_header
    %s9 = sphi 0, %s13
    %p10 = scmp.ge.s32.totalorder %s9, 4
    %s19 = sphi 0, %s21
    %s22 = sphi 0, %s19
    %s23 = sphi 0, %s22
    %s39 = sphi 0, %s23
    %s43 = sphi 0, %s43
    %s45 = sphi 0, %s43
    %s46 = sphi 0, %s45
    %s60 = sphi 0, %s46
    %s64 = sphi 0, %s64
    %s66 = sphi 0, %s64
    %s67 = sphi 0, %s66
    %s81 = sphi 0, %s67
    %s87 = sphi 0, %s89
    %s90 = sphi 0, %s87
    %s91 = sphi 0, %s90
    %s107 = sphi 0, %s91
  $region4: #{down_block_forward.7} parent=0 // loop_header_branch
    %12 = sbr.rel (%p10) target = $region8
  $region5: #{down_block_forward.7} parent=0 // loop_body
    %s14 = ssub.s32 %s9, 1
    %s15 = ssub.s32 %s9, 2
    %s16 = sadd.s32 %s9, 1
    %s17 = ssub.s32 %s9, %s16
    %p18 = scmp.eq.s32.totalorder %s17, 0
    %s20 = sadd.s32 %s19, 1
    %s21 = scalar_select %p18, %s19, %s20
    %p24 = pneg %p18
    %p25 = scmp.eq.s32.totalorder %s9, 1
    %p26 = por %p24, %p25
    %p27 = scmp.ne.s32.totalorder %s19, %s22
    %p28 = scmp.eq.s32.totalorder %s9, 0
    %p29 = por %p27, %p28
    %p30 = scmp.ne.s32.totalorder %s19, %s22
    %p31 = scmp.eq.s32.totalorder %s14, 1
    %p32 = por %p30, %p31
    %p33 = scmp.ne.s32.totalorder %s22, %s23
    %p34 = scmp.eq.s32.totalorder %s14, 0
    %p35 = por %p33, %p34
    %p36 = scmp.ne.s32.totalorder %s22, %s23
    %p37 = scmp.eq.s32.totalorder %s15, 1
    %p38 = por %p36, %p37
    %p40 = scmp.ne.s32.totalorder %s23, %s39
    %p41 = scmp.eq.s32.totalorder %s15, 0
    %p42 = por %p40, %p41
    %s44 = sadd.s32 %s43, 1
    %p47 = scmp.eq.s32.totalorder %s9, 1
    %p48 = scmp.ne.s32.totalorder %s43, %s45
    %p49 = scmp.eq.s32.totalorder %s9, 0
    %p50 = por %p48, %p49
    %p51 = scmp.ne.s32.totalorder %s43, %s45
    %p52 = scmp.eq.s32.totalorder %s14, 1
    %p53 = por %p51, %p52
    %p54 = scmp.ne.s32.totalorder %s45, %s46
    %p55 = scmp.eq.s32.totalorder %s14, 0
    %p56 = por %p54, %p55
    %p57 = scmp.ne.s32.totalorder %s45, %s46
    %p58 = scmp.eq.s32.totalorder %s15, 1
    %p59 = por %p57, %p58
    %p61 = scmp.ne.s32.totalorder %s46, %s60
    %p62 = scmp.eq.s32.totalorder %s15, 0
    %p63 = por %p61, %p62
    %s65 = sadd.s32 %s64, 1
    %p68 = scmp.eq.s32.totalorder %s9, 1
    %p69 = scmp.ne.s32.totalorder %s64, %s66
    %p70 = scmp.eq.s32.totalorder %s9, 0
    %p71 = por %p69, %p70
    %p72 = scmp.ne.s32.totalorder %s64, %s66
    %p73 = scmp.eq.s32.totalorder %s14, 1
    %p74 = por %p72, %p73
    %p75 = scmp.ne.s32.totalorder %s66, %s67
    %p76 = scmp.eq.s32.totalorder %s14, 0
    %p77 = por %p75, %p76
    %p78 = scmp.ne.s32.totalorder %s66, %s67
    %p79 = scmp.eq.s32.totalorder %s15, 1
    %p80 = por %p78, %p79
    %p82 = scmp.ne.s32.totalorder %s67, %s81
    %p83 = scmp.eq.s32.totalorder %s15, 0
    %p84 = por %p82, %p83
    %s85 = ssub.s32 %s9, %s16
    %p86 = scmp.eq.s32.totalorder %s85, 0
    %s88 = sadd.s32 %s87, 1
    %s89 = scalar_select %p86, %s87, %s88
    %p92 = pneg %p86
    %p93 = scmp.eq.s32.totalorder %s9, 1
    %p94 = por %p92, %p93
    %p95 = scmp.ne.s32.totalorder %s87, %s90
    %p96 = scmp.eq.s32.totalorder %s9, 0
    %p97 = por %p95, %p96
    %p98 = scmp.ne.s32.totalorder %s87, %s90
    %p99 = scmp.eq.s32.totalorder %s14, 1
    %p100 = por %p98, %p99
    %p101 = scmp.ne.s32.totalorder %s90, %s91
    %p102 = scmp.eq.s32.totalorder %s14, 0
    %p103 = por %p101, %p102
    %p104 = scmp.ne.s32.totalorder %s90, %s91
    %p105 = scmp.eq.s32.totalorder %s15, 1
    %p106 = por %p104, %p105
    %p108 = scmp.ne.s32.totalorder %s91, %s107
    %p109 = scmp.eq.s32.totalorder %s15, 0
    %p110 = por %p108, %p109
    %p111 = scmp.le.s32.totalorder 1, %s9
    %p112 = scmp.lt.s32.totalorder %s9, 3
    %p113 = pnand %p111, %p112
    %p114 = pneg %p113
    // Predicated region
    $region9: #{down_block_forward.7} parent=5 // pred_check
      _
    $region10: #{down_block_forward.7} parent=5 // pred_check_branch
      %116 = sbr.rel (%p113) target = $region12
    $region11: #{down_block_forward.7} parent=5 // pred_region
      %s117 = ssub.s32 %s9, 1
      // Predicated region
      $region13: #{down_block_forward.7} parent=11 // pred_check
        %p118 = pneg %p56
      $region14: #{down_block_forward.7} parent=11 // pred_check_branch
        %120 = sbr.rel (%p118) target = $region16
      $region15: #{down_block_forward.7} parent=11 // pred_region
        _
      $region16: #{down_block_forward.7} parent=11 // pred_fallthru
        _
      // Predicated region
      $region17: #{down_block_forward.7} parent=11 // pred_check
        %p121 = pneg %p77
      $region18: #{down_block_forward.7} parent=11 // pred_check_branch
        %123 = sbr.rel (%p121) target = $region20
      $region19: #{down_block_forward.7} parent=11 // pred_region
        _
      $region20: #{down_block_forward.7} parent=11 // pred_fallthru
        _
    $region12: #{down_block_forward.7} parent=5 // pred_fallthru
      _
    %p124 = scmp.lt.s32.totalorder %s9, 2
    // Predicated region
    $region21: #{down_block_forward.7} parent=5 // pred_check
      %p125 = pneg %p124
    $region22: #{down_block_forward.7} parent=5 // pred_check_branch
      %127 = sbr.rel (%p125) target = $region24
    $region23: #{down_block_forward.7} parent=5 // pred_region
      // Predicated region
      $region25: #{down_block_forward.7} parent=23 // pred_check
        %p128 = pneg %p29
      $region26: #{down_block_forward.7} parent=23 // pred_check_branch
        %130 = sbr.rel (%p128) target = $region28
      $region27: #{down_block_forward.7} parent=23 // pred_region
        %p131 = scmp.lt.s32.totalorder %s9, 1
        %s132 = scalar_select %p131, %s9, 1
        %s133 = smul.addr %s132, 8
        %s134 = smul.addr %s133, 8
        %s135 = scalar_lea.vmem %s0, %s134
      $region28: #{down_block_forward.7} parent=23 // pred_fallthru
        _
    $region24: #{down_block_forward.7} parent=5 // pred_fallthru
      _
    %p136 = scmp.le.s32.totalorder 1, %s9
    %p137 = scmp.lt.s32.totalorder %s9, 3
    %p138 = pnand %p136, %p137
    %p139 = pneg %p138
    // Predicated region
    $region29: #{down_block_forward.7} parent=5 // pred_check
      _
    $region30: #{down_block_forward.7} parent=5 // pred_check_branch
      %141 = sbr.rel (%p138) target = $region32
    $region31: #{down_block_forward.7} parent=5 // pred_region
      %s142 = ssub.s32 %s9, 1
      %p143 = scmp.lt.s32.totalorder %s14, 1
      %s144 = scalar_select %p143, %s14, 1
      %s145 = smul.addr %s144, 8
      %s146 = smul.addr %s145, 8
      %s147 = scalar_lea.vmem %s0, %s146
      %p148 = pneg %p35
      %p149 = pneg %p32
      %p150 = pneg %p56
      %p151 = pneg %p53
      %p152 = pneg %p77
      %p153 = pneg %p74
      %p154 = pneg %p103
      %p155 = pneg %p100
      %p156 = scmp.lt.s32.totalorder %s14, 1
      %s157 = scalar_select %p156, %s14, 1
      %s158 = smul.addr %s157, 8
      %s159 = smul.addr %s158, 8
      %s160 = scalar_lea.vmem %s3, %s159
      %p161 = scmp.lt.s32.totalorder %s14, 1
      %s162 = scalar_select %p161, %s14, 1
      %s163 = smul.addr %s162, 8
      %s164 = smul.addr %s163, 8
      %s165 = scalar_lea.vmem %s0, %s164
      %p166 = scmp.lt.s32.totalorder %s14, 1
      %s167 = scalar_select %p166, %s14, 1
      %s168 = smul.addr %s167, 8
      %s169 = smul.addr %s168, 8
      %s170 = scalar_lea.vmem %s3, %s169
      %v171 = vld [vmem:[%s165] sm:$0xff]
      %v172 = vld [vmem:[%s165 + $0x8] sm:$0xff]
      %v173 = vld [vmem:[%s165 + $0x10] sm:$0xff]
      %v174 = vld [vmem:[%s165 + $0x18] sm:$0xff]
      %v175 = vld [vmem:[%s165 + $0x20] sm:$0xff]
      %v176 = vld [vmem:[%s165 + $0x28] sm:$0xff]
      %v177 = vld [vmem:[%s165 + $0x30] sm:$0xff]
      %v178 = vld [vmem:[%s165 + $0x38] sm:$0xff]
      %v179 = vld [vmem:[%s1] sm:$0x1]
      %v181 = vlaneseq
      %v182 = vshrl.u32 %v181, 7
      %v183 = vsub.s32 0, %v182
      %v184 = vrot.slane %v179, %v183
      %v186 = vmul.f32 %v171, %v184
      %v187 = vmul.f32 %v172, %v184
      %v188 = vmul.f32 %v173, %v184
      %v189 = vmul.f32 %v174, %v184
      %v190 = vmul.f32 %v175, %v184
      %v191 = vmul.f32 %v176, %v184
      %v192 = vmul.f32 %v177, %v184
      %v193 = vmul.f32 %v178, %v184
      %v194 = vld [vmem:[%s2] sm:$0x1]
      %v196 = vlaneseq
      %v197 = vshrl.u32 %v196, 7
      %v198 = vsub.s32 0, %v197
      %v199 = vrot.slane %v194, %v198
      %v201 = vadd.f32 %v186, %v199
      %v202 = vadd.f32 %v187, %v199
      %v203 = vadd.f32 %v188, %v199
      %v204 = vadd.f32 %v189, %v199
      %v205 = vadd.f32 %v190, %v199
      %v206 = vadd.f32 %v191, %v199
      %v207 = vadd.f32 %v192, %v199
      %v208 = vadd.f32 %v193, %v199
      %v209 = vmax.f32 %v201, 0.0
      %v210 = vmax.f32 %v202, 0.0
      %v211 = vmax.f32 %v203, 0.0
      %v212 = vmax.f32 %v204, 0.0
      %v213 = vmax.f32 %v205, 0.0
      %v214 = vmax.f32 %v206, 0.0
      %v215 = vmax.f32 %v207, 0.0
      %v216 = vmax.f32 %v208, 0.0
      %217 = vst [vmem:[%s170] sm:$0xff] %v209
      %218 = vst [vmem:[%s170 + $0x8] sm:$0xff] %v210
      %219 = vst [vmem:[%s170 + $0x10] sm:$0xff] %v211
      %220 = vst [vmem:[%s170 + $0x18] sm:$0xff] %v212
      %221 = vst [vmem:[%s170 + $0x20] sm:$0xff] %v213
      %222 = vst [vmem:[%s170 + $0x28] sm:$0xff] %v214
      %223 = vst [vmem:[%s170 + $0x30] sm:$0xff] %v215
      %224 = vst [vmem:[%s170 + $0x38] sm:$0xff] %v216
      %p225 = scmp.lt.s32.totalorder %s14, 1
      %s226 = scalar_select %p225, %s14, 1
      %s227 = smul.addr %s226, 8
      %s228 = smul.addr %s227, 8
      %s229 = scalar_lea.vmem %s3, %s228
      // Predicated region
      $region33: #{down_block_forward.7} parent=31 // pred_check
        %p230 = pneg %p100
      $region34: #{down_block_forward.7} parent=31 // pred_check_branch
        %232 = sbr.rel (%p230) target = $region36
      $region35: #{down_block_forward.7} parent=31 // pred_region
        _
      $region36: #{down_block_forward.7} parent=31 // pred_fallthru
        _
    $region32: #{down_block_forward.7} parent=5 // pred_fallthru
      _
    %p233 = scmp.le.s32.totalorder 2, %s9
    // Predicated region
    $region37: #{down_block_forward.7} parent=5 // pred_check
      %p234 = pneg %p233
    $region38: #{down_block_forward.7} parent=5 // pred_check_branch
      %236 = sbr.rel (%p234) target = $region40
    $region39: #{down_block_forward.7} parent=5 // pred_region
      %s237 = ssub.s32 %s9, 2
      // Predicated region
      $region41: #{down_block_forward.7} parent=39 // pred_check
        %p238 = pneg %p106
      $region42: #{down_block_forward.7} parent=39 // pred_check_branch
        %240 = sbr.rel (%p238) target = $region44
      $region43: #{down_block_forward.7} parent=39 // pred_region
        %p241 = scmp.lt.s32.totalorder %s15, 1
        %s242 = scalar_select %p241, %s15, 1
        %s243 = smul.addr %s242, 8
        %s244 = smul.addr %s243, 8
        %s245 = scalar_lea.vmem %s3, %s244
      $region44: #{down_block_forward.7} parent=39 // pred_fallthru
        _
    $region40: #{down_block_forward.7} parent=5 // pred_fallthru
      _
  $region6: #{down_block_forward.7} parent=0 // loop_footer
    %s13 = sadd.s32 1, %s9
  $region7: #{down_block_forward.7} parent=0 // loop_footer_branch
    %8 = sbr.rel target = $region3
  $region8: #{down_block_forward.7} parent=0 // loop_exit
    _

// kernel: down_block_forward.5
$region0: #{down_block_forward.5}
  #allocation0 [shape = 'u32[]', space=smem, size = 0x4, offset = 0x4, fixed_abs, tag = 'smem constant byte address 0x4 - core index']
  #allocation1 [shape = 'u32[144,128]{1,0:T(1,128)}', space=vmem, size = 0x12000, scoped, tag = 'internal scratch']
  #allocation2 [shape = 'f32[3,80,128]{2,1,0:T(8,128)}', space=vmem, size = 0x1e000, scoped, tag = 'scratch operand']
  #allocation3 [shape = 'f32[64,128]{1,0:T(8,128)}', space=vmem, size = 0x8000, scoped, tag = 'scratch operand']
  %s0 = inlined_call_operand.vmem [shape: f32[2,8,8,128], index: 0, kind: input, shape index: {}]
  %s1 = inlined_call_operand.vmem [shape: f32[1,128], index: 1, kind: input, shape index: {}]
  %s2 = inlined_call_operand.vmem [shape: f32[1,128], index: 2, kind: input, shape index: {}]
  %s3 = inlined_call_operand.vmem [shape: bf16[9,128,128], index: 3, kind: input, shape index: {}]
  %s4 = inlined_call_operand.vmem [shape: f32[2,8,8,128], index: 4, kind: output, shape index: {0}]
  %s5 = inlined_call_operand.vmem [shape: f32[2,1,128], index: 5, kind: output, shape index: {1}]
  %s6 = inlined_call_operand.vmem [shape: f32[2,1,128], index: 6, kind: output, shape index: {2}]
  %7 = xla_tuple %s4, %s5, %s6
  %s8 = sld [smem:[#allocation0]]
  $region65: #{down_block_forward.5} parent=0
    _
  %s10 = ssub.s32 1, %s8
  %s11 = scalar_select 0, %s10, %s8
  loop: start=0, step=1, limit=4
  $region2: #{down_block_forward.5} parent=0 // loop_pre_header
    _
  $region3: #{down_block_forward.5} parent=0 // loop_header
    %s13 = sphi 0, %s17
    %p14 = scmp.ge.s32.totalorder %s13, 4
    %s23 = sphi 0, %s25
    %s26 = sphi 0, %s23
    %s27 = sphi 0, %s26
    %s43 = sphi 0, %s27
    %s47 = sphi 0, %s47
    %s49 = sphi 0, %s47
    %s50 = sphi 0, %s49
    %s64 = sphi 0, %s50
    %s68 = sphi 0, %s68
    %s70 = sphi 0, %s68
    %s71 = sphi 0, %s70
    %s85 = sphi 0, %s71
    %s89 = sphi 0, %s89
    %s91 = sphi 0, %s89
    %s92 = sphi 0, %s91
    %s106 = sphi 0, %s92
    %s112 = sphi 0, %s114
    %s115 = sphi 0, %s112
    %s116 = sphi 0, %s115
    %s132 = sphi 0, %s116
    %s138 = sphi 0, %s140
    %s141 = sphi 0, %s138
    %s142 = sphi 0, %s141
    %s158 = sphi 0, %s142
    %s164 = sphi 0, %s166
    %s167 = sphi 0, %s164
    %s168 = sphi 0, %s167
    %s184 = sphi 0, %s168
  $region4: #{down_block_forward.5} parent=0 // loop_header_branch
    %16 = sbr.rel (%p14) target = $region8
  $region5: #{down_block_forward.5} parent=0 // loop_body
    %s18 = ssub.s32 %s13, 1
    %s19 = ssub.s32 %s13, 2
    %s20 = sadd.s32 %s13, 1
    %s21 = ssub.s32 %s13, %s20
    %p22 = scmp.eq.s32.totalorder %s21, 0
    %s24 = sadd.s32 %s23, 1
    %s25 = scalar_select %p22, %s23, %s24
    %p28 = pneg %p22
    %p29 = scmp.eq.s32.totalorder %s13, 1
    %p30 = por %p28, %p29
    %p31 = scmp.ne.s32.totalorder %s23, %s26
    %p32 = scmp.eq.s32.totalorder %s13, 0
    %p33 = por %p31, %p32
    %p34 = scmp.ne.s32.totalorder %s23, %s26
    %p35 = scmp.eq.s32.totalorder %s18, 1
    %p36 = por %p34, %p35
    %p37 = scmp.ne.s32.totalorder %s26, %s27
    %p38 = scmp.eq.s32.totalorder %s18, 0
    %p39 = por %p37, %p38
    %p40 = scmp.ne.s32.totalorder %s26, %s27
    %p41 = scmp.eq.s32.totalorder %s19, 1
    %p42 = por %p40, %p41
    %p44 = scmp.ne.s32.totalorder %s27, %s43
    %p45 = scmp.eq.s32.totalorder %s19, 0
    %p46 = por %p44, %p45
    %s48 = sadd.s32 %s47, 1
    %p51 = scmp.eq.s32.totalorder %s13, 1
    %p52 = scmp.ne.s32.totalorder %s47, %s49
    %p53 = scmp.eq.s32.totalorder %s13, 0
    %p54 = por %p52, %p53
    %p55 = scmp.ne.s32.totalorder %s47, %s49
    %p56 = scmp.eq.s32.totalorder %s18, 1
    %p57 = por %p55, %p56
    %p58 = scmp.ne.s32.totalorder %s49, %s50
    %p59 = scmp.eq.s32.totalorder %s18, 0
    %p60 = por %p58, %p59
    %p61 = scmp.ne.s32.totalorder %s49, %s50
    %p62 = scmp.eq.s32.totalorder %s19, 1
    %p63 = por %p61, %p62
    %p65 = scmp.ne.s32.totalorder %s50, %s64
    %p66 = scmp.eq.s32.totalorder %s19, 0
    %p67 = por %p65, %p66
    %s69 = sadd.s32 %s68, 1
    %p72 = scmp.eq.s32.totalorder %s13, 1
    %p73 = scmp.ne.s32.totalorder %s68, %s70
    %p74 = scmp.eq.s32.totalorder %s13, 0
    %p75 = por %p73, %p74
    %p76 = scmp.ne.s32.totalorder %s68, %s70
    %p77 = scmp.eq.s32.totalorder %s18, 1
    %p78 = por %p76, %p77
    %p79 = scmp.ne.s32.totalorder %s70, %s71
    %p80 = scmp.eq.s32.totalorder %s18, 0
    %p81 = por %p79, %p80
    %p82 = scmp.ne.s32.totalorder %s70, %s71
    %p83 = scmp.eq.s32.totalorder %s19, 1
    %p84 = por %p82, %p83
    %p86 = scmp.ne.s32.totalorder %s71, %s85
    %p87 = scmp.eq.s32.totalorder %s19, 0
    %p88 = por %p86, %p87
    %s90 = sadd.s32 %s89, 1
    %p93 = scmp.eq.s32.totalorder %s13, 1
    %p94 = scmp.ne.s32.totalorder %s89, %s91
    %p95 = scmp.eq.s32.totalorder %s13, 0
    %p96 = por %p94, %p95
    %p97 = scmp.ne.s32.totalorder %s89, %s91
    %p98 = scmp.eq.s32.totalorder %s18, 1
    %p99 = por %p97, %p98
    %p100 = scmp.ne.s32.totalorder %s91, %s92
    %p101 = scmp.eq.s32.totalorder %s18, 0
    %p102 = por %p100, %p101
    %p103 = scmp.ne.s32.totalorder %s91, %s92
    %p104 = scmp.eq.s32.totalorder %s19, 1
    %p105 = por %p103, %p104
    %p107 = scmp.ne.s32.totalorder %s92, %s106
    %p108 = scmp.eq.s32.totalorder %s19, 0
    %p109 = por %p107, %p108
    %s110 = ssub.s32 %s13, %s20
    %p111 = scmp.eq.s32.totalorder %s110, 0
    %s113 = sadd.s32 %s112, 1
    %s114 = scalar_select %p111, %s112, %s113
    %p117 = pneg %p111
    %p118 = scmp.eq.s32.totalorder %s13, 1
    %p119 = por %p117, %p118
    %p120 = scmp.ne.s32.totalorder %s112, %s115
    %p121 = scmp.eq.s32.totalorder %s13, 0
    %p122 = por %p120, %p121
    %p123 = scmp.ne.s32.totalorder %s112, %s115
    %p124 = scmp.eq.s32.totalorder %s18, 1
    %p125 = por %p123, %p124
    %p126 = scmp.ne.s32.totalorder %s115, %s116
    %p127 = scmp.eq.s32.totalorder %s18, 0
    %p128 = por %p126, %p127
    %p129 = scmp.ne.s32.totalorder %s115, %s116
    %p130 = scmp.eq.s32.totalorder %s19, 1
    %p131 = por %p129, %p130
    %p133 = scmp.ne.s32.totalorder %s116, %s132
    %p134 = scmp.eq.s32.totalorder %s19, 0
    %p135 = por %p133, %p134
    %s136 = ssub.s32 %s13, %s20
    %p137 = scmp.eq.s32.totalorder %s136, 0
    %s139 = sadd.s32 %s138, 1
    %s140 = scalar_select %p137, %s138, %s139
    %p143 = pneg %p137
    %p144 = scmp.eq.s32.totalorder %s13, 1
    %p145 = por %p143, %p144
    %p146 = scmp.ne.s32.totalorder %s138, %s141
    %p147 = scmp.eq.s32.totalorder %s13, 0
    %p148 = por %p146, %p147
    %p149 = scmp.ne.s32.totalorder %s138, %s141
    %p150 = scmp.eq.s32.totalorder %s18, 1
    %p151 = por %p149, %p150
    %p152 = scmp.ne.s32.totalorder %s141, %s142
    %p153 = scmp.eq.s32.totalorder %s18, 0
    %p154 = por %p152, %p153
    %p155 = scmp.ne.s32.totalorder %s141, %s142
    %p156 = scmp.eq.s32.totalorder %s19, 1
    %p157 = por %p155, %p156
    %p159 = scmp.ne.s32.totalorder %s142, %s158
    %p160 = scmp.eq.s32.totalorder %s19, 0
    %p161 = por %p159, %p160
    %s162 = ssub.s32 %s13, %s20
    %p163 = scmp.eq.s32.totalorder %s162, 0
    %s165 = sadd.s32 %s164, 1
    %s166 = scalar_select %p163, %s164, %s165
    %p169 = pneg %p163
    %p170 = scmp.eq.s32.totalorder %s13, 1
    %p171 = por %p169, %p170
    %p172 = scmp.ne.s32.totalorder %s164, %s167
    %p173 = scmp.eq.s32.totalorder %s13, 0
    %p174 = por %p172, %p173
    %p175 = scmp.ne.s32.totalorder %s164, %s167
    %p176 = scmp.eq.s32.totalorder %s18, 1
    %p177 = por %p175, %p176
    %p178 = scmp.ne.s32.totalorder %s167, %s168
    %p179 = scmp.eq.s32.totalorder %s18, 0
    %p180 = por %p178, %p179
    %p181 = scmp.ne.s32.totalorder %s167, %s168
    %p182 = scmp.eq.s32.totalorder %s19, 1
    %p183 = por %p181, %p182
    %p185 = scmp.ne.s32.totalorder %s168, %s184
    %p186 = scmp.eq.s32.totalorder %s19, 0
    %p187 = por %p185, %p186
    %p188 = scmp.le.s32.totalorder 1, %s13
    %p189 = scmp.lt.s32.totalorder %s13, 3
    %p190 = pnand %p188, %p189
    %p191 = pneg %p190
    // Predicated region
    $region9: #{down_block_forward.5} parent=5 // pred_check
      _
    $region10: #{down_block_forward.5} parent=5 // pred_check_branch
      %193 = sbr.rel (%p190) target = $region12
    $region11: #{down_block_forward.5} parent=5 // pred_region
      %s194 = ssub.s32 %s13, 1
      // Predicated region
      $region13: #{down_block_forward.5} parent=11 // pred_check
        %p195 = pneg %p60
      $region14: #{down_block_forward.5} parent=11 // pred_check_branch
        %197 = sbr.rel (%p195) target = $region16
      $region15: #{down_block_forward.5} parent=11 // pred_region
        _
      $region16: #{down_block_forward.5} parent=11 // pred_fallthru
        _
      // Predicated region
      $region17: #{down_block_forward.5} parent=11 // pred_check
        %p198 = pneg %p81
      $region18: #{down_block_forward.5} parent=11 // pred_check_branch
        %200 = sbr.rel (%p198) target = $region20
      $region19: #{down_block_forward.5} parent=11 // pred_region
        _
      $region20: #{down_block_forward.5} parent=11 // pred_fallthru
        _
      // Predicated region
      $region21: #{down_block_forward.5} parent=11 // pred_check
        %p201 = pneg %p102
      $region22: #{down_block_forward.5} parent=11 // pred_check_branch
        %203 = sbr.rel (%p201) target = $region24
      $region23: #{down_block_forward.5} parent=11 // pred_region
        _
      $region24: #{down_block_forward.5} parent=11 // pred_fallthru
        _
    $region12: #{down_block_forward.5} parent=5 // pred_fallthru
      _
    %p204 = scmp.lt.s32.totalorder %s13, 2
    // Predicated region
    $region25: #{down_block_forward.5} parent=5 // pred_check
      %p205 = pneg %p204
    $region26: #{down_block_forward.5} parent=5 // pred_check_branch
      %207 = sbr.rel (%p205) target = $region28
    $region27: #{down_block_forward.5} parent=5 // pred_region
      // Predicated region
      $region29: #{down_block_forward.5} parent=27 // pred_check
        %p208 = pneg %p33
      $region30: #{down_block_forward.5} parent=27 // pred_check_branch
        %210 = sbr.rel (%p208) target = $region32
      $region31: #{down_block_forward.5} parent=27 // pred_region
        %p211 = scmp.lt.s32.totalorder %s13, 1
        %s212 = scalar_select %p211, %s13, 1
        %s213 = smul.addr %s212, 8
        %s214 = smul.addr %s213, 8
        %s215 = scalar_lea.vmem %s0, %s214
      $region32: #{down_block_forward.5} parent=27 // pred_fallthru
        _
    $region28: #{down_block_forward.5} parent=5 // pred_fallthru
      _
    %p216 = scmp.le.s32.totalorder 1, %s13
    %p217 = scmp.lt.s32.totalorder %s13, 3
    %p218 = pnand %p216, %p217
    %p219 = pneg %p218
    // Predicated region
    $region33: #{down_block_forward.5} parent=5 // pred_check
      _
    $region34: #{down_block_forward.5} parent=5 // pred_check_branch
      %221 = sbr.rel (%p218) target = $region36
    $region35: #{down_block_forward.5} parent=5 // pred_region
      %s222 = ssub.s32 %s13, 1
      %p223 = scmp.lt.s32.totalorder %s18, 1
      %s224 = scalar_select %p223, %s18, 1
      %s225 = smul.addr %s224, 8
      %s226 = smul.addr %s225, 8
      %s227 = scalar_lea.vmem %s0, %s226
      %p228 = pneg %p39
      %p229 = pneg %p36
      %p230 = pneg %p60
      %p231 = pneg %p57
      %p232 = pneg %p81
      %p233 = pneg %p78
      %p234 = pneg %p102
      %p235 = pneg %p99
      %p236 = pneg %p128
      %p237 = pneg %p125
      %p238 = scmp.lt.s32.totalorder %s18, 1
      %s239 = scalar_select %p238, %s18, 1
      %s240 = smul.addr %s239, 8
      %s241 = smul.addr %s240, 8
      %s242 = scalar_lea.vmem %s4, %s241
      %p243 = pneg %p154
      %p244 = pneg %p151
      %p245 = scmp.lt.s32.totalorder %s18, 1
      %s246 = scalar_select %p245, %s18, 1
      %s247 = scalar_lea.vmem %s5, %s246
      %p248 = pneg %p180
      %p249 = pneg %p177
      %p250 = scmp.lt.s32.totalorder %s18, 1
      %s251 = scalar_select %p250, %s18, 1
      %s252 = scalar_lea.vmem %s6, %s251
      %p253 = scmp.lt.s32.totalorder %s18, 1
      %s254 = scalar_select %p253, %s18, 1
      %s255 = smul.addr %s254, 8
      %s256 = smul.addr %s255, 8
      %s257 = scalar_lea.vmem %s0, %s256
      %p258 = scmp.lt.s32.totalorder %s18, 1
      %s259 = scalar_select %p258, %s18, 1
      %s260 = smul.addr %s259, 8
      %s261 = smul.addr %s260, 8
      %s262 = scalar_lea.vmem %s4, %s261
      %p263 = scmp.lt.s32.totalorder %s18, 1
      %s264 = scalar_select %p263, %s18, 1
      %s265 = scalar_lea.vmem %s5, %s264
      %p266 = scmp.lt.s32.totalorder %s18, 1
      %s267 = scalar_select %p266, %s18, 1
      %s268 = scalar_lea.vmem %s6, %s267
      %v270 = vld [vmem:[%s257] sm:$0xff]
      %v271 = vld [vmem:[%s257 + $0x8] sm:$0xff]
      %v272 = vld [vmem:[%s257 + $0x10] sm:$0xff]
      %v273 = vld [vmem:[%s257 + $0x18] sm:$0xff]
      %v274 = vld [vmem:[%s257 + $0x20] sm:$0xff]
      %v275 = vld [vmem:[%s257 + $0x28] sm:$0xff]
      %v276 = vld [vmem:[%s257 + $0x30] sm:$0xff]
      %v277 = vld [vmem:[%s257 + $0x38] sm:$0xff]
      %v278 = vld [vmem:[%s1] sm:$0x1]
      %v280 = vlaneseq
      %v281 = vshrl.u32 %v280, 7
      %v282 = vsub.s32 0, %v281
      %v283 = vrot.slane %v278, %v282
      %v285 = vmul.f32 %v270, %v283
      %v286 = vmul.f32 %v271, %v283
      %v287 = vmul.f32 %v272, %v283
      %v288 = vmul.f32 %v273, %v283
      %v289 = vmul.f32 %v274, %v283
      %v290 = vmul.f32 %v275, %v283
      %v291 = vmul.f32 %v276, %v283
      %v292 = vmul.f32 %v277, %v283
      %v293 = vld [vmem:[%s2] sm:$0x1]
      %v295 = vlaneseq
      %v296 = vshrl.u32 %v295, 7
      %v297 = vsub.s32 0, %v296
      %v298 = vrot.slane %v293, %v297
      %v300 = vadd.f32 %v285, %v298
      %v301 = vadd.f32 %v286, %v298
      %v302 = vadd.f32 %v287, %v298
      %v303 = vadd.f32 %v288, %v298
      %v304 = vadd.f32 %v289, %v298
      %v305 = vadd.f32 %v290, %v298
      %v306 = vadd.f32 %v291, %v298
      %v307 = vadd.f32 %v292, %v298
      %v308 = vmax.f32 %v300, 0.0
      %v309 = vmax.f32 %v301, 0.0
      %v310 = vmax.f32 %v302, 0.0
      %v311 = vmax.f32 %v303, 0.0
      %v312 = vmax.f32 %v304, 0.0
      %v313 = vmax.f32 %v305, 0.0
      %v314 = vmax.f32 %v306, 0.0
      %v315 = vmax.f32 %v307, 0.0
      %v316 = vlaneseq
      %v317 = vshrl.u32 %v316, 7
      %v318 = vadd.s32 %v317, 8
      %v319 = vadd.s32 %v317, 16
      %v320 = vadd.s32 %v317, 24
      %v321 = vadd.s32 %v317, 32
      %v322 = vadd.s32 %v317, 40
      %v323 = vadd.s32 %v317, 48
      %v324 = vadd.s32 %v317, 56
      %vm325 = vcmp.lt.s32.totalorder %v317, 0
      %v326 = vsub.s32 0, %v317
      %v327 = vsel %vm325, %v326, %v317
      %v328 = vshrl.u32 %v327, 3
      %v329 = vand.u32 %v327, 7
      %v330 = vsub.s32 0, %v329
      %v331 = vsel %vm325, %v330, %v329
      %vm332 = vcmp.lt.s32.totalorder %v318, 0
      %v333 = vsub.s32 0, %v318
      %v334 = vsel %vm332, %v333, %v318
      %v335 = vshrl.u32 %v334, 3
      %v336 = vand.u32 %v334, 7
      %v337 = vsub.s32 0, %v336
      %v338 = vsel %vm332, %v337, %v336
      %vm339 = vcmp.lt.s32.totalorder %v319, 0
      %v340 = vsub.s32 0, %v319
      %v341 = vsel %vm339, %v340, %v319
      %v342 = vshrl.u32 %v341, 3
      %v343 = vand.u32 %v341, 7
      %v344 = vsub.s32 0, %v343
      %v345 = vsel %vm339, %v344, %v343
      %vm346 = vcmp.lt.s32.totalorder %v320, 0
      %v347 = vsub.s32 0, %v320
      %v348 = vsel %vm346, %v347, %v320
      %v349 = vshrl.u32 %v348, 3
      %v350 = vand.u32 %v348, 7
      %v351 = vsub.s32 0, %v350
      %v352 = vsel %vm346, %v351, %v350
      %vm353 = vcmp.lt.s32.totalorder %v321, 0
      %v354 = vsub.s32 0, %v321
      %v355 = vsel %vm353, %v354, %v321
      %v356 = vshrl.u32 %v355, 3
      %v357 = vand.u32 %v355, 7
      %v358 = vsub.s32 0, %v357
      %v359 = vsel %vm353, %v358, %v357
      %vm360 = vcmp.lt.s32.totalorder %v322, 0
      %v361 = vsub.s32 0, %v322
      %v362 = vsel %vm360, %v361, %v322
      %v363 = vshrl.u32 %v362, 3
      %v364 = vand.u32 %v362, 7
      %v365 = vsub.s32 0, %v364
      %v366 = vsel %vm360, %v365, %v364
      %vm367 = vcmp.lt.s32.totalorder %v323, 0
      %v368 = vsub.s32 0, %v323
      %v369 = vsel %vm367, %v368, %v323
      %v370 = vshrl.u32 %v369, 3
      %v371 = vand.u32 %v369, 7
      %v372 = vsub.s32 0, %v371
      %v373 = vsel %vm367, %v372, %v371
      %vm374 = vcmp.lt.s32.totalorder %v324, 0
      %v375 = vsub.s32 0, %v324
      %v376 = vsel %vm374, %v375, %v324
      %v377 = vshrl.u32 %v376, 3
      %v378 = vand.u32 %v376, 7
      %v379 = vsub.s32 0, %v378
      %v380 = vsel %vm374, %v379, %v378
      %vm381 = vcmp.ne.s32.totalorder %v331, 0
      %vm382 = vcmp.ne.s32.totalorder %v338, 0
      %vm383 = vcmp.ne.s32.totalorder %v345, 0
      %vm384 = vcmp.ne.s32.totalorder %v352, 0
      %vm385 = vcmp.ne.s32.totalorder %v359, 0
      %vm386 = vcmp.ne.s32.totalorder %v366, 0
      %vm387 = vcmp.ne.s32.totalorder %v373, 0
      %vm388 = vcmp.ne.s32.totalorder %v380, 0
      %vm389 = vcmp.lt.s32.totalorder %v331, 0
      %vm390 = vcmp.lt.s32.totalorder %v338, 0
      %vm391 = vcmp.lt.s32.totalorder %v345, 0
      %vm392 = vcmp.lt.s32.totalorder %v352, 0
      %vm393 = vcmp.lt.s32.totalorder %v359, 0
      %vm394 = vcmp.lt.s32.totalorder %v366, 0
      %vm395 = vcmp.lt.s32.totalorder %v373, 0
      %vm396 = vcmp.lt.s32.totalorder %v380, 0
      %vm397 = vmand %vm389, %vm381
      %vm398 = vmand %vm390, %vm382
      %vm399 = vmand %vm391, %vm383
      %vm400 = vmand %vm392, %vm384
      %vm401 = vmand %vm393, %vm385
      %vm402 = vmand %vm394, %vm386
      %vm403 = vmand %vm395, %vm387
      %vm404 = vmand %vm396, %vm388
      %v405 = vadd.s32 %v331, 8
      %v406 = vadd.s32 %v338, 8
      %v407 = vadd.s32 %v345, 8
      %v408 = vadd.s32 %v352, 8
      %v409 = vadd.s32 %v359, 8
      %v410 = vadd.s32 %v366, 8
      %v411 = vadd.s32 %v373, 8
      %v412 = vadd.s32 %v380, 8
      %v413 = vsel %vm397, %v405, %v331
      %v414 = vsel %vm398, %v406, %v338
      %v415 = vsel %vm399, %v407, %v345
      %v416 = vsel %vm400, %v408, %v352
      %v417 = vsel %vm401, %v409, %v359
      %v418 = vsel %vm402, %v410, %v366
      %v419 = vsel %vm403, %v411, %v373
      %v420 = vsel %vm404, %v412, %v380
      %s421 = scalar_lea.vmem [#allocation2], 80
      %422 = vst [vmem:[%s421] sm:$0xff] 0.0
      %423 = vst [vmem:[%s421 + $0x8] sm:$0xff] %v308
      %424 = vst [vmem:[%s421 + $0x10] sm:$0xff] %v309
      %425 = vst [vmem:[%s421 + $0x18] sm:$0xff] %v310
      %426 = vst [vmem:[%s421 + $0x20] sm:$0xff] %v311
      %427 = vst [vmem:[%s421 + $0x28] sm:$0xff] %v312
      %428 = vst [vmem:[%s421 + $0x30] sm:$0xff] %v313
      %429 = vst [vmem:[%s421 + $0x38] sm:$0xff] %v314
      %430 = vst [vmem:[%s421 + $0x40] sm:$0xff] %v315
      %431 = vst [vmem:[%s421 + $0x48] sm:$0xff] 0.0
      %432 = vst [vmem:[#allocation2] sm:$0xff] 0.0
      %433 = vst [vmem:[#allocation2 + $0x8] sm:$0x1] 0.0
      %vm434 = vcmp.eq.s32.totalorder %v413, 7
      %vm435 = vcmp.eq.s32.totalorder %v414, 7
      %vm436 = vcmp.eq.s32.totalorder %v415, 7
      %vm437 = vcmp.eq.s32.totalorder %v416, 7
      %vm438 = vcmp.eq.s32.totalorder %v417, 7
      %vm439 = vcmp.eq.s32.totalorder %v418, 7
      %vm440 = vcmp.eq.s32.totalorder %v419, 7
      %vm441 = vcmp.eq.s32.totalorder %v420, 7
      %v442 = vsel %vm434, 1, 0
      %v443 = vsel %vm435, 1, 0
      %v444 = vsel %vm436, 1, 0
      %v445 = vsel %vm437, 1, 0
      %v446 = vsel %vm438, 1, 0
      %v447 = vsel %vm439, 1, 0
      %v448 = vsel %vm440, 1, 0
      %v449 = vsel %vm441, 1, 0
      %vm450 = vcmp.eq.s32.totalorder %v442, 1
      %vm451 = vcmp.eq.s32.totalorder %v443, 1
      %vm452 = vcmp.eq.s32.totalorder %v444, 1
      %vm453 = vcmp.eq.s32.totalorder %v445, 1
      %vm454 = vcmp.eq.s32.totalorder %v446, 1
      %vm455 = vcmp.eq.s32.totalorder %v447, 1
      %vm456 = vcmp.eq.s32.totalorder %v448, 1
      %vm457 = vcmp.eq.s32.totalorder %v449, 1
      %v458 = vsel %vm450, 0.0, %v308
      %v459 = vsel %vm451, 0.0, %v309
      %v460 = vsel %vm452, 0.0, %v310
      %v461 = vsel %vm453, 0.0, %v311
      %v462 = vsel %vm454, 0.0, %v312
      %v463 = vsel %vm455, 0.0, %v313
      %v464 = vsel %vm456, 0.0, %v314
      %v465 = vsel %vm457, 0.0, %v315
      %466 = vst [vmem:[#allocation2 + $0x9] sm:$0xff] %v458
      %467 = vst [vmem:[#allocation2 + $0x11] sm:$0xff] %v459
      %468 = vst [vmem:[#allocation2 + $0x19] sm:$0xff] %v460
      %469 = vst [vmem:[#allocation2 + $0x21] sm:$0xff] %v461
      %470 = vst [vmem:[#allocation2 + $0x29] sm:$0xff] %v462
      %471 = vst [vmem:[#allocation2 + $0x31] sm:$0xff] %v463
      %472 = vst [vmem:[#allocation2 + $0x39] sm:$0xff] %v464
      %473 = vst [vmem:[#allocation2 + $0x41] sm:$0xff] %v465
      %474 = vst [vmem:[#allocation2 + $0x49] sm:$0x7f] 0.0
      %s475 = scalar_lea.vmem [#allocation2], 160
      %476 = vst [vmem:[%s475] sm:$0x7f] 0.0
      %vm477 = vcmp.eq.s32.totalorder %v413, 0
      %vm478 = vcmp.eq.s32.totalorder %v414, 0
      %vm479 = vcmp.eq.s32.totalorder %v415, 0
      %vm480 = vcmp.eq.s32.totalorder %v416, 0
      %vm481 = vcmp.eq.s32.totalorder %v417, 0
      %vm482 = vcmp.eq.s32.totalorder %v418, 0
      %vm483 = vcmp.eq.s32.totalorder %v419, 0
      %vm484 = vcmp.eq.s32.totalorder %v420, 0
      %v485 = vsel %vm477, 1, 0
      %v486 = vsel %vm478, 1, 0
      %v487 = vsel %vm479, 1, 0
      %v488 = vsel %vm480, 1, 0
      %v489 = vsel %vm481, 1, 0
      %v490 = vsel %vm482, 1, 0
      %v491 = vsel %vm483, 1, 0
      %v492 = vsel %vm484, 1, 0
      %vm493 = vcmp.eq.s32.totalorder %v485, 1
      %vm494 = vcmp.eq.s32.totalorder %v486, 1
      %vm495 = vcmp.eq.s32.totalorder %v487, 1
      %vm496 = vcmp.eq.s32.totalorder %v488, 1
      %vm497 = vcmp.eq.s32.totalorder %v489, 1
      %vm498 = vcmp.eq.s32.totalorder %v490, 1
      %vm499 = vcmp.eq.s32.totalorder %v491, 1
      %vm500 = vcmp.eq.s32.totalorder %v492, 1
      %v501 = vsel %vm493, 0.0, %v308
      %v502 = vsel %vm494, 0.0, %v309
      %v503 = vsel %vm495, 0.0, %v310
      %v504 = vsel %vm496, 0.0, %v311
      %v505 = vsel %vm497, 0.0, %v312
      %v506 = vsel %vm498, 0.0, %v313
      %v507 = vsel %vm499, 0.0, %v314
      %v508 = vsel %vm500, 0.0, %v315
      %509 = vst [vmem:[%s475 + $0x7] sm:$0xff] %v501
      %510 = vst [vmem:[%s475 + $0xf] sm:$0xff] %v502
      %511 = vst [vmem:[%s475 + $0x17] sm:$0xff] %v503
      %512 = vst [vmem:[%s475 + $0x1f] sm:$0xff] %v504
      %513 = vst [vmem:[%s475 + $0x27] sm:$0xff] %v505
      %514 = vst [vmem:[%s475 + $0x2f] sm:$0xff] %v506
      %515 = vst [vmem:[%s475 + $0x37] sm:$0xff] %v507
      %516 = vst [vmem:[%s475 + $0x3f] sm:$0xff] %v508
      %517 = vst [vmem:[%s475 + $0x47] sm:$0xff] 0.0
      %518 = vst [vmem:[%s475 + $0x4f] sm:$0x1] 0.0
      %519 = vst [vmem:[#allocation3] sm:$0xff] 0.0
      %520 = vst [vmem:[#allocation3 + $0x8] sm:$0xff] 0.0
      %521 = vst [vmem:[#allocation3 + $0x10] sm:$0xff] 0.0
      %522 = vst [vmem:[#allocation3 + $0x18] sm:$0xff] 0.0
      %523 = vst [vmem:[#allocation3 + $0x20] sm:$0xff] 0.0
      %524 = vst [vmem:[#allocation3 + $0x28] sm:$0xff] 0.0
      %525 = vst [vmem:[#allocation3 + $0x30] sm:$0xff] 0.0
      %526 = vst [vmem:[#allocation3 + $0x38] sm:$0xff] 0.0
      %v527 = vld [vmem:[#allocation2] sm:$0xff]
      %v528 = vld [vmem:[#allocation2 + $0x8] sm:$0xff]
      %v529 = vld [vmem:[#allocation2 + $0x10] sm:$0xff]
      %v530 = vld [vmem:[#allocation2 + $0x18] sm:$0xff]
      %v531 = vld [vmem:[#allocation2 + $0x20] sm:$0xff]
      %v532 = vld [vmem:[#allocation2 + $0x28] sm:$0xff]
      %v533 = vld [vmem:[#allocation2 + $0x30] sm:$0xff]
      %v534 = vld [vmem:[#allocation2 + $0x38] sm:$0xff]
      %v535 = vpack.c.bf16 %v528, %v527
      %v536 = vpack.c.bf16 %v530, %v529
      %v537 = vpack.c.bf16 %v532, %v531
      %v538 = vpack.c.bf16 %v534, %v533
      %v539 = vld [vmem:[#allocation3] sm:$0xff]
      %v540 = vld [vmem:[#allocation3 + $0x8] sm:$0xff]
      %v541 = vld [vmem:[#allocation3 + $0x10] sm:$0xff]
      %v542 = vld [vmem:[#allocation3 + $0x18] sm:$0xff]
      %v543 = vld [vmem:[#allocation3 + $0x20] sm:$0xff]
      %v544 = vld [vmem:[#allocation3 + $0x28] sm:$0xff]
      %v545 = vld [vmem:[#allocation3 + $0x30] sm:$0xff]
      %v546 = vld [vmem:[#allocation3 + $0x38] sm:$0xff]
      %v547 = vld [vmem:[%s3] sm:$0xf]
      %v548 = vld [vmem:[%s3 + $0x4] sm:$0xf]
      %v549 = vld [vmem:[%s3 + $0x8] sm:$0xf]
      %v550 = vld [vmem:[%s3 + $0xc] sm:$0xf]
      %v551 = vld [vmem:[%s3 + $0x10] sm:$0xf]
      %v552 = vld [vmem:[%s3 + $0x14] sm:$0xf]
      %v553 = vld [vmem:[%s3 + $0x18] sm:$0xf]
      %v554 = vld [vmem:[%s3 + $0x1c] sm:$0xf]
      %v555 = vld [vmem:[%s3 + $0x20] sm:$0xf]
      %v556 = vld [vmem:[%s3 + $0x24] sm:$0xf]
      %v557 = vld [vmem:[%s3 + $0x28] sm:$0xf]
      %v558 = vld [vmem:[%s3 + $0x2c] sm:$0xf]
      %v559 = vld [vmem:[%s3 + $0x30] sm:$0xf]
      %v560 = vld [vmem:[%s3 + $0x34] sm:$0xf]
      %v561 = vld [vmem:[%s3 + $0x38] sm:$0xf]
      %v562 = vld [vmem:[%s3 + $0x3c] sm:$0xf]
      %v579 = vunpack.c.l.b16 %v547
      %v580 = vunpack.c.l.b16 %v548
      %v581 = vunpack.c.l.b16 %v549
      %v582 = vunpack.c.l.b16 %v550
      %v583 = vunpack.c.l.b16 %v551
      %v584 = vunpack.c.l.b16 %v552
      %v585 = vunpack.c.l.b16 %v553
      %v586 = vunpack.c.l.b16 %v554
      %v587 = vunpack.c.l.b16 %v555
      %v588 = vunpack.c.l.b16 %v556
      %v589 = vunpack.c.l.b16 %v557
      %v590 = vunpack.c.l.b16 %v558
      %v591 = vunpack.c.l.b16 %v559
      %v592 = vunpack.c.l.b16 %v560
      %v593 = vunpack.c.l.b16 %v561
      %v594 = vunpack.c.l.b16 %v562
      %v595 = vpack.c.b16 %v580, %v579
      %v596 = vpack.c.b16 %v582, %v581
      %v597 = vpack.c.b16 %v584, %v583
      %v598 = vpack.c.b16 %v586, %v585
      %v599 = vpack.c.b16 %v588, %v587
      %v600 = vpack.c.b16 %v590, %v589
      %v601 = vpack.c.b16 %v592, %v591
      %v602 = vpack.c.b16 %v594, %v593
      %611 = vmatprep.subr.bf16.mxu0 0
      %612 = vmatpush1.bf16.msra.mxu0 %v595
      %613 = vmatprep.subr.bf16.mxu0 0
      %614 = vmatpush1.bf16.msra.mxu0 %v596
      %615 = vmatprep.subr.bf16.mxu0 0
      %616 = vmatpush1.bf16.msra.mxu0 %v597
      %617 = vmatprep.subr.bf16.mxu0 0
      %618 = vmatpush1.bf16.msra.mxu0 %v598
      %619 = vmatprep.subr.bf16.mxu0 0
      %620 = vmatpush1.bf16.msra.mxu0 %v599
      %621 = vmatprep.subr.bf16.mxu0 0
      %622 = vmatpush1.bf16.msra.mxu0 %v600
      %623 = vmatprep.subr.bf16.mxu0 0
      %624 = vmatpush1.bf16.msra.mxu0 %v601
      %625 = vmatprep.subr.bf16.mxu0 0
      %626 = vmatpush1.bf16.msra.mxu0 %v602
      %627 = vmatprep.subr.bf16.mxu0 0
      %628 = vmatpush1.bf16.msra.mxu0 0
      %629 = vmatprep.subr.bf16.mxu0 0
      %630 = vmatpush1.bf16.msra.mxu0 0
      %631 = vmatprep.subr.bf16.mxu0 0
      %632 = vmatpush1.bf16.msra.mxu0 0
      %633 = vmatprep.subr.bf16.mxu0 0
      %634 = vmatpush1.bf16.msra.mxu0 0
      %635 = vmatprep.subr.bf16.mxu0 0
      %636 = vmatpush1.bf16.msra.mxu0 0
      %637 = vmatprep.subr.bf16.mxu0 0
      %638 = vmatpush1.bf16.msra.mxu0 0
      %639 = vmatprep.subr.bf16.mxu0 0
      %640 = vmatpush1.bf16.msra.mxu0 0
      %641 = vmatprep.subr.bf16.mxu0 0
      %642 = vmatpush1.bf16.msra.mxu0 0
      %643 = vmatprep.mubr.bf16.mxu0 0
      %644 = vmatmul.mubr.bf16.gmra.mrb[0].mxu0 %v535
      %v645 = vpop.f32.mrb[0].mxu0
      %v646 = vadd.f32 0.0, %v645
      %v647 = vpop.f32.mrb[0].mxu0
      %v648 = vpop.f32.mrb[0].mxu0
      %v649 = vadd.f32 0.0, %v648
      %v650 = vpop.f32.mrb[0].mxu0
      %651 = vmatprep.mubr.bf16.mxu0 0
      %652 = vmatmul.mubr.bf16.gmra.mrb[0].mxu0 %v536
      %v653 = vpop.f32.mrb[0].mxu0
      %v654 = vadd.f32 0.0, %v653
      %v655 = vpop.f32.mrb[0].mxu0
      %v656 = vpop.f32.mrb[0].mxu0
      %v657 = vadd.f32 0.0, %v656
      %v658 = vpop.f32.mrb[0].mxu0
      %659 = vmatprep.mubr.bf16.mxu0 0
      %660 = vmatmul.mubr.bf16.gmra.mrb[0].mxu0 %v537
      %v661 = vpop.f32.mrb[0].mxu0
      %v662 = vadd.f32 0.0, %v661
      %v663 = vpop.f32.mrb[0].mxu0
      %v664 = vpop.f32.mrb[0].mxu0
      %v665 = vadd.f32 0.0, %v664
      %v666 = vpop.f32.mrb[0].mxu0
      %667 = vmatprep.mubr.bf16.mxu0 0
      %668 = vmatmul.mubr.bf16.gmra.mrb[0].mxu0 %v538
      %v669 = vpop.f32.mrb[0].mxu0
      %v670 = vadd.f32 0.0, %v669
      %v671 = vpop.f32.mrb[0].mxu0
      %v672 = vpop.f32.mrb[0].mxu0
      %v673 = vadd.f32 0.0, %v672
      %v674 = vpop.f32.mrb[0].mxu0
      %675 = vdwg.mxu0
      %v676 = vadd.f32 %v539, %v646
      %v677 = vadd.f32 %v540, %v649
      %v678 = vadd.f32 %v541, %v654
      %v679 = vadd.f32 %v542, %v657
      %v680 = vadd.f32 %v543, %v662
      %v681 = vadd.f32 %v544, %v665
      %v682 = vadd.f32 %v545, %v670
      %v683 = vadd.f32 %v546, %v673
      %684 = vst [vmem:[#allocation3] sm:$0xff] %v676
      %685 = vst [vmem:[#allocation3 + $0x8] sm:$0xff] %v677
      %686 = vst [vmem:[#allocation3 + $0x10] sm:$0xff] %v678
      %687 = vst [vmem:[#allocation3 + $0x18] sm:$0xff] %v679
      %688 = vst [vmem:[#allocation3 + $0x20] sm:$0xff] %v680
      %689 = vst [vmem:[#allocation3 + $0x28] sm:$0xff] %v681
      %690 = vst [vmem:[#allocation3 + $0x30] sm:$0xff] %v682
      %691 = vst [vmem:[#allocation3 + $0x38] sm:$0xff] %v683
      %v692 = vld [vmem:[%s421] sm:$0xff]
      %v693 = vld [vmem:[%s421 + $0x8] sm:$0xff]
      %v694 = vld [vmem:[%s421 + $0x10] sm:$0xff]
      %v695 = vld [vmem:[%s421 + $0x18] sm:$0xff]
      %v696 = vld [vmem:[%s421 + $0x20] sm:$0xff]
      %v697 = vld [vmem:[%s421 + $0x28] sm:$0xff]
      %v698 = vld [vmem:[%s421 + $0x30] sm:$0xff]
      %v699 = vld [vmem:[%s421 + $0x38] sm:$0xff]
      %v700 = vpack.c.bf16 %v693, %v692
      %v701 = vpack.c.bf16 %v695, %v694
      %v702 = vpack.c.bf16 %v697, %v696
      %v703 = vpack.c.bf16 %v699, %v698
      %v704 = vld [vmem:[#allocation3] sm:$0xff]
      %v705 = vld [vmem:[#allocation3 + $0x8] sm:$0xff]
      %v706 = vld [vmem:[#allocation3 + $0x10] sm:$0xff]
      %v707 = vld [vmem:[#allocation3 + $0x18] sm:$0xff]
      %v708 = vld [vmem:[#allocation3 + $0x20] sm:$0xff]
      %v709 = vld [vmem:[#allocation3 + $0x28] sm:$0xff]
      %v710 = vld [vmem:[#allocation3 + $0x30] sm:$0xff]
      %v711 = vld [vmem:[#allocation3 + $0x38] sm:$0xff]
      %s712 = scalar_lea.vmem %s3, 64
      %v713 = vld [vmem:[%s712] sm:$0xf]
      %v714 = vld [vmem:[%s712 + $0x4] sm:$0xf]
      %v715 = vld [vmem:[%s712 + $0x8] sm:$0xf]
      %v716 = vld [vmem:[%s712 + $0xc] sm:$0xf]
      %v717 = vld [vmem:[%s712 + $0x10] sm:$0xf]
      %v718 = vld [vmem:[%s712 + $0x14] sm:$0xf]
      %v719 = vld [vmem:[%s712 + $0x18] sm:$0xf]
      %v720 = vld [vmem:[%s712 + $0x1c] sm:$0xf]
      %v721 = vld [vmem:[%s712 + $0x20] sm:$0xf]
      %v722 = vld [vmem:[%s712 + $0x24] sm:$0xf]
      %v723 = vld [vmem:[%s712 + $0x28] sm:$0xf]
      %v724 = vld [vmem:[%s712 + $0x2c] sm:$0xf]
      %v725 = vld [vmem:[%s712 + $0x30] sm:$0xf]
      %v726 = vld [vmem:[%s712 + $0x34] sm:$0xf]
      %v727 = vld [vmem:[%s712 + $0x38] sm:$0xf]
      %v728 = vld [vmem:[%s712 + $0x3c] sm:$0xf]
      %v745 = vunpack.c.l.b16 %v713
      %v746 = vunpack.c.l.b16 %v714
      %v747 = vunpack.c.l.b16 %v715
      %v748 = vunpack.c.l.b16 %v716
      %v749 = vunpack.c.l.b16 %v717
      %v750 = vunpack.c.l.b16 %v718
      %v751 = vunpack.c.l.b16 %v719
      %v752 = vunpack.c.l.b16 %v720
      %v753 = vunpack.c.l.b16 %v721
      %v754 = vunpack.c.l.b16 %v722
      %v755 = vunpack.c.l.b16 %v723
      %v756 = vunpack.c.l.b16 %v724
      %v757 = vunpack.c.l.b16 %v725
      %v758 = vunpack.c.l.b16 %v726
      %v759 = vunpack.c.l.b16 %v727
      %v760 = vunpack.c.l.b16 %v728
      %v761 = vpack.c.b16 %v746, %v745
      %v762 = vpack.c.b16 %v748, %v747
      %v763 = vpack.c.b16 %v750, %v749
      %v764 = vpack.c.b16 %v752, %v751
      %v765 = vpack.c.b16 %v754, %v753
      %v766 = vpack.c.b16 %v756, %v755
      %v767 = vpack.c.b16 %v758, %v757
      %v768 = vpack.c.b16 %v760, %v759
      %777 = vmatprep.subr.bf16.mxu0 0
      %778 = vmatpush1.bf16.msra.mxu0 %v761
      %779 = vmatprep.subr.bf16.mxu0 0
      %780 = vmatpush1.bf16.msra.mxu0 %v762
      %781 = vmatprep.subr.bf16.mxu0 0
      %782 = vmatpush1.bf16.msra.mxu0 %v763
      %783 = vmatprep.subr.bf16.mxu0 0
      %784 = vmatpush1.bf16.msra.mxu0 %v764
      %785 = vmatprep.subr.bf16.mxu0 0
      %786 = vmatpush1.bf16.msra.mxu0 %v765
      %787 = vmatprep.subr.bf16.mxu0 0
      %788 = vmatpush1.bf16.msra.mxu0 %v766
      %789 = vmatprep.subr.bf16.mxu0 0
      %790 = vmatpush1.bf16.msra.mxu0 %v767
      %791 = vmatprep.subr.bf16.mxu0 0
      %792 = vmatpush1.bf16.msra.mxu0 %v768
      %793 = vmatprep.subr.bf16.mxu0 0
      %794 = vmatpush1.bf16.msra.mxu0 0
      %795 = vmatprep.subr.bf16.mxu0 0
      %796 = vmatpush1.bf16.msra.mxu0 0
      %797 = vmatprep.subr.bf16.mxu0 0
      %798 = vmatpush1.bf16.msra.mxu0 0
      %799 = vmatprep.subr.bf16.mxu0 0
      %800 = vmatpush1.bf16.msra.mxu0 0
      %801 = vmatprep.subr.bf16.mxu0 0
      %802 = vmatpush1.bf16.msra.mxu0 0
      %803 = vmatprep.subr.bf16.mxu0 0
      %804 = vmatpush1.bf16.msra.mxu0 0
      %805 = vmatprep.subr.bf16.mxu0 0
      %806 = vmatpush1.bf16.msra.mxu0 0
      %807 = vmatprep.subr.bf16.mxu0 0
      %808 = vmatpush1.bf16.msra.mxu0 0
      %809 = vmatprep.mubr.bf16.mxu0 0
      %810 = vmatmul.mubr.bf16.gmra.mrb[0].mxu0 %v700
      %v811 = vpop.f32.mrb[0].mxu0
      %v812 = vadd.f32 0.0, %v811
      %v813 = vpop.f32.mrb[0].mxu0
      %v814 = vpop.f32.mrb[0].mxu0
      %v815 = vadd.f32 0.0, %v814
      %v816 = vpop.f32.mrb[0].mxu0
      %817 = vmatprep.mubr.bf16.mxu0 0
      %818 = vmatmul.mubr.bf16.gmra.mrb[0].mxu0 %v701
      %v819 = vpop.f32.mrb[0].mxu0
      %v820 = vadd.f32 0.0, %v819
      %v821 = vpop.f32.mrb[0].mxu0
      %v822 = vpop.f32.mrb[0].mxu0
      %v823 = vadd.f32 0.0, %v822
      %v824 = vpop.f32.mrb[0].mxu0
      %825 = vmatprep.mubr.bf16.mxu0 0
      %826 = vmatmul.mubr.bf16.gmra.mrb[0].mxu0 %v702
      %v827 = vpop.f32.mrb[0].mxu0
      %v828 = vadd.f32 0.0, %v827
      %v829 = vpop.f32.mrb[0].mxu0
      %v830 = vpop.f32.mrb[0].mxu0
      %v831 = vadd.f32 0.0, %v830
      %v832 = vpop.f32.mrb[0].mxu0
      %833 = vmatprep.mubr.bf16.mxu0 0
      %834 = vmatmul.mubr.bf16.gmra.mrb[0].mxu0 %v703
      %v835 = vpop.f32.mrb[0].mxu0
      %v836 = vadd.f32 0.0, %v835
      %v837 = vpop.f32.mrb[0].mxu0
      %v838 = vpop.f32.mrb[0].mxu0
      %v839 = vadd.f32 0.0, %v838
      %v840 = vpop.f32.mrb[0].mxu0
      %841 = vdwg.mxu0
      %v842 = vadd.f32 %v704, %v812
      %v843 = vadd.f32 %v705, %v815
      %v844 = vadd.f32 %v706, %v820
      %v845 = vadd.f32 %v707, %v823
      %v846 = vadd.f32 %v708, %v828
      %v847 = vadd.f32 %v709, %v831
      %v848 = vadd.f32 %v710, %v836
      %v849 = vadd.f32 %v711, %v839
      %850 = vst [vmem:[#allocation3] sm:$0xff] %v842
      %851 = vst [vmem:[#allocation3 + $0x8] sm:$0xff] %v843
      %852 = vst [vmem:[#allocation3 + $0x10] sm:$0xff] %v844
      %853 = vst [vmem:[#allocation3 + $0x18] sm:$0xff] %v845
      %854 = vst [vmem:[#allocation3 + $0x20] sm:$0xff] %v846
      %855 = vst [vmem:[#allocation3 + $0x28] sm:$0xff] %v847
      %856 = vst [vmem:[#allocation3 + $0x30] sm:$0xff] %v848
      %857 = vst [vmem:[#allocation3 + $0x38] sm:$0xff] %v849
      %v858 = vld [vmem:[%s475] sm:$0xff]
      %v859 = vld [vmem:[%s475 + $0x8] sm:$0xff]
      %v860 = vld [vmem:[%s475 + $0x10] sm:$0xff]
      %v861 = vld [vmem:[%s475 + $0x18] sm:$0xff]
      %v862 = vld [vmem:[%s475 + $0x20] sm:$0xff]
      %v863 = vld [vmem:[%s475 + $0x28] sm:$0xff]
      %v864 = vld [vmem:[%s475 + $0x30] sm:$0xff]
      %v865 = vld [vmem:[%s475 + $0x38] sm:$0xff]
      %v866 = vpack.c.bf16 %v859, %v858
      %v867 = vpack.c.bf16 %v861, %v860
      %v868 = vpack.c.bf16 %v863, %v862
      %v869 = vpack.c.bf16 %v865, %v864
      %v870 = vld [vmem:[#allocation3] sm:$0xff]
      %v871 = vld [vmem:[#allocation3 + $0x8] sm:$0xff]
      %v872 = vld [vmem:[#allocation3 + $0x10] sm:$0xff]
      %v873 = vld [vmem:[#allocation3 + $0x18] sm:$0xff]
      %v874 = vld [vmem:[#allocation3 + $0x20] sm:$0xff]
      %v875 = vld [vmem:[#allocation3 + $0x28] sm:$0xff]
      %v876 = vld [vmem:[#allocation3 + $0x30] sm:$0xff]
      %v877 = vld [vmem:[#allocation3 + $0x38] sm:$0xff]
      %s878 = scalar_lea.vmem %s3, 128
      %v879 = vld [vmem:[%s878] sm:$0xf]
      %v880 = vld [vmem:[%s878 + $0x4] sm:$0xf]
      %v881 = vld [vmem:[%s878 + $0x8] sm:$0xf]
      %v882 = vld [vmem:[%s878 + $0xc] sm:$0xf]
      %v883 = vld [vmem:[%s878 + $0x10] sm:$0xf]
      %v884 = vld [vmem:[%s878 + $0x14] sm:$0xf]
      %v885 = vld [vmem:[%s878 + $0x18] sm:$0xf]
      %v886 = vld [vmem:[%s878 + $0x1c] sm:$0xf]
      %v887 = vld [vmem:[%s878 + $0x20] sm:$0xf]
      %v888 = vld [vmem:[%s878 + $0x24] sm:$0xf]
      %v889 = vld [vmem:[%s878 + $0x28] sm:$0xf]
      %v890 = vld [vmem:[%s878 + $0x2c] sm:$0xf]
      %v891 = vld [vmem:[%s878 + $0x30] sm:$0xf]
      %v892 = vld [vmem:[%s878 + $0x34] sm:$0xf]
      %v893 = vld [vmem:[%s878 + $0x38] sm:$0xf]
      %v894 = vld [vmem:[%s878 + $0x3c] sm:$0xf]
      %v911 = vunpack.c.l.b16 %v879
      %v912 = vunpack.c.l.b16 %v880
      %v913 = vunpack.c.l.b16 %v881
      %v914 = vunpack.c.l.b16 %v882
      %v915 = vunpack.c.l.b16 %v883
      %v916 = vunpack.c.l.b16 %v884
      %v917 = vunpack.c.l.b16 %v885
      %v918 = vunpack.c.l.b16 %v886
      %v919 = vunpack.c.l.b16 %v887
      %v920 = vunpack.c.l.b16 %v888
      %v921 = vunpack.c.l.b16 %v889
      %v922 = vunpack.c.l.b16 %v890
      %v923 = vunpack.c.l.b16 %v891
      %v924 = vunpack.c.l.b16 %v892
      %v925 = vunpack.c.l.b16 %v893
      %v926 = vunpack.c.l.b16 %v894
      %v927 = vpack.c.b16 %v912, %v911
      %v928 = vpack.c.b16 %v914, %v913
      %v929 = vpack.c.b16 %v916, %v915
      %v930 = vpack.c.b16 %v918, %v917
      %v931 = vpack.c.b16 %v920, %v919
      %v932 = vpack.c.b16 %v922, %v921
      %v933 = vpack.c.b16 %v924, %v923
      %v934 = vpack.c.b16 %v926, %v925
      %943 = vmatprep.subr.bf16.mxu0 0
      %944 = vmatpush1.bf16.msra.mxu0 %v927
      %945 = vmatprep.subr.bf16.mxu0 0
      %946 = vmatpush1.bf16.msra.mxu0 %v928
      %947 = vmatprep.subr.bf16.mxu0 0
      %948 = vmatpush1.bf16.msra.mxu0 %v929
      %949 = vmatprep.subr.bf16.mxu0 0
      %950 = vmatpush1.bf16.msra.mxu0 %v930
      %951 = vmatprep.subr.bf16.mxu0 0
      %952 = vmatpush1.bf16.msra.mxu0 %v931
      %953 = vmatprep.subr.bf16.mxu0 0
      %954 = vmatpush1.bf16.msra.mxu0 %v932
      %955 = vmatprep.subr.bf16.mxu0 0
      %956 = vmatpush1.bf16.msra.mxu0 %v933
      %957 = vmatprep.subr.bf16.mxu0 0
      %958 = vmatpush1.bf16.msra.mxu0 %v934
      %959 = vmatprep.subr.bf16.mxu0 0
      %960 = vmatpush1.bf16.msra.mxu0 0
      %961 = vmatprep.subr.bf16.mxu0 0
      %962 = vmatpush1.bf16.msra.mxu0 0
      %963 = vmatprep.subr.bf16.mxu0 0
      %964 = vmatpush1.bf16.msra.mxu0 0
      %965 = vmatprep.subr.bf16.mxu0 0
      %966 = vmatpush1.bf16.msra.mxu0 0
      %967 = vmatprep.subr.bf16.mxu0 0
      %968 = vmatpush1.bf16.msra.mxu0 0
      %969 = vmatprep.subr.bf16.mxu0 0
      %970 = vmatpush1.bf16.msra.mxu0 0
      %971 = vmatprep.subr.bf16.mxu0 0
      %972 = vmatpush1.bf16.msra.mxu0 0
      %973 = vmatprep.subr.bf16.mxu0 0
      %974 = vmatpush1.bf16.msra.mxu0 0
      %975 = vmatprep.mubr.bf16.mxu0 0
      %976 = vmatmul.mubr.bf16.gmra.mrb[0].mxu0 %v866
      %v977 = vpop.f32.mrb[0].mxu0
      %v978 = vadd.f32 0.0, %v977
      %v979 = vpop.f32.mrb[0].mxu0
      %v980 = vpop.f32.mrb[0].mxu0
      %v981 = vadd.f32 0.0, %v980
      %v982 = vpop.f32.mrb[0].mxu0
      %983 = vmatprep.mubr.bf16.mxu0 0
      %984 = vmatmul.mubr.bf16.gmra.mrb[0].mxu0 %v867
      %v985 = vpop.f32.mrb[0].mxu0
      %v986 = vadd.f32 0.0, %v985
      %v987 = vpop.f32.mrb[0].mxu0
      %v988 = vpop.f32.mrb[0].mxu0
      %v989 = vadd.f32 0.0, %v988
      %v990 = vpop.f32.mrb[0].mxu0
      %991 = vmatprep.mubr.bf16.mxu0 0
      %992 = vmatmul.mubr.bf16.gmra.mrb[0].mxu0 %v868
      %v993 = vpop.f32.mrb[0].mxu0
      %v994 = vadd.f32 0.0, %v993
      %v995 = vpop.f32.mrb[0].mxu0
      %v996 = vpop.f32.mrb[0].mxu0
      %v997 = vadd.f32 0.0, %v996
      %v998 = vpop.f32.mrb[0].mxu0
      %999 = vmatprep.mubr.bf16.mxu0 0
      %1000 = vmatmul.mubr.bf16.gmra.mrb[0].mxu0 %v869
      %v1001 = vpop.f32.mrb[0].mxu0
      %v1002 = vadd.f32 0.0, %v1001
      %v1003 = vpop.f32.mrb[0].mxu0
      %v1004 = vpop.f32.mrb[0].mxu0
      %v1005 = vadd.f32 0.0, %v1004
      %v1006 = vpop.f32.mrb[0].mxu0
      %1007 = vdwg.mxu0
      %v1008 = vadd.f32 %v870, %v978
      %v1009 = vadd.f32 %v871, %v981
      %v1010 = vadd.f32 %v872, %v986
      %v1011 = vadd.f32 %v873, %v989
      %v1012 = vadd.f32 %v874, %v994
      %v1013 = vadd.f32 %v875, %v997
      %v1014 = vadd.f32 %v876, %v1002
      %v1015 = vadd.f32 %v877, %v1005
      %1016 = vst [vmem:[#allocation3] sm:$0xff] %v1008
      %1017 = vst [vmem:[#allocation3 + $0x8] sm:$0xff] %v1009
      %1018 = vst [vmem:[#allocation3 + $0x10] sm:$0xff] %v1010
      %1019 = vst [vmem:[#allocation3 + $0x18] sm:$0xff] %v1011
      %1020 = vst [vmem:[#allocation3 + $0x20] sm:$0xff] %v1012
      %1021 = vst [vmem:[#allocation3 + $0x28] sm:$0xff] %v1013
      %1022 = vst [vmem:[#allocation3 + $0x30] sm:$0xff] %v1014
      %1023 = vst [vmem:[#allocation3 + $0x38] sm:$0xff] %v1015
      %v1024 = vld [vmem:[#allocation2 + $0x8] sm:$0xff]
      %v1025 = vld [vmem:[#allocation2 + $0x10] sm:$0xff]
      %v1026 = vld [vmem:[#allocation2 + $0x18] sm:$0xff]
      %v1027 = vld [vmem:[#allocation2 + $0x20] sm:$0xff]
      %v1028 = vld [vmem:[#allocation2 + $0x28] sm:$0xff]
      %v1029 = vld [vmem:[#allocation2 + $0x30] sm:$0xff]
      %v1030 = vld [vmem:[#allocation2 + $0x38] sm:$0xff]
      %v1031 = vld [vmem:[#allocation2 + $0x40] sm:$0xff]
      %v1032 = vpack.c.bf16 %v1025, %v1024
      %v1033 = vpack.c.bf16 %v1027, %v1026
      %v1034 = vpack.c.bf16 %v1029, %v1028
      %v1035 = vpack.c.bf16 %v1031, %v1030
      %v1036 = vld [vmem:[#allocation3] sm:$0xff]
      %v1037 = vld [vmem:[#allocation3 + $0x8] sm:$0xff]
      %v1038 = vld [vmem:[#allocation3 + $0x10] sm:$0xff]
      %v1039 = vld [vmem:[#allocation3 + $0x18] sm:$0xff]
      %v1040 = vld [vmem:[#allocation3 + $0x20] sm:$0xff]
      %v1041 = vld [vmem:[#allocation3 + $0x28] sm:$0xff]
      %v1042 = vld [vmem:[#allocation3 + $0x30] sm:$0xff]
      %v1043 = vld [vmem:[#allocation3 + $0x38] sm:$0xff]
      %s1044 = scalar_lea.vmem %s3, 192
      %v1045 = vld [vmem:[%s1044] sm:$0xf]
      %v1046 = vld [vmem:[%s1044 + $0x4] sm:$0xf]
      %v1047 = vld [vmem:[%s1044 + $0x8] sm:$0xf]
      %v1048 = vld [vmem:[%s1044 + $0xc] sm:$0xf]
      %v1049 = vld [vmem:[%s1044 + $0x10] sm:$0xf]
      %v1050 = vld [vmem:[%s1044 + $0x14] sm:$0xf]
      %v1051 = vld [vmem:[%s1044 + $0x18] sm:$0xf]
      %v1052 = vld [vmem:[%s1044 + $0x1c] sm:$0xf]
      %v1053 = vld [vmem:[%s1044 + $0x20] sm:$0xf]
      %v1054 = vld [vmem:[%s1044 + $0x24] sm:$0xf]
      %v1055 = vld [vmem:[%s1044 + $0x28] sm:$0xf]
      %v1056 = vld [vmem:[%s1044 + $0x2c] sm:$0xf]
      %v1057 = vld [vmem:[%s1044 + $0x30] sm:$0xf]
      %v1058 = vld [vmem:[%s1044 + $0x34] sm:$0xf]
      %v1059 = vld [vmem:[%s1044 + $0x38] sm:$0xf]
      %v1060 = vld [vmem:[%s1044 + $0x3c] sm:$0xf]
      %v1077 = vunpack.c.l.b16 %v1045
      %v1078 = vunpack.c.l.b16 %v1046
      %v1079 = vunpack.c.l.b16 %v1047
      %v1080 = vunpack.c.l.b16 %v1048
      %v1081 = vunpack.c.l.b16 %v1049
      %v1082 = vunpack.c.l.b16 %v1050
      %v1083 = vunpack.c.l.b16 %v1051
      %v1084 = vunpack.c.l.b16 %v1052
      %v1085 = vunpack.c.l.b16 %v1053
      %v1086 = vunpack.c.l.b16 %v1054
      %v1087 = vunpack.c.l.b16 %v1055
      %v1088 = vunpack.c.l.b16 %v1056
      %v1089 = vunpack.c.l.b16 %v1057
      %v1090 = vunpack.c.l.b16 %v1058
      %v1091 = vunpack.c.l.b16 %v1059
      %v1092 = vunpack.c.l.b16 %v1060
      %v1093 = vpack.c.b16 %v1078, %v1077
      %v1094 = vpack.c.b16 %v1080, %v1079
      %v1095 = vpack.c.b16 %v1082, %v1081
      %v1096 = vpack.c.b16 %v1084, %v1083
      %v1097 = vpack.c.b16 %v1086, %v1085
      %v1098 = vpack.c.b16 %v1088, %v1087
      %v1099 = vpack.c.b16 %v1090, %v1089
      %v1100 = vpack.c.b16 %v1092, %v1091
      %1109 = vmatprep.subr.bf16.mxu0 0
      %1110 = vmatpush1.bf16.msra.mxu0 %v1093
      %1111 = vmatprep.subr.bf16.mxu0 0
      %1112 = vmatpush1.bf16.msra.mxu0 %v1094
      %1113 = vmatprep.subr.bf16.mxu0 0
      %1114 = vmatpush1.bf16.msra.mxu0 %v1095
      %1115 = vmatprep.subr.bf16.mxu0 0
      %1116 = vmatpush1.bf16.msra.mxu0 %v1096
      %1117 = vmatprep.subr.bf16.mxu0 0
      %1118 = vmatpush1.bf16.msra.mxu0 %v1097
      %1119 = vmatprep.subr.bf16.mxu0 0
      %1120 = vmatpush1.bf16.msra.mxu0 %v1098
      %1121 = vmatprep.subr.bf16.mxu0 0
      %1122 = vmatpush1.bf16.msra.mxu0 %v1099
      %1123 = vmatprep.subr.bf16.mxu0 0
      %1124 = vmatpush1.bf16.msra.mxu0 %v1100
      %1125 = vmatprep.subr.bf16.mxu0 0
      %1126 = vmatpush1.bf16.msra.mxu0 0
      %1127 = vmatprep.subr.bf16.mxu0 0
      %1128 = vmatpush1.bf16.msra.mxu0 0
      %1129 = vmatprep.subr.bf16.mxu0 0
      %1130 = vmatpush1.bf16.msra.mxu0 0
      %1131 = vmatprep.subr.bf16.mxu0 0
      %1132 = vmatpush1.bf16.msra.mxu0 0
      %1133 = vmatprep.subr.bf16.mxu0 0
      %1134 = vmatpush1.bf16.msra.mxu0 0
      %1135 = vmatprep.subr.bf16.mxu0 0
      %1136 = vmatpush1.bf16.msra.mxu0 0
      %1137 = vmatprep.subr.bf16.mxu0 0
      %1138 = vmatpush1.bf16.msra.mxu0 0
      %1139 = vmatprep.subr.bf16.mxu0 0
      %1140 = vmatpush1.bf16.msra.mxu0 0
      %1141 = vmatprep.mubr.bf16.mxu0 0
      %1142 = vmatmul.mubr.bf16.gmra.mrb[0].mxu0 %v1032
      %v1143 = vpop.f32.mrb[0].mxu0
      %v1144 = vadd.f32 0.0, %v1143
      %v1145 = vpop.f32.mrb[0].mxu0
      %v1146 = vpop.f32.mrb[0].mxu0
      %v1147 = vadd.f32 0.0, %v1146
      %v1148 = vpop.f32.mrb[0].mxu0
      %1149 = vmatprep.mubr.bf16.mxu0 0
      %1150 = vmatmul.mubr.bf16.gmra.mrb[0].mxu0 %v1033
      %v1151 = vpop.f32.mrb[0].mxu0
      %v1152 = vadd.f32 0.0, %v1151
      %v1153 = vpop.f32.mrb[0].mxu0
      %v1154 = vpop.f32.mrb[0].mxu0
      %v1155 = vadd.f32 0.0, %v1154
      %v1156 = vpop.f32.mrb[0].mxu0
      %1157 = vmatprep.mubr.bf16.mxu0 0
      %1158 = vmatmul.mubr.bf16.gmra.mrb[0].mxu0 %v1034
      %v1159 = vpop.f32.mrb[0].mxu0
      %v1160 = vadd.f32 0.0, %v1159
      %v1161 = vpop.f32.mrb[0].mxu0
      %v1162 = vpop.f32.mrb[0].mxu0
      %v1163 = vadd.f32 0.0, %v1162
      %v1164 = vpop.f32.mrb[0].mxu0
      %1165 = vmatprep.mubr.bf16.mxu0 0
      %1166 = vmatmul.mubr.bf16.gmra.mrb[0].mxu0 %v1035
      %v1167 = vpop.f32.mrb[0].mxu0
      %v1168 = vadd.f32 0.0, %v1167
      %v1169 = vpop.f32.mrb[0].mxu0
      %v1170 = vpop.f32.mrb[0].mxu0
      %v1171 = vadd.f32 0.0, %v1170
      %v1172 = vpop.f32.mrb[0].mxu0
      %1173 = vdwg.mxu0
      %v1174 = vadd.f32 %v1036, %v1144
      %v1175 = vadd.f32 %v1037, %v1147
      %v1176 = vadd.f32 %v1038, %v1152
      %v1177 = vadd.f32 %v1039, %v1155
      %v1178 = vadd.f32 %v1040, %v1160
      %v1179 = vadd.f32 %v1041, %v1163
      %v1180 = vadd.f32 %v1042, %v1168
      %v1181 = vadd.f32 %v1043, %v1171
      %1182 = vst [vmem:[#allocation3] sm:$0xff] %v1174
      %1183 = vst [vmem:[#allocation3 + $0x8] sm:$0xff] %v1175
      %1184 = vst [vmem:[#allocation3 + $0x10] sm:$0xff] %v1176
      %1185 = vst [vmem:[#allocation3 + $0x18] sm:$0xff] %v1177
      %1186 = vst [vmem:[#allocation3 + $0x20] sm:$0xff] %v1178
      %1187 = vst [vmem:[#allocation3 + $0x28] sm:$0xff] %v1179
      %1188 = vst [vmem:[#allocation3 + $0x30] sm:$0xff] %v1180
      %1189 = vst [vmem:[#allocation3 + $0x38] sm:$0xff] %v1181
      %v1190 = vld [vmem:[%s421 + $0x8] sm:$0xff]
      %v1191 = vld [vmem:[%s421 + $0x10] sm:$0xff]
      %v1192 = vld [vmem:[%s421 + $0x18] sm:$0xff]
      %v1193 = vld [vmem:[%s421 + $0x20] sm:$0xff]
      %v1194 = vld [vmem:[%s421 + $0x28] sm:$0xff]
      %v1195 = vld [vmem:[%s421 + $0x30] sm:$0xff]
      %v1196 = vld [vmem:[%s421 + $0x38] sm:$0xff]
      %v1197 = vld [vmem:[%s421 + $0x40] sm:$0xff]
      %v1198 = vpack.c.bf16 %v1191, %v1190
      %v1199 = vpack.c.bf16 %v1193, %v1192
      %v1200 = vpack.c.bf16 %v1195, %v1194
      %v1201 = vpack.c.bf16 %v1197, %v1196
      %v1202 = vld [vmem:[#allocation3] sm:$0xff]
      %v1203 = vld [vmem:[#allocation3 + $0x8] sm:$0xff]
      %v1204 = vld [vmem:[#allocation3 + $0x10] sm:$0xff]
      %v1205 = vld [vmem:[#allocation3 + $0x18] sm:$0xff]
      %v1206 = vld [vmem:[#allocation3 + $0x20] sm:$0xff]
      %v1207 = vld [vmem:[#allocation3 + $0x28] sm:$0xff]
      %v1208 = vld [vmem:[#allocation3 + $0x30] sm:$0xff]
      %v1209 = vld [vmem:[#allocation3 + $0x38] sm:$0xff]
      %s1210 = scalar_lea.vmem %s3, 256
      %v1211 = vld [vmem:[%s1210] sm:$0xf]
      %v1212 = vld [vmem:[%s1210 + $0x4] sm:$0xf]
      %v1213 = vld [vmem:[%s1210 + $0x8] sm:$0xf]
      %v1214 = vld [vmem:[%s1210 + $0xc] sm:$0xf]
      %v1215 = vld [vmem:[%s1210 + $0x10] sm:$0xf]
      %v1216 = vld [vmem:[%s1210 + $0x14] sm:$0xf]
      %v1217 = vld [vmem:[%s1210 + $0x18] sm:$0xf]
      %v1218 = vld [vmem:[%s1210 + $0x1c] sm:$0xf]
      %v1219 = vld [vmem:[%s1210 + $0x20] sm:$0xf]
      %v1220 = vld [vmem:[%s1210 + $0x24] sm:$0xf]
      %v1221 = vld [vmem:[%s1210 + $0x28] sm:$0xf]
      %v1222 = vld [vmem:[%s1210 + $0x2c] sm:$0xf]
      %v1223 = vld [vmem:[%s1210 + $0x30] sm:$0xf]
      %v1224 = vld [vmem:[%s1210 + $0x34] sm:$0xf]
      %v1225 = vld [vmem:[%s1210 + $0x38] sm:$0xf]
      %v1226 = vld [vmem:[%s1210 + $0x3c] sm:$0xf]
      %v1243 = vunpack.c.l.b16 %v1211
      %v1244 = vunpack.c.l.b16 %v1212
      %v1245 = vunpack.c.l.b16 %v1213
      %v1246 = vunpack.c.l.b16 %v1214
      %v1247 = vunpack.c.l.b16 %v1215
      %v1248 = vunpack.c.l.b16 %v1216
      %v1249 = vunpack.c.l.b16 %v1217
      %v1250 = vunpack.c.l.b16 %v1218
      %v1251 = vunpack.c.l.b16 %v1219
      %v1252 = vunpack.c.l.b16 %v1220
      %v1253 = vunpack.c.l.b16 %v1221
      %v1254 = vunpack.c.l.b16 %v1222
      %v1255 = vunpack.c.l.b16 %v1223
      %v1256 = vunpack.c.l.b16 %v1224
      %v1257 = vunpack.c.l.b16 %v1225
      %v1258 = vunpack.c.l.b16 %v1226
      %v1259 = vpack.c.b16 %v1244, %v1243
      %v1260 = vpack.c.b16 %v1246, %v1245
      %v1261 = vpack.c.b16 %v1248, %v1247
      %v1262 = vpack.c.b16 %v1250, %v1249
      %v1263 = vpack.c.b16 %v1252, %v1251
      %v1264 = vpack.c.b16 %v1254, %v1253
      %v1265 = vpack.c.b16 %v1256, %v1255
      %v1266 = vpack.c.b16 %v1258, %v1257
      %1275 = vmatprep.subr.bf16.mxu0 0
      %1276 = vmatpush1.bf16.msra.mxu0 %v1259
      %1277 = vmatprep.subr.bf16.mxu0 0
      %1278 = vmatpush1.bf16.msra.mxu0 %v1260
      %1279 = vmatprep.subr.bf16.mxu0 0
      %1280 = vmatpush1.bf16.msra.mxu0 %v1261
      %1281 = vmatprep.subr.bf16.mxu0 0
      %1282 = vmatpush1.bf16.msra.mxu0 %v1262
      %1283 = vmatprep.subr.bf16.mxu0 0
      %1284 = vmatpush1.bf16.msra.mxu0 %v1263
      %1285 = vmatprep.subr.bf16.mxu0 0
      %1286 = vmatpush1.bf16.msra.mxu0 %v1264
      %1287 = vmatprep.subr.bf16.mxu0 0
      %1288 = vmatpush1.bf16.msra.mxu0 %v1265
      %1289 = vmatprep.subr.bf16.mxu0 0
      %1290 = vmatpush1.bf16.msra.mxu0 %v1266
      %1291 = vmatprep.subr.bf16.mxu0 0
      %1292 = vmatpush1.bf16.msra.mxu0 0
      %1293 = vmatprep.subr.bf16.mxu0 0
      %1294 = vmatpush1.bf16.msra.mxu0 0
      %1295 = vmatprep.subr.bf16.mxu0 0
      %1296 = vmatpush1.bf16.msra.mxu0 0
      %1297 = vmatprep.subr.bf16.mxu0 0
      %1298 = vmatpush1.bf16.msra.mxu0 0
      %1299 = vmatprep.subr.bf16.mxu0 0
      %1300 = vmatpush1.bf16.msra.mxu0 0
      %1301 = vmatprep.subr.bf16.mxu0 0
      %1302 = vmatpush1.bf16.msra.mxu0 0
      %1303 = vmatprep.subr.bf16.mxu0 0
      %1304 = vmatpush1.bf16.msra.mxu0 0
      %1305 = vmatprep.subr.bf16.mxu0 0
      %1306 = vmatpush1.bf16.msra.mxu0 0
      %1307 = vmatprep.mubr.bf16.mxu0 0
      %1308 = vmatmul.mubr.bf16.gmra.mrb[0].mxu0 %v1198
      %v1309 = vpop.f32.mrb[0].mxu0
      %v1310 = vadd.f32 0.0, %v1309
      %v1311 = vpop.f32.mrb[0].mxu0
      %v1312 = vpop.f32.mrb[0].mxu0
      %v1313 = vadd.f32 0.0, %v1312
      %v1314 = vpop.f32.mrb[0].mxu0
      %1315 = vmatprep.mubr.bf16.mxu0 0
      %1316 = vmatmul.mubr.bf16.gmra.mrb[0].mxu0 %v1199
      %v1317 = vpop.f32.mrb[0].mxu0
      %v1318 = vadd.f32 0.0, %v1317
      %v1319 = vpop.f32.mrb[0].mxu0
      %v1320 = vpop.f32.mrb[0].mxu0
      %v1321 = vadd.f32 0.0, %v1320
      %v1322 = vpop.f32.mrb[0].mxu0
      %1323 = vmatprep.mubr.bf16.mxu0 0
      %1324 = vmatmul.mubr.bf16.gmra.mrb[0].mxu0 %v1200
      %v1325 = vpop.f32.mrb[0].mxu0
      %v1326 = vadd.f32 0.0, %v1325
      %v1327 = vpop.f32.mrb[0].mxu0
      %v1328 = vpop.f32.mrb[0].mxu0
      %v1329 = vadd.f32 0.0, %v1328
      %v1330 = vpop.f32.mrb[0].mxu0
      %1331 = vmatprep.mubr.bf16.mxu0 0
      %1332 = vmatmul.mubr.bf16.gmra.mrb[0].mxu0 %v1201
      %v1333 = vpop.f32.mrb[0].mxu0
      %v1334 = vadd.f32 0.0, %v1333
      %v1335 = vpop.f32.mrb[0].mxu0
      %v1336 = vpop.f32.mrb[0].mxu0
      %v1337 = vadd.f32 0.0, %v1336
      %v1338 = vpop.f32.mrb[0].mxu0
      %1339 = vdwg.mxu0
      %v1340 = vadd.f32 %v1202, %v1310
      %v1341 = vadd.f32 %v1203, %v1313
      %v1342 = vadd.f32 %v1204, %v1318
      %v1343 = vadd.f32 %v1205, %v1321
      %v1344 = vadd.f32 %v1206, %v1326
      %v1345 = vadd.f32 %v1207, %v1329
      %v1346 = vadd.f32 %v1208, %v1334
      %v1347 = vadd.f32 %v1209, %v1337
      %1348 = vst [vmem:[#allocation3] sm:$0xff] %v1340
      %1349 = vst [vmem:[#allocation3 + $0x8] sm:$0xff] %v1341
      %1350 = vst [vmem:[#allocation3 + $0x10] sm:$0xff] %v1342
      %1351 = vst [vmem:[#allocation3 + $0x18] sm:$0xff] %v1343
      %1352 = vst [vmem:[#allocation3 + $0x20] sm:$0xff] %v1344
      %1353 = vst [vmem:[#allocation3 + $0x28] sm:$0xff] %v1345
      %1354 = vst [vmem:[#allocation3 + $0x30] sm:$0xff] %v1346
      %1355 = vst [vmem:[#allocation3 + $0x38] sm:$0xff] %v1347
      %v1356 = vld [vmem:[%s475 + $0x8] sm:$0xff]
      %v1357 = vld [vmem:[%s475 + $0x10] sm:$0xff]
      %v1358 = vld [vmem:[%s475 + $0x18] sm:$0xff]
      %v1359 = vld [vmem:[%s475 + $0x20] sm:$0xff]
      %v1360 = vld [vmem:[%s475 + $0x28] sm:$0xff]
      %v1361 = vld [vmem:[%s475 + $0x30] sm:$0xff]
      %v1362 = vld [vmem:[%s475 + $0x38] sm:$0xff]
      %v1363 = vld [vmem:[%s475 + $0x40] sm:$0xff]
      %v1364 = vpack.c.bf16 %v1357, %v1356
      %v1365 = vpack.c.bf16 %v1359, %v1358
      %v1366 = vpack.c.bf16 %v1361, %v1360
      %v1367 = vpack.c.bf16 %v1363, %v1362
      %v1368 = vld [vmem:[#allocation3] sm:$0xff]
      %v1369 = vld [vmem:[#allocation3 + $0x8] sm:$0xff]
      %v1370 = vld [vmem:[#allocation3 + $0x10] sm:$0xff]
      %v1371 = vld [vmem:[#allocation3 + $0x18] sm:$0xff]
      %v1372 = vld [vmem:[#allocation3 + $0x20] sm:$0xff]
      %v1373 = vld [vmem:[#allocation3 + $0x28] sm:$0xff]
      %v1374 = vld [vmem:[#allocation3 + $0x30] sm:$0xff]
      %v1375 = vld [vmem:[#allocation3 + $0x38] sm:$0xff]
      %s1376 = scalar_lea.vmem %s3, 320
      %v1377 = vld [vmem:[%s1376] sm:$0xf]
      %v1378 = vld [vmem:[%s1376 + $0x4] sm:$0xf]
      %v1379 = vld [vmem:[%s1376 + $0x8] sm:$0xf]
      %v1380 = vld [vmem:[%s1376 + $0xc] sm:$0xf]
      %v1381 = vld [vmem:[%s1376 + $0x10] sm:$0xf]
      %v1382 = vld [vmem:[%s1376 + $0x14] sm:$0xf]
      %v1383 = vld [vmem:[%s1376 + $0x18] sm:$0xf]
      %v1384 = vld [vmem:[%s1376 + $0x1c] sm:$0xf]
      %v1385 = vld [vmem:[%s1376 + $0x20] sm:$0xf]
      %v1386 = vld [vmem:[%s1376 + $0x24] sm:$0xf]
      %v1387 = vld [vmem:[%s1376 + $0x28] sm:$0xf]
      %v1388 = vld [vmem:[%s1376 + $0x2c] sm:$0xf]
      %v1389 = vld [vmem:[%s1376 + $0x30] sm:$0xf]
      %v1390 = vld [vmem:[%s1376 + $0x34] sm:$0xf]
      %v1391 = vld [vmem:[%s1376 + $0x38] sm:$0xf]
      %v1392 = vld [vmem:[%s1376 + $0x3c] sm:$0xf]
      %v1409 = vunpack.c.l.b16 %v1377
      %v1410 = vunpack.c.l.b16 %v1378
      %v1411 = vunpack.c.l.b16 %v1379
      %v1412 = vunpack.c.l.b16 %v1380
      %v1413 = vunpack.c.l.b16 %v1381
      %v1414 = vunpack.c.l.b16 %v1382
      %v1415 = vunpack.c.l.b16 %v1383
      %v1416 = vunpack.c.l.b16 %v1384
      %v1417 = vunpack.c.l.b16 %v1385
      %v1418 = vunpack.c.l.b16 %v1386
      %v1419 = vunpack.c.l.b16 %v1387
      %v1420 = vunpack.c.l.b16 %v1388
      %v1421 = vunpack.c.l.b16 %v1389
      %v1422 = vunpack.c.l.b16 %v1390
      %v1423 = vunpack.c.l.b16 %v1391
      %v1424 = vunpack.c.l.b16 %v1392
      %v1425 = vpack.c.b16 %v1410, %v1409
      %v1426 = vpack.c.b16 %v1412, %v1411
      %v1427 = vpack.c.b16 %v1414, %v1413
      %v1428 = vpack.c.b16 %v1416, %v1415
      %v1429 = vpack.c.b16 %v1418, %v1417
      %v1430 = vpack.c.b16 %v1420, %v1419
      %v1431 = vpack.c.b16 %v1422, %v1421
      %v1432 = vpack.c.b16 %v1424, %v1423
      %1441 = vmatprep.subr.bf16.mxu0 0
      %1442 = vmatpush1.bf16.msra.mxu0 %v1425
      %1443 = vmatprep.subr.bf16.mxu0 0
      %1444 = vmatpush1.bf16.msra.mxu0 %v1426
      %1445 = vmatprep.subr.bf16.mxu0 0
      %1446 = vmatpush1.bf16.msra.mxu0 %v1427
      %1447 = vmatprep.subr.bf16.mxu0 0
      %1448 = vmatpush1.bf16.msra.mxu0 %v1428
      %1449 = vmatprep.subr.bf16.mxu0 0
      %1450 = vmatpush1.bf16.msra.mxu0 %v1429
      %1451 = vmatprep.subr.bf16.mxu0 0
      %1452 = vmatpush1.bf16.msra.mxu0 %v1430
      %1453 = vmatprep.subr.bf16.mxu0 0
      %1454 = vmatpush1.bf16.msra.mxu0 %v1431
      %1455 = vmatprep.subr.bf16.mxu0 0
      %1456 = vmatpush1.bf16.msra.mxu0 %v1432
      %1457 = vmatprep.subr.bf16.mxu0 0
      %1458 = vmatpush1.bf16.msra.mxu0 0
      %1459 = vmatprep.subr.bf16.mxu0 0
      %1460 = vmatpush1.bf16.msra.mxu0 0
      %1461 = vmatprep.subr.bf16.mxu0 0
      %1462 = vmatpush1.bf16.msra.mxu0 0
      %1463 = vmatprep.subr.bf16.mxu0 0
      %1464 = vmatpush1.bf16.msra.mxu0 0
      %1465 = vmatprep.subr.bf16.mxu0 0
      %1466 = vmatpush1.bf16.msra.mxu0 0
      %1467 = vmatprep.subr.bf16.mxu0 0
      %1468 = vmatpush1.bf16.msra.mxu0 0
      %1469 = vmatprep.subr.bf16.mxu0 0
      %1470 = vmatpush1.bf16.msra.mxu0 0
      %1471 = vmatprep.subr.bf16.mxu0 0
      %1472 = vmatpush1.bf16.msra.mxu0 0
      %1473 = vmatprep.mubr.bf16.mxu0 0
      %1474 = vmatmul.mubr.bf16.gmra.mrb[0].mxu0 %v1364
      %v1475 = vpop.f32.mrb[0].mxu0
      %v1476 = vadd.f32 0.0, %v1475
      %v1477 = vpop.f32.mrb[0].mxu0
      %v1478 = vpop.f32.mrb[0].mxu0
      %v1479 = vadd.f32 0.0, %v1478
      %v1480 = vpop.f32.mrb[0].mxu0
      %1481 = vmatprep.mubr.bf16.mxu0 0
      %1482 = vmatmul.mubr.bf16.gmra.mrb[0].mxu0 %v1365
      %v1483 = vpop.f32.mrb[0].mxu0
      %v1484 = vadd.f32 0.0, %v1483
      %v1485 = vpop.f32.mrb[0].mxu0
      %v1486 = vpop.f32.mrb[0].mxu0
      %v1487 = vadd.f32 0.0, %v1486
      %v1488 = vpop.f32.mrb[0].mxu0
      %1489 = vmatprep.mubr.bf16.mxu0 0
      %1490 = vmatmul.mubr.bf16.gmra.mrb[0].mxu0 %v1366
      %v1491 = vpop.f32.mrb[0].mxu0
      %v1492 = vadd.f32 0.0, %v1491
      %v1493 = vpop.f32.mrb[0].mxu0
      %v1494 = vpop.f32.mrb[0].mxu0
      %v1495 = vadd.f32 0.0, %v1494
      %v1496 = vpop.f32.mrb[0].mxu0
      %1497 = vmatprep.mubr.bf16.mxu0 0
      %1498 = vmatmul.mubr.bf16.gmra.mrb[0].mxu0 %v1367
      %v1499 = vpop.f32.mrb[0].mxu0
      %v1500 = vadd.f32 0.0, %v1499
      %v1501 = vpop.f32.mrb[0].mxu0
      %v1502 = vpop.f32.mrb[0].mxu0
      %v1503 = vadd.f32 0.0, %v1502
      %v1504 = vpop.f32.mrb[0].mxu0
      %1505 = vdwg.mxu0
      %v1506 = vadd.f32 %v1368, %v1476
      %v1507 = vadd.f32 %v1369, %v1479
      %v1508 = vadd.f32 %v1370, %v1484
      %v1509 = vadd.f32 %v1371, %v1487
      %v1510 = vadd.f32 %v1372, %v1492
      %v1511 = vadd.f32 %v1373, %v1495
      %v1512 = vadd.f32 %v1374, %v1500
      %v1513 = vadd.f32 %v1375, %v1503
      %1514 = vst [vmem:[#allocation3] sm:$0xff] %v1506
      %1515 = vst [vmem:[#allocation3 + $0x8] sm:$0xff] %v1507
      %1516 = vst [vmem:[#allocation3 + $0x10] sm:$0xff] %v1508
      %1517 = vst [vmem:[#allocation3 + $0x18] sm:$0xff] %v1509
      %1518 = vst [vmem:[#allocation3 + $0x20] sm:$0xff] %v1510
      %1519 = vst [vmem:[#allocation3 + $0x28] sm:$0xff] %v1511
      %1520 = vst [vmem:[#allocation3 + $0x30] sm:$0xff] %v1512
      %1521 = vst [vmem:[#allocation3 + $0x38] sm:$0xff] %v1513
      %v1522 = vld [vmem:[#allocation2 + $0x10] sm:$0xff]
      %v1523 = vld [vmem:[#allocation2 + $0x18] sm:$0xff]
      %v1524 = vld [vmem:[#allocation2 + $0x20] sm:$0xff]
      %v1525 = vld [vmem:[#allocation2 + $0x28] sm:$0xff]
      %v1526 = vld [vmem:[#allocation2 + $0x30] sm:$0xff]
      %v1527 = vld [vmem:[#allocation2 + $0x38] sm:$0xff]
      %v1528 = vld [vmem:[#allocation2 + $0x40] sm:$0xff]
      %v1529 = vld [vmem:[#allocation2 + $0x48] sm:$0xff]
      %v1530 = vpack.c.bf16 %v1523, %v1522
      %v1531 = vpack.c.bf16 %v1525, %v1524
      %v1532 = vpack.c.bf16 %v1527, %v1526
      %v1533 = vpack.c.bf16 %v1529, %v1528
      %v1534 = vld [vmem:[#allocation3] sm:$0xff]
      %v1535 = vld [vmem:[#allocation3 + $0x8] sm:$0xff]
      %v1536 = vld [vmem:[#allocation3 + $0x10] sm:$0xff]
      %v1537 = vld [vmem:[#allocation3 + $0x18] sm:$0xff]
      %v1538 = vld [vmem:[#allocation3 + $0x20] sm:$0xff]
      %v1539 = vld [vmem:[#allocation3 + $0x28] sm:$0xff]
      %v1540 = vld [vmem:[#allocation3 + $0x30] sm:$0xff]
      %v1541 = vld [vmem:[#allocation3 + $0x38] sm:$0xff]
      %s1542 = scalar_lea.vmem %s3, 384
      %v1543 = vld [vmem:[%s1542] sm:$0xf]
      %v1544 = vld [vmem:[%s1542 + $0x4] sm:$0xf]
      %v1545 = vld [vmem:[%s1542 + $0x8] sm:$0xf]
      %v1546 = vld [vmem:[%s1542 + $0xc] sm:$0xf]
      %v1547 = vld [vmem:[%s1542 + $0x10] sm:$0xf]
      %v1548 = vld [vmem:[%s1542 + $0x14] sm:$0xf]
      %v1549 = vld [vmem:[%s1542 + $0x18] sm:$0xf]
      %v1550 = vld [vmem:[%s1542 + $0x1c] sm:$0xf]
      %v1551 = vld [vmem:[%s1542 + $0x20] sm:$0xf]
      %v1552 = vld [vmem:[%s1542 + $0x24] sm:$0xf]
      %v1553 = vld [vmem:[%s1542 + $0x28] sm:$0xf]
      %v1554 = vld [vmem:[%s1542 + $0x2c] sm:$0xf]
      %v1555 = vld [vmem:[%s1542 + $0x30] sm:$0xf]
      %v1556 = vld [vmem:[%s1542 + $0x34] sm:$0xf]
      %v1557 = vld [vmem:[%s1542 + $0x38] sm:$0xf]
      %v1558 = vld [vmem:[%s1542 + $0x3c] sm:$0xf]
      %v1575 = vunpack.c.l.b16 %v1543
      %v1576 = vunpack.c.l.b16 %v1544
      %v1577 = vunpack.c.l.b16 %v1545
      %v1578 = vunpack.c.l.b16 %v1546
      %v1579 = vunpack.c.l.b16 %v1547
      %v1580 = vunpack.c.l.b16 %v1548
      %v1581 = vunpack.c.l.b16 %v1549
      %v1582 = vunpack.c.l.b16 %v1550
      %v1583 = vunpack.c.l.b16 %v1551
      %v1584 = vunpack.c.l.b16 %v1552
      %v1585 = vunpack.c.l.b16 %v1553
      %v1586 = vunpack.c.l.b16 %v1554
      %v1587 = vunpack.c.l.b16 %v1555
      %v1588 = vunpack.c.l.b16 %v1556
      %v1589 = vunpack.c.l.b16 %v1557
      %v1590 = vunpack.c.l.b16 %v1558
      %v1591 = vpack.c.b16 %v1576, %v1575
      %v1592 = vpack.c.b16 %v1578, %v1577
      %v1593 = vpack.c.b16 %v1580, %v1579
      %v1594 = vpack.c.b16 %v1582, %v1581
      %v1595 = vpack.c.b16 %v1584, %v1583
      %v1596 = vpack.c.b16 %v1586, %v1585
      %v1597 = vpack.c.b16 %v1588, %v1587
      %v1598 = vpack.c.b16 %v1590, %v1589
      %1607 = vmatprep.subr.bf16.mxu0 0
      %1608 = vmatpush1.bf16.msra.mxu0 %v1591
      %1609 = vmatprep.subr.bf16.mxu0 0
      %1610 = vmatpush1.bf16.msra.mxu0 %v1592
      %1611 = vmatprep.subr.bf16.mxu0 0
      %1612 = vmatpush1.bf16.msra.mxu0 %v1593
      %1613 = vmatprep.subr.bf16.mxu0 0
      %1614 = vmatpush1.bf16.msra.mxu0 %v1594
      %1615 = vmatprep.subr.bf16.mxu0 0
      %1616 = vmatpush1.bf16.msra.mxu0 %v1595
      %1617 = vmatprep.subr.bf16.mxu0 0
      %1618 = vmatpush1.bf16.msra.mxu0 %v1596
      %1619 = vmatprep.subr.bf16.mxu0 0
      %1620 = vmatpush1.bf16.msra.mxu0 %v1597
      %1621 = vmatprep.subr.bf16.mxu0 0
      %1622 = vmatpush1.bf16.msra.mxu0 %v1598
      %1623 = vmatprep.subr.bf16.mxu0 0
      %1624 = vmatpush1.bf16.msra.mxu0 0
      %1625 = vmatprep.subr.bf16.mxu0 0
      %1626 = vmatpush1.bf16.msra.mxu0 0
      %1627 = vmatprep.subr.bf16.mxu0 0
      %1628 = vmatpush1.bf16.msra.mxu0 0
      %1629 = vmatprep.subr.bf16.mxu0 0
      %1630 = vmatpush1.bf16.msra.mxu0 0
      %1631 = vmatprep.subr.bf16.mxu0 0
      %1632 = vmatpush1.bf16.msra.mxu0 0
      %1633 = vmatprep.subr.bf16.mxu0 0
      %1634 = vmatpush1.bf16.msra.mxu0 0
      %1635 = vmatprep.subr.bf16.mxu0 0
      %1636 = vmatpush1.bf16.msra.mxu0 0
      %1637 = vmatprep.subr.bf16.mxu0 0
      %1638 = vmatpush1.bf16.msra.mxu0 0
      %1639 = vmatprep.mubr.bf16.mxu0 0
      %1640 = vmatmul.mubr.bf16.gmra.mrb[0].mxu0 %v1530
      %v1641 = vpop.f32.mrb[0].mxu0
      %v1642 = vadd.f32 0.0, %v1641
      %v1643 = vpop.f32.mrb[0].mxu0
      %v1644 = vpop.f32.mrb[0].mxu0
      %v1645 = vadd.f32 0.0, %v1644
      %v1646 = vpop.f32.mrb[0].mxu0
      %1647 = vmatprep.mubr.bf16.mxu0 0
      %1648 = vmatmul.mubr.bf16.gmra.mrb[0].mxu0 %v1531
      %v1649 = vpop.f32.mrb[0].mxu0
      %v1650 = vadd.f32 0.0, %v1649
      %v1651 = vpop.f32.mrb[0].mxu0
      %v1652 = vpop.f32.mrb[0].mxu0
      %v1653 = vadd.f32 0.0, %v1652
      %v1654 = vpop.f32.mrb[0].mxu0
      %1655 = vmatprep.mubr.bf16.mxu0 0
      %1656 = vmatmul.mubr.bf16.gmra.mrb[0].mxu0 %v1532
      %v1657 = vpop.f32.mrb[0].mxu0
      %v1658 = vadd.f32 0.0, %v1657
      %v1659 = vpop.f32.mrb[0].mxu0
      %v1660 = vpop.f32.mrb[0].mxu0
      %v1661 = vadd.f32 0.0, %v1660
      %v1662 = vpop.f32.mrb[0].mxu0
      %1663 = vmatprep.mubr.bf16.mxu0 0
      %1664 = vmatmul.mubr.bf16.gmra.mrb[0].mxu0 %v1533
      %v1665 = vpop.f32.mrb[0].mxu0
      %v1666 = vadd.f32 0.0, %v1665
      %v1667 = vpop.f32.mrb[0].mxu0
      %v1668 = vpop.f32.mrb[0].mxu0
      %v1669 = vadd.f32 0.0, %v1668
      %v1670 = vpop.f32.mrb[0].mxu0
      %1671 = vdwg.mxu0
      %v1672 = vadd.f32 %v1534, %v1642
      %v1673 = vadd.f32 %v1535, %v1645
      %v1674 = vadd.f32 %v1536, %v1650
      %v1675 = vadd.f32 %v1537, %v1653
      %v1676 = vadd.f32 %v1538, %v1658
      %v1677 = vadd.f32 %v1539, %v1661
      %v1678 = vadd.f32 %v1540, %v1666
      %v1679 = vadd.f32 %v1541, %v1669
      %1680 = vst [vmem:[#allocation3] sm:$0xff] %v1672
      %1681 = vst [vmem:[#allocation3 + $0x8] sm:$0xff] %v1673
      %1682 = vst [vmem:[#allocation3 + $0x10] sm:$0xff] %v1674
      %1683 = vst [vmem:[#allocation3 + $0x18] sm:$0xff] %v1675
      %1684 = vst [vmem:[#allocation3 + $0x20] sm:$0xff] %v1676
      %1685 = vst [vmem:[#allocation3 + $0x28] sm:$0xff] %v1677
      %1686 = vst [vmem:[#allocation3 + $0x30] sm:$0xff] %v1678
      %1687 = vst [vmem:[#allocation3 + $0x38] sm:$0xff] %v1679
      %v1688 = vld [vmem:[%s421 + $0x10] sm:$0xff]
      %v1689 = vld [vmem:[%s421 + $0x18] sm:$0xff]
      %v1690 = vld [vmem:[%s421 + $0x20] sm:$0xff]
      %v1691 = vld [vmem:[%s421 + $0x28] sm:$0xff]
      %v1692 = vld [vmem:[%s421 + $0x30] sm:$0xff]
      %v1693 = vld [vmem:[%s421 + $0x38] sm:$0xff]
      %v1694 = vld [vmem:[%s421 + $0x40] sm:$0xff]
      %v1695 = vld [vmem:[%s421 + $0x48] sm:$0xff]
      %v1696 = vpack.c.bf16 %v1689, %v1688
      %v1697 = vpack.c.bf16 %v1691, %v1690
      %v1698 = vpack.c.bf16 %v1693, %v1692
      %v1699 = vpack.c.bf16 %v1695, %v1694
      %v1700 = vld [vmem:[#allocation3] sm:$0xff]
      %v1701 = vld [vmem:[#allocation3 + $0x8] sm:$0xff]
      %v1702 = vld [vmem:[#allocation3 + $0x10] sm:$0xff]
      %v1703 = vld [vmem:[#allocation3 + $0x18] sm:$0xff]
      %v1704 = vld [vmem:[#allocation3 + $0x20] sm:$0xff]
      %v1705 = vld [vmem:[#allocation3 + $0x28] sm:$0xff]
      %v1706 = vld [vmem:[#allocation3 + $0x30] sm:$0xff]
      %v1707 = vld [vmem:[#allocation3 + $0x38] sm:$0xff]
      %s1708 = scalar_lea.vmem %s3, 448
      %v1709 = vld [vmem:[%s1708] sm:$0xf]
      %v1710 = vld [vmem:[%s1708 + $0x4] sm:$0xf]
      %v1711 = vld [vmem:[%s1708 + $0x8] sm:$0xf]
      %v1712 = vld [vmem:[%s1708 + $0xc] sm:$0xf]
      %v1713 = vld [vmem:[%s1708 + $0x10] sm:$0xf]
      %v1714 = vld [vmem:[%s1708 + $0x14] sm:$0xf]
      %v1715 = vld [vmem:[%s1708 + $0x18] sm:$0xf]
      %v1716 = vld [vmem:[%s1708 + $0x1c] sm:$0xf]
      %v1717 = vld [vmem:[%s1708 + $0x20] sm:$0xf]
      %v1718 = vld [vmem:[%s1708 + $0x24] sm:$0xf]
      %v1719 = vld [vmem:[%s1708 + $0x28] sm:$0xf]
      %v1720 = vld [vmem:[%s1708 + $0x2c] sm:$0xf]
      %v1721 = vld [vmem:[%s1708 + $0x30] sm:$0xf]
      %v1722 = vld [vmem:[%s1708 + $0x34] sm:$0xf]
      %v1723 = vld [vmem:[%s1708 + $0x38] sm:$0xf]
      %v1724 = vld [vmem:[%s1708 + $0x3c] sm:$0xf]
      %v1741 = vunpack.c.l.b16 %v1709
      %v1742 = vunpack.c.l.b16 %v1710
      %v1743 = vunpack.c.l.b16 %v1711
      %v1744 = vunpack.c.l.b16 %v1712
      %v1745 = vunpack.c.l.b16 %v1713
      %v1746 = vunpack.c.l.b16 %v1714
      %v1747 = vunpack.c.l.b16 %v1715
      %v1748 = vunpack.c.l.b16 %v1716
      %v1749 = vunpack.c.l.b16 %v1717
      %v1750 = vunpack.c.l.b16 %v1718
      %v1751 = vunpack.c.l.b16 %v1719
      %v1752 = vunpack.c.l.b16 %v1720
      %v1753 = vunpack.c.l.b16 %v1721
      %v1754 = vunpack.c.l.b16 %v1722
      %v1755 = vunpack.c.l.b16 %v1723
      %v1756 = vunpack.c.l.b16 %v1724
      %v1757 = vpack.c.b16 %v1742, %v1741
      %v1758 = vpack.c.b16 %v1744, %v1743
      %v1759 = vpack.c.b16 %v1746, %v1745
      %v1760 = vpack.c.b16 %v1748, %v1747
      %v1761 = vpack.c.b16 %v1750, %v1749
      %v1762 = vpack.c.b16 %v1752, %v1751
      %v1763 = vpack.c.b16 %v1754, %v1753
      %v1764 = vpack.c.b16 %v1756, %v1755
      %1773 = vmatprep.subr.bf16.mxu0 0
      %1774 = vmatpush1.bf16.msra.mxu0 %v1757
      %1775 = vmatprep.subr.bf16.mxu0 0
      %1776 = vmatpush1.bf16.msra.mxu0 %v1758
      %1777 = vmatprep.subr.bf16.mxu0 0
      %1778 = vmatpush1.bf16.msra.mxu0 %v1759
      %1779 = vmatprep.subr.bf16.mxu0 0
      %1780 = vmatpush1.bf16.msra.mxu0 %v1760
      %1781 = vmatprep.subr.bf16.mxu0 0
      %1782 = vmatpush1.bf16.msra.mxu0 %v1761
      %1783 = vmatprep.subr.bf16.mxu0 0
      %1784 = vmatpush1.bf16.msra.mxu0 %v1762
      %1785 = vmatprep.subr.bf16.mxu0 0
      %1786 = vmatpush1.bf16.msra.mxu0 %v1763
      %1787 = vmatprep.subr.bf16.mxu0 0
      %1788 = vmatpush1.bf16.msra.mxu0 %v1764
      %1789 = vmatprep.subr.bf16.mxu0 0
      %1790 = vmatpush1.bf16.msra.mxu0 0
      %1791 = vmatprep.subr.bf16.mxu0 0
      %1792 = vmatpush1.bf16.msra.mxu0 0
      %1793 = vmatprep.subr.bf16.mxu0 0
      %1794 = vmatpush1.bf16.msra.mxu0 0
      %1795 = vmatprep.subr.bf16.mxu0 0
      %1796 = vmatpush1.bf16.msra.mxu0 0
      %1797 = vmatprep.subr.bf16.mxu0 0
      %1798 = vmatpush1.bf16.msra.mxu0 0
      %1799 = vmatprep.subr.bf16.mxu0 0
      %1800 = vmatpush1.bf16.msra.mxu0 0
      %1801 = vmatprep.subr.bf16.mxu0 0
      %1802 = vmatpush1.bf16.msra.mxu0 0
      %1803 = vmatprep.subr.bf16.mxu0 0
      %1804 = vmatpush1.bf16.msra.mxu0 0
      %1805 = vmatprep.mubr.bf16.mxu0 0
      %1806 = vmatmul.mubr.bf16.gmra.mrb[0].mxu0 %v1696
      %v1807 = vpop.f32.mrb[0].mxu0
      %v1808 = vadd.f32 0.0, %v1807
      %v1809 = vpop.f32.mrb[0].mxu0
      %v1810 = vpop.f32.mrb[0].mxu0
      %v1811 = vadd.f32 0.0, %v1810
      %v1812 = vpop.f32.mrb[0].mxu0
      %1813 = vmatprep.mubr.bf16.mxu0 0
      %1814 = vmatmul.mubr.bf16.gmra.mrb[0].mxu0 %v1697
      %v1815 = vpop.f32.mrb[0].mxu0
      %v1816 = vadd.f32 0.0, %v1815
      %v1817 = vpop.f32.mrb[0].mxu0
      %v1818 = vpop.f32.mrb[0].mxu0
      %v1819 = vadd.f32 0.0, %v1818
      %v1820 = vpop.f32.mrb[0].mxu0
      %1821 = vmatprep.mubr.bf16.mxu0 0
      %1822 = vmatmul.mubr.bf16.gmra.mrb[0].mxu0 %v1698
      %v1823 = vpop.f32.mrb[0].mxu0
      %v1824 = vadd.f32 0.0, %v1823
      %v1825 = vpop.f32.mrb[0].mxu0
      %v1826 = vpop.f32.mrb[0].mxu0
      %v1827 = vadd.f32 0.0, %v1826
      %v1828 = vpop.f32.mrb[0].mxu0
      %1829 = vmatprep.mubr.bf16.mxu0 0
      %1830 = vmatmul.mubr.bf16.gmra.mrb[0].mxu0 %v1699
      %v1831 = vpop.f32.mrb[0].mxu0
      %v1832 = vadd.f32 0.0, %v1831
      %v1833 = vpop.f32.mrb[0].mxu0
      %v1834 = vpop.f32.mrb[0].mxu0
      %v1835 = vadd.f32 0.0, %v1834
      %v1836 = vpop.f32.mrb[0].mxu0
      %1837 = vdwg.mxu0
      %v1838 = vadd.f32 %v1700, %v1808
      %v1839 = vadd.f32 %v1701, %v1811
      %v1840 = vadd.f32 %v1702, %v1816
      %v1841 = vadd.f32 %v1703, %v1819
      %v1842 = vadd.f32 %v1704, %v1824
      %v1843 = vadd.f32 %v1705, %v1827
      %v1844 = vadd.f32 %v1706, %v1832
      %v1845 = vadd.f32 %v1707, %v1835
      %1846 = vst [vmem:[#allocation3] sm:$0xff] %v1838
      %1847 = vst [vmem:[#allocation3 + $0x8] sm:$0xff] %v1839
      %1848 = vst [vmem:[#allocation3 + $0x10] sm:$0xff] %v1840
      %1849 = vst [vmem:[#allocation3 + $0x18] sm:$0xff] %v1841
      %1850 = vst [vmem:[#allocation3 + $0x20] sm:$0xff] %v1842
      %1851 = vst [vmem:[#allocation3 + $0x28] sm:$0xff] %v1843
      %1852 = vst [vmem:[#allocation3 + $0x30] sm:$0xff] %v1844
      %1853 = vst [vmem:[#allocation3 + $0x38] sm:$0xff] %v1845
      %v1854 = vld [vmem:[%s475 + $0x10] sm:$0xff]
      %v1855 = vld [vmem:[%s475 + $0x18] sm:$0xff]
      %v1856 = vld [vmem:[%s475 + $0x20] sm:$0xff]
      %v1857 = vld [vmem:[%s475 + $0x28] sm:$0xff]
      %v1858 = vld [vmem:[%s475 + $0x30] sm:$0xff]
      %v1859 = vld [vmem:[%s475 + $0x38] sm:$0xff]
      %v1860 = vld [vmem:[%s475 + $0x40] sm:$0xff]
      %v1861 = vld [vmem:[%s475 + $0x48] sm:$0xff]
      %v1862 = vpack.c.bf16 %v1855, %v1854
      %v1863 = vpack.c.bf16 %v1857, %v1856
      %v1864 = vpack.c.bf16 %v1859, %v1858
      %v1865 = vpack.c.bf16 %v1861, %v1860
      %v1866 = vld [vmem:[#allocation3] sm:$0xff]
      %v1867 = vld [vmem:[#allocation3 + $0x8] sm:$0xff]
      %v1868 = vld [vmem:[#allocation3 + $0x10] sm:$0xff]
      %v1869 = vld [vmem:[#allocation3 + $0x18] sm:$0xff]
      %v1870 = vld [vmem:[#allocation3 + $0x20] sm:$0xff]
      %v1871 = vld [vmem:[#allocation3 + $0x28] sm:$0xff]
      %v1872 = vld [vmem:[#allocation3 + $0x30] sm:$0xff]
      %v1873 = vld [vmem:[#allocation3 + $0x38] sm:$0xff]
      %s1874 = scalar_lea.vmem %s3, 512
      %v1875 = vld [vmem:[%s1874] sm:$0xf]
      %v1876 = vld [vmem:[%s1874 + $0x4] sm:$0xf]
      %v1877 = vld [vmem:[%s1874 + $0x8] sm:$0xf]
      %v1878 = vld [vmem:[%s1874 + $0xc] sm:$0xf]
      %v1879 = vld [vmem:[%s1874 + $0x10] sm:$0xf]
      %v1880 = vld [vmem:[%s1874 + $0x14] sm:$0xf]
      %v1881 = vld [vmem:[%s1874 + $0x18] sm:$0xf]
      %v1882 = vld [vmem:[%s1874 + $0x1c] sm:$0xf]
      %v1883 = vld [vmem:[%s1874 + $0x20] sm:$0xf]
      %v1884 = vld [vmem:[%s1874 + $0x24] sm:$0xf]
      %v1885 = vld [vmem:[%s1874 + $0x28] sm:$0xf]
      %v1886 = vld [vmem:[%s1874 + $0x2c] sm:$0xf]
      %v1887 = vld [vmem:[%s1874 + $0x30] sm:$0xf]
      %v1888 = vld [vmem:[%s1874 + $0x34] sm:$0xf]
      %v1889 = vld [vmem:[%s1874 + $0x38] sm:$0xf]
      %v1890 = vld [vmem:[%s1874 + $0x3c] sm:$0xf]
      %v1907 = vunpack.c.l.b16 %v1875
      %v1908 = vunpack.c.l.b16 %v1876
      %v1909 = vunpack.c.l.b16 %v1877
      %v1910 = vunpack.c.l.b16 %v1878
      %v1911 = vunpack.c.l.b16 %v1879
      %v1912 = vunpack.c.l.b16 %v1880
      %v1913 = vunpack.c.l.b16 %v1881
      %v1914 = vunpack.c.l.b16 %v1882
      %v1915 = vunpack.c.l.b16 %v1883
      %v1916 = vunpack.c.l.b16 %v1884
      %v1917 = vunpack.c.l.b16 %v1885
      %v1918 = vunpack.c.l.b16 %v1886
      %v1919 = vunpack.c.l.b16 %v1887
      %v1920 = vunpack.c.l.b16 %v1888
      %v1921 = vunpack.c.l.b16 %v1889
      %v1922 = vunpack.c.l.b16 %v1890
      %v1923 = vpack.c.b16 %v1908, %v1907
      %v1924 = vpack.c.b16 %v1910, %v1909
      %v1925 = vpack.c.b16 %v1912, %v1911
      %v1926 = vpack.c.b16 %v1914, %v1913
      %v1927 = vpack.c.b16 %v1916, %v1915
      %v1928 = vpack.c.b16 %v1918, %v1917
      %v1929 = vpack.c.b16 %v1920, %v1919
      %v1930 = vpack.c.b16 %v1922, %v1921
      %1939 = vmatprep.subr.bf16.mxu0 0
      %1940 = vmatpush1.bf16.msra.mxu0 %v1923
      %1941 = vmatprep.subr.bf16.mxu0 0
      %1942 = vmatpush1.bf16.msra.mxu0 %v1924
      %1943 = vmatprep.subr.bf16.mxu0 0
      %1944 = vmatpush1.bf16.msra.mxu0 %v1925
      %1945 = vmatprep.subr.bf16.mxu0 0
      %1946 = vmatpush1.bf16.msra.mxu0 %v1926
      %1947 = vmatprep.subr.bf16.mxu0 0
      %1948 = vmatpush1.bf16.msra.mxu0 %v1927
      %1949 = vmatprep.subr.bf16.mxu0 0
      %1950 = vmatpush1.bf16.msra.mxu0 %v1928
      %1951 = vmatprep.subr.bf16.mxu0 0
      %1952 = vmatpush1.bf16.msra.mxu0 %v1929
      %1953 = vmatprep.subr.bf16.mxu0 0
      %1954 = vmatpush1.bf16.msra.mxu0 %v1930
      %1955 = vmatprep.subr.bf16.mxu0 0
      %1956 = vmatpush1.bf16.msra.mxu0 0
      %1957 = vmatprep.subr.bf16.mxu0 0
      %1958 = vmatpush1.bf16.msra.mxu0 0
      %1959 = vmatprep.subr.bf16.mxu0 0
      %1960 = vmatpush1.bf16.msra.mxu0 0
      %1961 = vmatprep.subr.bf16.mxu0 0
      %1962 = vmatpush1.bf16.msra.mxu0 0
      %1963 = vmatprep.subr.bf16.mxu0 0
      %1964 = vmatpush1.bf16.msra.mxu0 0
      %1965 = vmatprep.subr.bf16.mxu0 0
      %1966 = vmatpush1.bf16.msra.mxu0 0
      %1967 = vmatprep.subr.bf16.mxu0 0
      %1968 = vmatpush1.bf16.msra.mxu0 0
      %1969 = vmatprep.subr.bf16.mxu0 0
      %1970 = vmatpush1.bf16.msra.mxu0 0
      %1971 = vmatprep.mubr.bf16.mxu0 0
      %1972 = vmatmul.mubr.bf16.gmra.mrb[0].mxu0 %v1862
      %v1973 = vpop.f32.mrb[0].mxu0
      %v1974 = vadd.f32 0.0, %v1973
      %v1975 = vpop.f32.mrb[0].mxu0
      %v1976 = vpop.f32.mrb[0].mxu0
      %v1977 = vadd.f32 0.0, %v1976
      %v1978 = vpop.f32.mrb[0].mxu0
      %1979 = vmatprep.mubr.bf16.mxu0 0
      %1980 = vmatmul.mubr.bf16.gmra.mrb[0].mxu0 %v1863
      %v1981 = vpop.f32.mrb[0].mxu0
      %v1982 = vadd.f32 0.0, %v1981
      %v1983 = vpop.f32.mrb[0].mxu0
      %v1984 = vpop.f32.mrb[0].mxu0
      %v1985 = vadd.f32 0.0, %v1984
      %v1986 = vpop.f32.mrb[0].mxu0
      %1987 = vmatprep.mubr.bf16.mxu0 0
      %1988 = vmatmul.mubr.bf16.gmra.mrb[0].mxu0 %v1864
      %v1989 = vpop.f32.mrb[0].mxu0
      %v1990 = vadd.f32 0.0, %v1989
      %v1991 = vpop.f32.mrb[0].mxu0
      %v1992 = vpop.f32.mrb[0].mxu0
      %v1993 = vadd.f32 0.0, %v1992
      %v1994 = vpop.f32.mrb[0].mxu0
      %1995 = vmatprep.mubr.bf16.mxu0 0
      %1996 = vmatmul.mubr.bf16.gmra.mrb[0].mxu0 %v1865
      %v1997 = vpop.f32.mrb[0].mxu0
      %v1998 = vadd.f32 0.0, %v1997
      %v1999 = vpop.f32.mrb[0].mxu0
      %v2000 = vpop.f32.mrb[0].mxu0
      %v2001 = vadd.f32 0.0, %v2000
      %v2002 = vpop.f32.mrb[0].mxu0
      %2003 = vdwg.mxu0
      %v2004 = vadd.f32 %v1866, %v1974
      %v2005 = vadd.f32 %v1867, %v1977
      %v2006 = vadd.f32 %v1868, %v1982
      %v2007 = vadd.f32 %v1869, %v1985
      %v2008 = vadd.f32 %v1870, %v1990
      %v2009 = vadd.f32 %v1871, %v1993
      %v2010 = vadd.f32 %v1872, %v1998
      %v2011 = vadd.f32 %v1873, %v2001
      %2012 = vst [vmem:[#allocation3] sm:$0xff] %v2004
      %2013 = vst [vmem:[#allocation3 + $0x8] sm:$0xff] %v2005
      %2014 = vst [vmem:[#allocation3 + $0x10] sm:$0xff] %v2006
      %2015 = vst [vmem:[#allocation3 + $0x18] sm:$0xff] %v2007
      %2016 = vst [vmem:[#allocation3 + $0x20] sm:$0xff] %v2008
      %2017 = vst [vmem:[#allocation3 + $0x28] sm:$0xff] %v2009
      %2018 = vst [vmem:[#allocation3 + $0x30] sm:$0xff] %v2010
      %2019 = vst [vmem:[#allocation3 + $0x38] sm:$0xff] %v2011
      %v2020 = vld [vmem:[#allocation3] sm:$0xff]
      %v2021 = vld [vmem:[#allocation3 + $0x8] sm:$0xff]
      %v2022 = vld [vmem:[#allocation3 + $0x10] sm:$0xff]
      %v2023 = vld [vmem:[#allocation3 + $0x18] sm:$0xff]
      %v2024 = vld [vmem:[#allocation3 + $0x20] sm:$0xff]
      %v2025 = vld [vmem:[#allocation3 + $0x28] sm:$0xff]
      %v2026 = vld [vmem:[#allocation3 + $0x30] sm:$0xff]
      %v2027 = vld [vmem:[#allocation3 + $0x38] sm:$0xff]
      %2028 = vst [vmem:[%s262] sm:$0xff] %v2020
      %2029 = vst [vmem:[%s262 + $0x8] sm:$0xff] %v2021
      %2030 = vst [vmem:[%s262 + $0x10] sm:$0xff] %v2022
      %2031 = vst [vmem:[%s262 + $0x18] sm:$0xff] %v2023
      %2032 = vst [vmem:[%s262 + $0x20] sm:$0xff] %v2024
      %2033 = vst [vmem:[%s262 + $0x28] sm:$0xff] %v2025
      %2034 = vst [vmem:[%s262 + $0x30] sm:$0xff] %v2026
      %2035 = vst [vmem:[%s262 + $0x38] sm:$0xff] %v2027
      %v2036 = vadd.f32 %v2020, %v2021
      %v2037 = vadd.f32 %v2036, %v2022
      %v2038 = vadd.f32 %v2037, %v2023
      %v2039 = vadd.f32 %v2038, %v2024
      %v2040 = vadd.f32 %v2039, %v2025
      %v2041 = vadd.f32 %v2040, %v2026
      %v2042 = vadd.f32 %v2041, %v2027
      %v2043 = vrot.slane %v2042, 4
      %v2044 = vadd.f32 %v2042, %v2043
      %v2045 = vrot.slane %v2044, 2
      %v2046 = vadd.f32 %v2044, %v2045
      %v2047 = vrot.slane %v2046, 1
      %v2048 = vadd.f32 %v2046, %v2047
      %2049 = vst [vmem:[%s265] sm:$0x1] %v2048
      %v2050 = vmul.f32 %v2020, %v2020
      %v2051 = vmul.f32 %v2021, %v2021
      %v2052 = vmul.f32 %v2022, %v2022
      %v2053 = vmul.f32 %v2023, %v2023
      %v2054 = vmul.f32 %v2024, %v2024
      %v2055 = vmul.f32 %v2025, %v2025
      %v2056 = vmul.f32 %v2026, %v2026
      %v2057 = vmul.f32 %v2027, %v2027
      %v2058 = vadd.f32 %v2050, %v2051
      %v2059 = vadd.f32 %v2058, %v2052
      %v2060 = vadd.f32 %v2059, %v2053
      %v2061 = vadd.f32 %v2060, %v2054
      %v2062 = vadd.f32 %v2061, %v2055
      %v2063 = vadd.f32 %v2062, %v2056
      %v2064 = vadd.f32 %v2063, %v2057
      %v2065 = vrot.slane %v2064, 4
      %v2066 = vadd.f32 %v2064, %v2065
      %v2067 = vrot.slane %v2066, 2
      %v2068 = vadd.f32 %v2066, %v2067
      %v2069 = vrot.slane %v2068, 1
      %v2070 = vadd.f32 %v2068, %v2069
      %2071 = vst [vmem:[%s268] sm:$0x1] %v2070
      %p2072 = scmp.lt.s32.totalorder %s18, 1
      %s2073 = scalar_select %p2072, %s18, 1
      %s2074 = smul.addr %s2073, 8
      %s2075 = smul.addr %s2074, 8
      %s2076 = scalar_lea.vmem %s4, %s2075
      %p2077 = scmp.lt.s32.totalorder %s18, 1
      %s2078 = scalar_select %p2077, %s18, 1
      %s2079 = scalar_lea.vmem %s5, %s2078
      %p2080 = scmp.lt.s32.totalorder %s18, 1
      %s2081 = scalar_select %p2080, %s18, 1
      %s2082 = scalar_lea.vmem %s6, %s2081
      // Predicated region
      $region37: #{down_block_forward.5} parent=35 // pred_check
        %p2083 = pneg %p125
      $region38: #{down_block_forward.5} parent=35 // pred_check_branch
        %2085 = sbr.rel (%p2083) target = $region40
      $region39: #{down_block_forward.5} parent=35 // pred_region
        _
      $region40: #{down_block_forward.5} parent=35 // pred_fallthru
        _
      // Predicated region
      $region41: #{down_block_forward.5} parent=35 // pred_check
        %p2086 = pneg %p151
      $region42: #{down_block_forward.5} parent=35 // pred_check_branch
        %2088 = sbr.rel (%p2086) target = $region44
      $region43: #{down_block_forward.5} parent=35 // pred_region
        _
      $region44: #{down_block_forward.5} parent=35 // pred_fallthru
        _
      // Predicated region
      $region45: #{down_block_forward.5} parent=35 // pred_check
        %p2089 = pneg %p177
      $region46: #{down_block_forward.5} parent=35 // pred_check_branch
        %2091 = sbr.rel (%p2089) target = $region48
      $region47: #{down_block_forward.5} parent=35 // pred_region
        _
      $region48: #{down_block_forward.5} parent=35 // pred_fallthru
        _
    $region36: #{down_block_forward.5} parent=5 // pred_fallthru
      _
    %p2092 = scmp.le.s32.totalorder 2, %s13
    // Predicated region
    $region49: #{down_block_forward.5} parent=5 // pred_check
      %p2093 = pneg %p2092
    $region50: #{down_block_forward.5} parent=5 // pred_check_branch
      %2095 = sbr.rel (%p2093) target = $region52
    $region51: #{down_block_forward.5} parent=5 // pred_region
      %s2096 = ssub.s32 %s13, 2
      // Predicated region
      $region53: #{down_block_forward.5} parent=51 // pred_check
        %p2097 = pneg %p131
      $region54: #{down_block_forward.5} parent=51 // pred_check_branch
        %2099 = sbr.rel (%p2097) target = $region56
      $region55: #{down_block_forward.5} parent=51 // pred_region
        %p2100 = scmp.lt.s32.totalorder %s19, 1
        %s2101 = scalar_select %p2100, %s19, 1
        %s2102 = smul.addr %s2101, 8
        %s2103 = smul.addr %s2102, 8
        %s2104 = scalar_lea.vmem %s4, %s2103
      $region56: #{down_block_forward.5} parent=51 // pred_fallthru
        _
      // Predicated region
      $region57: #{down_block_forward.5} parent=51 // pred_check
        %p2105 = pneg %p157
      $region58: #{down_block_forward.5} parent=51 // pred_check_branch
        %2107 = sbr.rel (%p2105) target = $region60
      $region59: #{down_block_forward.5} parent=51 // pred_region
        %p2108 = scmp.lt.s32.totalorder %s19, 1
        %s2109 = scalar_select %p2108, %s19, 1
        %s2110 = scalar_lea.vmem %s5, %s2109
      $region60: #{down_block_forward.5} parent=51 // pred_fallthru
        _
      // Predicated region
      $region61: #{down_block_forward.5} parent=51 // pred_check
        %p2111 = pneg %p183
      $region62: #{down_block_forward.5} parent=51 // pred_check_branch
        %2113 = sbr.rel (%p2111) target = $region64
      $region63: #{down_block_forward.5} parent=51 // pred_region
        %p2114 = scmp.lt.s32.totalorder %s19, 1
        %s2115 = scalar_select %p2114, %s19, 1
        %s2116 = scalar_lea.vmem %s6, %s2115
      $region64: #{down_block_forward.5} parent=51 // pred_fallthru
        _
    $region52: #{down_block_forward.5} parent=5 // pred_fallthru
      _
  $region6: #{down_block_forward.5} parent=0 // loop_footer
    %s17 = sadd.s32 1, %s13
  $region7: #{down_block_forward.5} parent=0 // loop_footer_branch
    %12 = sbr.rel target = $region3
  $region8: #{down_block_forward.5} parent=0 // loop_exit
    _

</llo_original>
